<compile_context>
chip_gen: v5e
topology: v5e:2x2
jax: 0.10.0
libtpu: 0.0.40
codegen_flags: <defaults>
</compile_context>

<pallas_src>
import jax
import jax.numpy as jnp
import numpy as np
from jax.experimental import pallas as pl
from jax.experimental.pallas import tpu as pltpu

D_MODEL = 32       # d_model
N_HEAD = 4         # nhead
HEAD_DIM = D_MODEL // N_HEAD
DIM_FF = 64        # dim_feedforward
EPS = 1e-5         # LayerNorm eps

_BAND = 128        # column band width inside the packed weight array
_VEC_ROWS = 16     # rows of the packed (f32) vector array


def _round_up(x, m):
    return -(-x // m) * m


def _layer_norm(x, g, b):
    mean = jnp.mean(x, axis=-1, keepdims=True)
    c = x - mean
    var = jnp.mean(c * c, axis=-1, keepdims=True)
    return c * jax.lax.rsqrt(var + EPS) * g + b


def _softmax_axis0(x):
    # softmax over the sequence axis (axis 0) per (batch, head) column.
    m = jnp.max(x, axis=0, keepdims=True)
    e = jnp.exp(x - m)
    # EUP approximate reciprocal: moves the divide off the VALU slot.
    return e * pl.reciprocal(jnp.sum(e, axis=0, keepdims=True), approx=True)


def _head_pool(w, v):
    """w: (S, BT, H) softmax weights; v: (S, BT, D) values.
    Returns (1, BT, D): per-head weighted sum over the sequence axis.
    Pure VPU lane-broadcast + cross-plane adds (no MXU / E-matrix)."""
    parts = []
    for h in range(N_HEAD):
        seg = v[:, :, h * HEAD_DIM:(h + 1) * HEAD_DIM] * w[:, :, h:h + 1]
        parts.append(jnp.sum(seg, axis=0, keepdims=True))
    return jnp.concatenate(parts, axis=-1)


def _encoder_body(src_ref, pos_ref, mask_ref, wpack_ref, vec_ref, out_ref):
    S, BT, D = src_ref.shape
    H = N_HEAD
    M = S * BT
    mm_dtype = wpack_ref.dtype            # bf16 or f32 MXU operands

    # --- packed parameters (static slices of two packed arrays) --------------
    w_qkc = wpack_ref[0:D, 0:2 * D + H]                   # [Wq | Wk | Wq@Wqa/sqrt(hd)]
    w_2   = wpack_ref[D:D + DIM_FF, 0:D]                  # FFN linear2
    w_ka  = wpack_ref[0:D, _BAND:_BAND + H]               # key_att (scale folded)
    w_t   = wpack_ref[0:D, 2 * _BAND:2 * _BAND + D]       # transform
    w_1   = wpack_ref[0:D, 3 * _BAND:3 * _BAND + DIM_FF]  # FFN linear1

    b_qkc = vec_ref[0:1, 0:2 * D + H]
    b_ka  = vec_ref[1:2, 0:H]
    b_t   = vec_ref[2:3, 0:D]
    b_1   = vec_ref[3:4, 0:DIM_FF]
    b_2   = vec_ref[4:5, 0:D]
    g0 = vec_ref[5:6, 0:D];  be0 = vec_ref[6:7, 0:D]
    g1 = vec_ref[7:8, 0:D];  be1 = vec_ref[8:9, 0:D]
    g2 = vec_ref[9:10, 0:D]; be2 = vec_ref[10:11, 0:D]

    def mm(lhs, w):
        return jnp.dot(lhs.astype(mm_dtype), w, preferred_element_type=jnp.float32)

    # --- activations ----------------------------------------------------------
    x3 = src_ref[...].astype(jnp.float32)                 # (S, BT, D)
    if pos_ref is not None:
        x3 = x3 + pos_ref[...].astype(jnp.float32)        # q = src + density_pos
    x2 = x3.reshape(M, D)                                 # merge leading dims (free)

    if mask_ref is not None:
        # (BT, S) -> (S, BT, 1): broadcast over heads in-kernel (free VPU op).
        mask_sb = jnp.transpose(mask_ref[...].astype(jnp.float32))[:, :, None]
    else:
        mask_sb = None

    # --- FastSelfAttention ----------------------------------------------------
    # one fused projection: [mq | mk | q_score(pre-scaled)]
    proj = mm(x2, w_qkc) + b_qkc
    mq2 = proj[:, 0:D]
    mq3 = mq2.reshape(S, BT, D)
    mk3 = proj[:, D:2 * D].reshape(S, BT, D)

    q_score = proj[:, 2 * D:2 * D + H].reshape(S, BT, H)
    if mask_sb is not None:
        q_score = q_score + mask_sb
    q_w = _softmax_axis0(q_score)                         # (S, BT, H)
    pooled_q = _head_pool(q_w, mq3)                       # (1, BT, D)

    mqk3 = mk3 * pooled_q                                 # (S, BT, D)
    k_score = (mm(mqk3.reshape(M, D), w_ka) + b_ka).reshape(S, BT, H)
    if mask_sb is not None:
        k_score = k_score + mask_sb
    k_w = _softmax_axis0(k_score)
    pooled_k = _head_pool(k_w, mqk3)                      # (1, BT, D)

    wv2 = (pooled_k * mq3).reshape(M, D)
    attn = mm(wv2, w_t) + b_t + mq2

    # --- norm0 / residual / norm1 / FFN / residual / norm2 --------------------
    # re-read src at the residual point (keeps its live range short).
    h = src_ref[...].astype(jnp.float32).reshape(M, D) + _layer_norm(attn, g0, be0)
    h = _layer_norm(h, g1, be1)
    ff = jnp.maximum(mm(h, w_1) + b_1, 0.0)
    ff = mm(ff, w_2) + b_2
    h = _layer_norm(h + ff, g2, be2)

    out_ref[...] = h.reshape(S, BT, D).astype(out_ref.dtype)


def _make_kernel(has_pos, has_mask):
    def kernel(*refs):
        it = iter(refs)
        src_ref = next(it)
        pos_ref = next(it) if has_pos else None
        mask_ref = next(it) if has_mask else None
        wpack_ref = next(it)
        vec_ref = next(it)
        out_ref = next(it)
        _encoder_body(src_ref, pos_ref, mask_ref, wpack_ref, vec_ref, out_ref)
    return kernel


def pack_params(p, weight_dtype=jnp.float32):
    """Fold query_att into the q/k projection, fold the 1/sqrt(head_dim) scales,
    and pack all parameter tensors into 2 arrays (weight pack + vector pack).
    Folding is done in f32; the weight pack is cast to `weight_dtype` at the end
    (bf16 = native MXU operands on all generations, mandatory-fast on v7x)."""
    D, H, F = D_MODEL, N_HEAD, DIM_FF
    inv = 1.0 / (HEAD_DIM ** 0.5)
    f32 = lambda a: jnp.asarray(a, jnp.float32)

    wq, bq = f32(p["wq"]), f32(p["bq"])
    wk, bk = f32(p["wk"]), f32(p["bk"])
    wqa, bqa = f32(p["wqa"]), f32(p["bqa"])
    w_qs = (wq @ wqa) * inv                 # query_att folded through query
    b_qs = (bq @ wqa + bqa) * inv
    w_qkc = jnp.concatenate([wq, wk, w_qs], axis=1)        # (D, 2D+H)
    b_qkc = jnp.concatenate([bq, bk, b_qs], axis=1)        # (1, 2D+H)

    wpack = jnp.zeros((D + F, 4 * _BAND), jnp.float32)     # (96, 512)
    wpack = wpack.at[0:D, 0:2 * D + H].set(w_qkc)
    wpack = wpack.at[D:D + F, 0:D].set(f32(p["w2"]))
    wpack = wpack.at[0:D, _BAND:_BAND + H].set(f32(p["wka"]) * inv)
    wpack = wpack.at[0:D, 2 * _BAND:2 * _BAND + D].set(f32(p["wt"]))
    wpack = wpack.at[0:D, 3 * _BAND:3 * _BAND + F].set(f32(p["w1"]))

    vecs = [b_qkc, f32(p["bka"]) * inv, f32(p["bt"]), f32(p["bb1"]), f32(p["bb2"]),
            f32(p["g0"]), f32(p["b0"]), f32(p["g1"]), f32(p["b1"]),
            f32(p["g2"]), f32(p["b2"])]
    vecpack = jnp.zeros((_VEC_ROWS, _BAND), jnp.float32)
    for i, v in enumerate(vecs):
        vecpack = vecpack.at[i:i + 1, 0:v.shape[1]].set(v)
    return wpack.astype(weight_dtype), vecpack             # biases/LN stay f32


def _vmem_limit_bytes():
    """Per-generation VMEM cap: ~48 MiB on v7x (64 MiB physical), ~100 MiB on
    v5e/v6e (128 MiB physical)."""
    try:
        phys = int(pltpu.get_tpu_info().vmem_capacity_bytes)
    except Exception:
        phys = 64 * 1024 * 1024          # conservative (v7x-sized) fallback
    return int(min(max(phys - 16 * 1024 * 1024, 32 * 1024 * 1024),
                   100 * 1024 * 1024))


def _plan_b_tile(S, B, io_itemsize, has_pos, vmem_limit, requested=None):
    """Pick the batch tile from a per-step VMEM footprint estimate; prefer a
    sublane-aligned tile that divides B (no padding); keep grid >= 2 when the
    batch allows so both v7x TensorCores get work."""
    align = 8 if io_itemsize >= 4 else 16          # bf16 packs 16 rows / sublane tile
    if B <= align:
        return B
    act = S * D_MODEL
    per_elem = act * io_itemsize * 2 * (2 + (1 if has_pos else 0))  # pipelined src/out(/pos)
    per_elem += S * 4 * 2                                           # mask block
    per_elem += act * 4 * 14                                        # live f32 temporaries
    budget = int(0.6 * vmem_limit)
    max_tile = max(align, (budget // per_elem) // align * align)
    half = _round_up((B + 1) // 2, align)          # => grid >= 2 tiles
    max_tile = min(max_tile, half)
    if requested is not None:
        max_tile = min(max_tile, max(align, _round_up(requested, align)))
    max_tile = min(max_tile, B)
    max_tile = max(align, (max_tile // align) * align)
    for cand in range(max_tile, align - 1, -align):    # prefer exact divisor of B
        if B % cand == 0:
            return cand
    return max_tile                                     # ragged fallback (pads)


def cryoformer_encoder_layer(src_sbd, packed, den_mask=None, density_pos=None,
                             *, b_tile=None):
    """src_sbd: (S, B, D) (f32 or bf16); den_mask: (B, S) additive mask;
    density_pos: (S, B, D) or None.  `packed` = pack_params(params)."""
    S, B, D = src_sbd.shape
    assert D == D_MODEL
    wpack, vecpack = packed
    has_pos = density_pos is not None
    has_mask = den_mask is not None

    itemsizes = [jnp.dtype(src_sbd.dtype).itemsize]
    if has_pos:
        itemsizes.append(jnp.dtype(density_pos.dtype).itemsize)
    io_itemsize = min(itemsizes)

    vmem_limit = _vmem_limit_bytes()
    bt = _plan_b_tile(S, B, io_itemsize, has_pos, vmem_limit, b_tile)
    n_tiles = pl.cdiv(B, bt)
    Bp = n_tiles * bt

    src_in = src_sbd
    pos_in = density_pos
    mask_in = den_mask.astype(jnp.float32) if has_mask else None
    if Bp != B:
        # Ragged fallback only (preferred path picks a tile dividing B).
        pad3 = ((0, 0), (0, Bp - B), (0, 0))
        src_in = jnp.pad(src_in, pad3)
        if has_pos:
            pos_in = jnp.pad(pos_in, pad3)
        if has_mask:
            mask_in = jnp.pad(mask_in, ((0, Bp - B), (0, 0)))

    data_spec = pl.BlockSpec((S, bt, D), lambda i: (0, i, 0))
    in_specs = [data_spec]
    operands = [src_in]
    if has_pos:
        in_specs.append(data_spec)
        operands.append(pos_in)
    if has_mask:
        in_specs.append(pl.BlockSpec((bt, S), lambda i: (i, 0)))   # native (B,S) layout
        operands.append(mask_in)
    in_specs.append(pl.BlockSpec(wpack.shape, lambda i: (0, 0)))
    in_specs.append(pl.BlockSpec(vecpack.shape, lambda i: (0, 0)))
    operands += [wpack, vecpack]

    out = pl.pallas_call(
        _make_kernel(has_pos, has_mask),
        out_shape=jax.ShapeDtypeStruct((S, Bp, D), src_sbd.dtype),
        grid_spec=pltpu.PrefetchScalarGridSpec(
            num_scalar_prefetch=0,
            grid=(n_tiles,),
            in_specs=in_specs,
            out_specs=pl.BlockSpec((S, bt, D), lambda i: (0, i, 0)),
        ),
        compiler_params=pltpu.CompilerParams(
            dimension_semantics=("parallel",),
            vmem_limit_bytes=vmem_limit,
        ),
    )(*operands)
    if Bp != B:
        out = out[:, :B, :]
    return out


def init_params(key):
    ks = jax.random.split(key, 9)
    std = 0.02  # FastSelfAttention initializer_range
    return {
        "wq":  jax.random.normal(ks[0], (D_MODEL, D_MODEL), jnp.float32) * std,
        "bq":  jnp.zeros((1, D_MODEL), jnp.float32),
        "wqa": jax.random.normal(ks[1], (D_MODEL, N_HEAD), jnp.float32) * std,
        "bqa": jnp.zeros((1, N_HEAD), jnp.float32),
        "wk":  jax.random.normal(ks[2], (D_MODEL, D_MODEL), jnp.float32) * std,
        "bk":  jnp.zeros((1, D_MODEL), jnp.float32),
        "wka": jax.random.normal(ks[3], (D_MODEL, N_HEAD), jnp.float32) * std,
        "bka": jnp.zeros((1, N_HEAD), jnp.float32),
        "wt":  jax.random.normal(ks[4], (D_MODEL, D_MODEL), jnp.float32) * std,
        "bt":  jnp.zeros((1, D_MODEL), jnp.float32),
        "g0":  jnp.ones((1, D_MODEL), jnp.float32),
        "b0":  jnp.zeros((1, D_MODEL), jnp.float32),
        "g1":  jnp.ones((1, D_MODEL), jnp.float32),
        "b1":  jnp.zeros((1, D_MODEL), jnp.float32),
        "w1":  jax.random.normal(ks[5], (D_MODEL, DIM_FF), jnp.float32) * 0.05,
        "bb1": jax.random.normal(ks[6], (1, DIM_FF), jnp.float32) * 0.01,
        "w2":  jax.random.normal(ks[7], (DIM_FF, D_MODEL), jnp.float32) * 0.05,
        "bb2": jax.random.normal(ks[8], (1, D_MODEL), jnp.float32) * 0.01,
        "g2":  jnp.ones((1, D_MODEL), jnp.float32),
        "b2":  jnp.zeros((1, D_MODEL), jnp.float32),
    }


def reference(src_sbd, p, den_mask, density_pos):
    """Pure-JAX reference mirroring the PyTorch module exactly (raw params)."""
    src = jnp.transpose(src_sbd, (1, 0, 2)).astype(jnp.float32)
    q = src if density_pos is None else src + jnp.transpose(density_pos, (1, 0, 2))
    B, S, D = q.shape
    H, hd = N_HEAD, HEAD_DIM
    mq = q @ p["wq"] + p["bq"][0]
    mk = q @ p["wk"] + p["bk"][0]
    qs = jnp.transpose(mq @ p["wqa"] + p["bqa"][0], (0, 2, 1)) / hd ** 0.5   # (B,H,S)
    if den_mask is not None:
        qs = qs + den_mask[:, None, :]
    qw = jax.nn.softmax(qs, -1)[:, :, None, :]                               # (B,H,1,S)
    ql = mq.reshape(B, S, H, hd).transpose(0, 2, 1, 3)                       # (B,H,S,hd)
    pooled_q = jnp.matmul(qw, ql).transpose(0, 2, 1, 3).reshape(B, 1, D)
    mqk = mk * pooled_q
    kscore = jnp.transpose(mqk @ p["wka"] + p["bka"][0], (0, 2, 1)) / hd ** 0.5
    if den_mask is not None:
        kscore = kscore + den_mask[:, None, :]
    kw = jax.nn.softmax(kscore, -1)[:, :, None, :]
    kl = mqk.reshape(B, S, H, hd).transpose(0, 2, 1, 3)
    pooled_k = jnp.matmul(kw, kl)                                            # (B,H,1,hd)
    wv = (pooled_k * ql).transpose(0, 2, 1, 3).reshape(B, S, D)
    attn = wv @ p["wt"] + p["bt"][0] + mq

    def ln(x, g, b):
        m = x.mean(-1, keepdims=True)
        v = ((x - m) ** 2).mean(-1, keepdims=True)
        return (x - m) / jnp.sqrt(v + EPS) * g[0] + b[0]

    src2 = ln(attn, p["g0"], p["b0"])
    h = src + src2
    h = ln(h, p["g1"], p["b1"])
    ff = jnp.maximum(h @ p["w1"] + p["bb1"][0], 0.0)
    ff = ff @ p["w2"] + p["bb2"][0]
    h = h + ff
    h = ln(h, p["g2"], p["b2"])
    return jnp.transpose(h, (1, 0, 2)).astype(src_sbd.dtype)


if __name__ == "__main__":
    key = jax.random.PRNGKey(0)
    kp, ksrc, kpos = jax.random.split(key, 3)
    S, B = 8, 32
    params = init_params(kp)

    src = jax.random.normal(ksrc, (S, B, D_MODEL), jnp.float32)
    pos = jax.random.normal(kpos, (S, B, D_MODEL), jnp.float32) * 0.1
    # additive mask: 0 = attend, large negative = masked out (mask last token)
    den_mask = jnp.zeros((B, S), jnp.float32).at[:, -1].set(-1e4)

    # ---- f32 path: src + density_pos + mask, f32 weights (tight check) ------
    packed_f32 = pack_params(params, jnp.float32)
    out = jax.block_until_ready(
        cryoformer_encoder_layer(src, packed_f32, den_mask=den_mask, density_pos=pos))
    ref = reference(src, params, den_mask, pos)
    np.testing.assert_allclose(np.asarray(out), np.asarray(ref), rtol=2e-3, atol=2e-3)

    # ---- bf16 path: bf16 HBM I/O + bf16 MXU operands, no density_pos --------
    packed_bf16 = pack_params(params, jnp.bfloat16)
    src_bf16 = src.astype(jnp.bfloat16)
    out_bf16 = jax.block_until_ready(
        cryoformer_encoder_layer(src_bf16, packed_bf16, den_mask=den_mask,
                                 density_pos=None))
    ref_bf16 = reference(src_bf16.astype(jnp.float32), params, den_mask, None)
    np.testing.assert_allclose(np.asarray(out_bf16.astype(jnp.float32)),
                               np.asarray(ref_bf16), rtol=8e-2, atol=8e-2)

    print("KERNEL_OK")
</pallas_src>

<mosaic_0001>
module attributes {stable_mosaic.version = 11 : i64} {
  func.func @kernel(%arg0: i32, %arg1: memref<8x16x32xf32, #tpu.memory_space<vmem>>, %arg2: memref<8x16x32xf32, #tpu.memory_space<vmem>>, %arg3: memref<16x8xf32, #tpu.memory_space<vmem>>, %arg4: memref<96x512xf32, #tpu.memory_space<vmem>>, %arg5: memref<16x128xf32, #tpu.memory_space<vmem>>, %arg6: memref<8x16x32xf32, #tpu.memory_space<vmem>>) attributes {dimension_semantics = [#tpu.dimension_semantics<parallel>], iteration_bounds = array<i64: 2>, scalar_prefetch = 0 : i64, scratch_operands = 0 : i64, tpu.core_type = #tpu.core_type<tc>, window_params = [{transform_indices = @transform_0, window_bounds = array<i64: 8, 16, 32>}, {transform_indices = @transform_1, window_bounds = array<i64: 8, 16, 32>}, {transform_indices = @transform_2, window_bounds = array<i64: 16, 8>}, {pipeline_mode = #tpu.pipeline_mode<synchronous>, transform_indices = @transform_3, window_bounds = array<i64: 96, 512>}, {pipeline_mode = #tpu.pipeline_mode<synchronous>, transform_indices = @transform_4, window_bounds = array<i64: 16, 128>}, {transform_indices = @transform_5, window_bounds = array<i64: 8, 16, 32>}]} {
    %c0 = arith.constant 0 : index
    %c0_0 = arith.constant 0 : index
    %0 = vector.load %arg4[%c0, %c0_0] : memref<96x512xf32, #tpu.memory_space<vmem>>, vector<32x68xf32>
    %c32 = arith.constant 32 : index
    %c0_1 = arith.constant 0 : index
    %1 = vector.load %arg4[%c32, %c0_1] : memref<96x512xf32, #tpu.memory_space<vmem>>, vector<64x32xf32>
    %c0_2 = arith.constant 0 : index
    %c128 = arith.constant 128 : index
    %2 = vector.load %arg4[%c0_2, %c128] : memref<96x512xf32, #tpu.memory_space<vmem>>, vector<32x4xf32>
    %c0_3 = arith.constant 0 : index
    %c256 = arith.constant 256 : index
    %3 = vector.load %arg4[%c0_3, %c256] : memref<96x512xf32, #tpu.memory_space<vmem>>, vector<32x32xf32>
    %c0_4 = arith.constant 0 : index
    %c384 = arith.constant 384 : index
    %4 = vector.load %arg4[%c0_4, %c384] : memref<96x512xf32, #tpu.memory_space<vmem>>, vector<32x64xf32>
    %c0_5 = arith.constant 0 : index
    %c0_6 = arith.constant 0 : index
    %5 = vector.load %arg5[%c0_5, %c0_6] : memref<16x128xf32, #tpu.memory_space<vmem>>, vector<1x68xf32>
    %c1 = arith.constant 1 : index
    %c0_7 = arith.constant 0 : index
    %6 = vector.load %arg5[%c1, %c0_7] : memref<16x128xf32, #tpu.memory_space<vmem>>, vector<1x4xf32>
    %c2 = arith.constant 2 : index
    %c0_8 = arith.constant 0 : index
    %7 = vector.load %arg5[%c2, %c0_8] : memref<16x128xf32, #tpu.memory_space<vmem>>, vector<1x32xf32>
    %c3 = arith.constant 3 : index
    %c0_9 = arith.constant 0 : index
    %8 = vector.load %arg5[%c3, %c0_9] : memref<16x128xf32, #tpu.memory_space<vmem>>, vector<1x64xf32>
    %c4 = arith.constant 4 : index
    %c0_10 = arith.constant 0 : index
    %9 = vector.load %arg5[%c4, %c0_10] : memref<16x128xf32, #tpu.memory_space<vmem>>, vector<1x32xf32>
    %c5 = arith.constant 5 : index
    %c0_11 = arith.constant 0 : index
    %10 = vector.load %arg5[%c5, %c0_11] : memref<16x128xf32, #tpu.memory_space<vmem>>, vector<1x32xf32>
    %c6 = arith.constant 6 : index
    %c0_12 = arith.constant 0 : index
    %11 = vector.load %arg5[%c6, %c0_12] : memref<16x128xf32, #tpu.memory_space<vmem>>, vector<1x32xf32>
    %c7 = arith.constant 7 : index
    %c0_13 = arith.constant 0 : index
    %12 = vector.load %arg5[%c7, %c0_13] : memref<16x128xf32, #tpu.memory_space<vmem>>, vector<1x32xf32>
    %c8 = arith.constant 8 : index
    %c0_14 = arith.constant 0 : index
    %13 = vector.load %arg5[%c8, %c0_14] : memref<16x128xf32, #tpu.memory_space<vmem>>, vector<1x32xf32>
    %c9 = arith.constant 9 : index
    %c0_15 = arith.constant 0 : index
    %14 = vector.load %arg5[%c9, %c0_15] : memref<16x128xf32, #tpu.memory_space<vmem>>, vector<1x32xf32>
    %c10 = arith.constant 10 : index
    %c0_16 = arith.constant 0 : index
    %15 = vector.load %arg5[%c10, %c0_16] : memref<16x128xf32, #tpu.memory_space<vmem>>, vector<1x32xf32>
    %c0_17 = arith.constant 0 : index
    %c0_18 = arith.constant 0 : index
    %c0_19 = arith.constant 0 : index
    %16 = vector.load %arg1[%c0_17, %c0_18, %c0_19] : memref<8x16x32xf32, #tpu.memory_space<vmem>>, vector<8x16x32xf32>
    %c0_20 = arith.constant 0 : index
    %c0_21 = arith.constant 0 : index
    %c0_22 = arith.constant 0 : index
    %17 = vector.load %arg2[%c0_20, %c0_21, %c0_22] : memref<8x16x32xf32, #tpu.memory_space<vmem>>, vector<8x16x32xf32>
    %18 = arith.addf %16, %17 : vector<8x16x32xf32>
    %19 = vector.shape_cast %18 : vector<8x16x32xf32> to vector<128x32xf32>
    %c0_23 = arith.constant 0 : index
    %c0_24 = arith.constant 0 : index
    %20 = vector.load %arg3[%c0_23, %c0_24] : memref<16x8xf32, #tpu.memory_space<vmem>>, vector<16x8xf32>
    %21 = tpu.transpose %20, [1, 0] : vector<16x8xf32> -> vector<8x16xf32>
    %22 = vector.shape_cast %21 : vector<8x16xf32> to vector<8x16x1xf32>
    %cst = arith.constant dense<0.000000e+00> : vector<128x68xf32>
    %23 = tpu.matmul %19, %0, %cst {dimension_numbers = #tpu.dot_dimension_numbers<[1], [0], [0], [1], [0, 0, 1, 1], [], []>} : vector<128x32xf32>, vector<32x68xf32>, vector<128x68xf32> -> vector<128x68xf32>
    %24 = vector.broadcast %5 : vector<1x68xf32> to vector<128x68xf32>
    %25 = arith.addf %23, %24 : vector<128x68xf32>
    %26 = vector.extract_strided_slice %25 {offsets = [0, 0], sizes = [128, 32], strides = [1, 1]} : vector<128x68xf32> to vector<128x32xf32>
    %27 = vector.shape_cast %26 : vector<128x32xf32> to vector<8x16x32xf32>
    %28 = vector.extract_strided_slice %25 {offsets = [0, 32], sizes = [128, 32], strides = [1, 1]} : vector<128x68xf32> to vector<128x32xf32>
    %29 = vector.shape_cast %28 : vector<128x32xf32> to vector<8x16x32xf32>
    %30 = vector.extract_strided_slice %25 {offsets = [0, 64], sizes = [128, 4], strides = [1, 1]} : vector<128x68xf32> to vector<128x4xf32>
    %31 = vector.shape_cast %30 : vector<128x4xf32> to vector<8x16x4xf32>
    %32 = vector.broadcast %22 : vector<8x16x1xf32> to vector<8x16x4xf32>
    %33 = arith.addf %31, %32 : vector<8x16x4xf32>
    %cst_25 = arith.constant dense<0xFF800000> : vector<16x4xf32>
    %34 = vector.multi_reduction <maximumf>, %33, %cst_25 [0] : vector<8x16x4xf32> to vector<16x4xf32>
    %35 = vector.shape_cast %34 : vector<16x4xf32> to vector<1x16x4xf32>
    %36 = vector.broadcast %35 : vector<1x16x4xf32> to vector<8x16x4xf32>
    %37 = arith.subf %33, %36 : vector<8x16x4xf32>
    %38 = math.exp %37 : vector<8x16x4xf32>
    %cst_26 = arith.constant dense<0.000000e+00> : vector<16x4xf32>
    %39 = vector.multi_reduction <add>, %38, %cst_26 [0] : vector<8x16x4xf32> to vector<16x4xf32>
    %40 = vector.shape_cast %39 : vector<16x4xf32> to vector<1x16x4xf32>
    %41 = tpu.reciprocal %40 {approx = true} : vector<1x16x4xf32> -> vector<1x16x4xf32>
    %42 = vector.broadcast %41 : vector<1x16x4xf32> to vector<8x16x4xf32>
    %43 = arith.mulf %38, %42 : vector<8x16x4xf32>
    %44 = vector.extract_strided_slice %27 {offsets = [0, 0, 0], sizes = [8, 16, 8], strides = [1, 1, 1]} : vector<8x16x32xf32> to vector<8x16x8xf32>
    %45 = vector.extract_strided_slice %43 {offsets = [0, 0, 0], sizes = [8, 16, 1], strides = [1, 1, 1]} : vector<8x16x4xf32> to vector<8x16x1xf32>
    %46 = vector.broadcast %45 : vector<8x16x1xf32> to vector<8x16x8xf32>
    %47 = arith.mulf %44, %46 : vector<8x16x8xf32>
    %cst_27 = arith.constant dense<0.000000e+00> : vector<16x8xf32>
    %48 = vector.multi_reduction <add>, %47, %cst_27 [0] : vector<8x16x8xf32> to vector<16x8xf32>
    %49 = vector.shape_cast %48 : vector<16x8xf32> to vector<1x16x8xf32>
    %50 = vector.extract_strided_slice %27 {offsets = [0, 0, 8], sizes = [8, 16, 8], strides = [1, 1, 1]} : vector<8x16x32xf32> to vector<8x16x8xf32>
    %51 = vector.extract_strided_slice %43 {offsets = [0, 0, 1], sizes = [8, 16, 1], strides = [1, 1, 1]} : vector<8x16x4xf32> to vector<8x16x1xf32>
    %52 = vector.broadcast %51 : vector<8x16x1xf32> to vector<8x16x8xf32>
    %53 = arith.mulf %50, %52 : vector<8x16x8xf32>
    %cst_28 = arith.constant dense<0.000000e+00> : vector<16x8xf32>
    %54 = vector.multi_reduction <add>, %53, %cst_28 [0] : vector<8x16x8xf32> to vector<16x8xf32>
    %55 = vector.shape_cast %54 : vector<16x8xf32> to vector<1x16x8xf32>
    %56 = vector.extract_strided_slice %27 {offsets = [0, 0, 16], sizes = [8, 16, 8], strides = [1, 1, 1]} : vector<8x16x32xf32> to vector<8x16x8xf32>
    %57 = vector.extract_strided_slice %43 {offsets = [0, 0, 2], sizes = [8, 16, 1], strides = [1, 1, 1]} : vector<8x16x4xf32> to vector<8x16x1xf32>
    %58 = vector.broadcast %57 : vector<8x16x1xf32> to vector<8x16x8xf32>
    %59 = arith.mulf %56, %58 : vector<8x16x8xf32>
    %cst_29 = arith.constant dense<0.000000e+00> : vector<16x8xf32>
    %60 = vector.multi_reduction <add>, %59, %cst_29 [0] : vector<8x16x8xf32> to vector<16x8xf32>
    %61 = vector.shape_cast %60 : vector<16x8xf32> to vector<1x16x8xf32>
    %62 = vector.extract_strided_slice %27 {offsets = [0, 0, 24], sizes = [8, 16, 8], strides = [1, 1, 1]} : vector<8x16x32xf32> to vector<8x16x8xf32>
    %63 = vector.extract_strided_slice %43 {offsets = [0, 0, 3], sizes = [8, 16, 1], strides = [1, 1, 1]} : vector<8x16x4xf32> to vector<8x16x1xf32>
    %64 = vector.broadcast %63 : vector<8x16x1xf32> to vector<8x16x8xf32>
    %65 = arith.mulf %62, %64 : vector<8x16x8xf32>
    %cst_30 = arith.constant dense<0.000000e+00> : vector<16x8xf32>
    %66 = vector.multi_reduction <add>, %65, %cst_30 [0] : vector<8x16x8xf32> to vector<16x8xf32>
    %67 = vector.shape_cast %66 : vector<16x8xf32> to vector<1x16x8xf32>
    %68 = tpu.concatenate %49, %55, %61, %67 in 2 : vector<1x16x8xf32>, vector<1x16x8xf32>, vector<1x16x8xf32>, vector<1x16x8xf32> -> vector<1x16x32xf32>
    %69 = vector.broadcast %68 : vector<1x16x32xf32> to vector<8x16x32xf32>
    %70 = arith.mulf %29, %69 : vector<8x16x32xf32>
    %71 = vector.shape_cast %70 : vector<8x16x32xf32> to vector<128x32xf32>
    %cst_31 = arith.constant dense<0.000000e+00> : vector<128x4xf32>
    %72 = tpu.matmul %71, %2, %cst_31 {dimension_numbers = #tpu.dot_dimension_numbers<[1], [0], [0], [1], [0, 0, 1, 1], [], []>} : vector<128x32xf32>, vector<32x4xf32>, vector<128x4xf32> -> vector<128x4xf32>
    %73 = vector.broadcast %6 : vector<1x4xf32> to vector<128x4xf32>
    %74 = arith.addf %72, %73 : vector<128x4xf32>
    %75 = vector.shape_cast %74 : vector<128x4xf32> to vector<8x16x4xf32>
    %76 = vector.broadcast %22 : vector<8x16x1xf32> to vector<8x16x4xf32>
    %77 = arith.addf %75, %76 : vector<8x16x4xf32>
    %cst_32 = arith.constant dense<0xFF800000> : vector<16x4xf32>
    %78 = vector.multi_reduction <maximumf>, %77, %cst_32 [0] : vector<8x16x4xf32> to vector<16x4xf32>
    %79 = vector.shape_cast %78 : vector<16x4xf32> to vector<1x16x4xf32>
    %80 = vector.broadcast %79 : vector<1x16x4xf32> to vector<8x16x4xf32>
    %81 = arith.subf %77, %80 : vector<8x16x4xf32>
    %82 = math.exp %81 : vector<8x16x4xf32>
    %cst_33 = arith.constant dense<0.000000e+00> : vector<16x4xf32>
    %83 = vector.multi_reduction <add>, %82, %cst_33 [0] : vector<8x16x4xf32> to vector<16x4xf32>
    %84 = vector.shape_cast %83 : vector<16x4xf32> to vector<1x16x4xf32>
    %85 = tpu.reciprocal %84 {approx = true} : vector<1x16x4xf32> -> vector<1x16x4xf32>
    %86 = vector.broadcast %85 : vector<1x16x4xf32> to vector<8x16x4xf32>
    %87 = arith.mulf %82, %86 : vector<8x16x4xf32>
    %88 = vector.extract_strided_slice %70 {offsets = [0, 0, 0], sizes = [8, 16, 8], strides = [1, 1, 1]} : vector<8x16x32xf32> to vector<8x16x8xf32>
    %89 = vector.extract_strided_slice %87 {offsets = [0, 0, 0], sizes = [8, 16, 1], strides = [1, 1, 1]} : vector<8x16x4xf32> to vector<8x16x1xf32>
    %90 = vector.broadcast %89 : vector<8x16x1xf32> to vector<8x16x8xf32>
    %91 = arith.mulf %88, %90 : vector<8x16x8xf32>
    %cst_34 = arith.constant dense<0.000000e+00> : vector<16x8xf32>
    %92 = vector.multi_reduction <add>, %91, %cst_34 [0] : vector<8x16x8xf32> to vector<16x8xf32>
    %93 = vector.shape_cast %92 : vector<16x8xf32> to vector<1x16x8xf32>
    %94 = vector.extract_strided_slice %70 {offsets = [0, 0, 8], sizes = [8, 16, 8], strides = [1, 1, 1]} : vector<8x16x32xf32> to vector<8x16x8xf32>
    %95 = vector.extract_strided_slice %87 {offsets = [0, 0, 1], sizes = [8, 16, 1], strides = [1, 1, 1]} : vector<8x16x4xf32> to vector<8x16x1xf32>
    %96 = vector.broadcast %95 : vector<8x16x1xf32> to vector<8x16x8xf32>
    %97 = arith.mulf %94, %96 : vector<8x16x8xf32>
    %cst_35 = arith.constant dense<0.000000e+00> : vector<16x8xf32>
    %98 = vector.multi_reduction <add>, %97, %cst_35 [0] : vector<8x16x8xf32> to vector<16x8xf32>
    %99 = vector.shape_cast %98 : vector<16x8xf32> to vector<1x16x8xf32>
    %100 = vector.extract_strided_slice %70 {offsets = [0, 0, 16], sizes = [8, 16, 8], strides = [1, 1, 1]} : vector<8x16x32xf32> to vector<8x16x8xf32>
    %101 = vector.extract_strided_slice %87 {offsets = [0, 0, 2], sizes = [8, 16, 1], strides = [1, 1, 1]} : vector<8x16x4xf32> to vector<8x16x1xf32>
    %102 = vector.broadcast %101 : vector<8x16x1xf32> to vector<8x16x8xf32>
    %103 = arith.mulf %100, %102 : vector<8x16x8xf32>
    %cst_36 = arith.constant dense<0.000000e+00> : vector<16x8xf32>
    %104 = vector.multi_reduction <add>, %103, %cst_36 [0] : vector<8x16x8xf32> to vector<16x8xf32>
    %105 = vector.shape_cast %104 : vector<16x8xf32> to vector<1x16x8xf32>
    %106 = vector.extract_strided_slice %70 {offsets = [0, 0, 24], sizes = [8, 16, 8], strides = [1, 1, 1]} : vector<8x16x32xf32> to vector<8x16x8xf32>
    %107 = vector.extract_strided_slice %87 {offsets = [0, 0, 3], sizes = [8, 16, 1], strides = [1, 1, 1]} : vector<8x16x4xf32> to vector<8x16x1xf32>
    %108 = vector.broadcast %107 : vector<8x16x1xf32> to vector<8x16x8xf32>
    %109 = arith.mulf %106, %108 : vector<8x16x8xf32>
    %cst_37 = arith.constant dense<0.000000e+00> : vector<16x8xf32>
    %110 = vector.multi_reduction <add>, %109, %cst_37 [0] : vector<8x16x8xf32> to vector<16x8xf32>
    %111 = vector.shape_cast %110 : vector<16x8xf32> to vector<1x16x8xf32>
    %112 = tpu.concatenate %93, %99, %105, %111 in 2 : vector<1x16x8xf32>, vector<1x16x8xf32>, vector<1x16x8xf32>, vector<1x16x8xf32> -> vector<1x16x32xf32>
    %113 = vector.broadcast %112 : vector<1x16x32xf32> to vector<8x16x32xf32>
    %114 = arith.mulf %113, %27 : vector<8x16x32xf32>
    %115 = vector.shape_cast %114 : vector<8x16x32xf32> to vector<128x32xf32>
    %cst_38 = arith.constant dense<0.000000e+00> : vector<128x32xf32>
    %116 = tpu.matmul %115, %3, %cst_38 {dimension_numbers = #tpu.dot_dimension_numbers<[1], [0], [0], [1], [0, 0, 1, 1], [], []>} : vector<128x32xf32>, vector<32x32xf32>, vector<128x32xf32> -> vector<128x32xf32>
    %117 = vector.broadcast %7 : vector<1x32xf32> to vector<128x32xf32>
    %118 = arith.addf %116, %117 : vector<128x32xf32>
    %119 = arith.addf %118, %26 : vector<128x32xf32>
    %c0_39 = arith.constant 0 : index
    %c0_40 = arith.constant 0 : index
    %c0_41 = arith.constant 0 : index
    %120 = vector.load %arg1[%c0_39, %c0_40, %c0_41] : memref<8x16x32xf32, #tpu.memory_space<vmem>>, vector<8x16x32xf32>
    %121 = vector.shape_cast %120 : vector<8x16x32xf32> to vector<128x32xf32>
    %cst_42 = arith.constant dense<0.000000e+00> : vector<128xf32>
    %122 = vector.multi_reduction <add>, %119, %cst_42 [1] : vector<128x32xf32> to vector<128xf32>
    %123 = vector.shape_cast %122 : vector<128xf32> to vector<128x1xf32>
    %cst_43 = arith.constant 3.200000e+01 : f32
    %124 = vector.broadcast %cst_43 : f32 to vector<128x1xf32>
    %125 = arith.divf %123, %124 : vector<128x1xf32>
    %126 = vector.broadcast %125 : vector<128x1xf32> to vector<128x32xf32>
    %127 = arith.subf %119, %126 : vector<128x32xf32>
    %128 = arith.mulf %127, %127 : vector<128x32xf32>
    %cst_44 = arith.constant dense<0.000000e+00> : vector<128xf32>
    %129 = vector.multi_reduction <add>, %128, %cst_44 [1] : vector<128x32xf32> to vector<128xf32>
    %130 = vector.shape_cast %129 : vector<128xf32> to vector<128x1xf32>
    %cst_45 = arith.constant 3.200000e+01 : f32
    %131 = vector.broadcast %cst_45 : f32 to vector<128x1xf32>
    %132 = arith.divf %130, %131 : vector<128x1xf32>
    %cst_46 = arith.constant 9.99999974E-6 : f32
    %133 = vector.broadcast %cst_46 : f32 to vector<128x1xf32>
    %134 = arith.addf %132, %133 : vector<128x1xf32>
    %135 = math.rsqrt %134 : vector<128x1xf32>
    %136 = vector.broadcast %135 : vector<128x1xf32> to vector<128x32xf32>
    %137 = arith.mulf %127, %136 : vector<128x32xf32>
    %138 = vector.broadcast %10 : vector<1x32xf32> to vector<128x32xf32>
    %139 = arith.mulf %137, %138 : vector<128x32xf32>
    %140 = vector.broadcast %11 : vector<1x32xf32> to vector<128x32xf32>
    %141 = arith.addf %139, %140 : vector<128x32xf32>
    %142 = arith.addf %121, %141 : vector<128x32xf32>
    %cst_47 = arith.constant dense<0.000000e+00> : vector<128xf32>
    %143 = vector.multi_reduction <add>, %142, %cst_47 [1] : vector<128x32xf32> to vector<128xf32>
    %144 = vector.shape_cast %143 : vector<128xf32> to vector<128x1xf32>
    %cst_48 = arith.constant 3.200000e+01 : f32
    %145 = vector.broadcast %cst_48 : f32 to vector<128x1xf32>
    %146 = arith.divf %144, %145 : vector<128x1xf32>
    %147 = vector.broadcast %146 : vector<128x1xf32> to vector<128x32xf32>
    %148 = arith.subf %142, %147 : vector<128x32xf32>
    %149 = arith.mulf %148, %148 : vector<128x32xf32>
    %cst_49 = arith.constant dense<0.000000e+00> : vector<128xf32>
    %150 = vector.multi_reduction <add>, %149, %cst_49 [1] : vector<128x32xf32> to vector<128xf32>
    %151 = vector.shape_cast %150 : vector<128xf32> to vector<128x1xf32>
    %cst_50 = arith.constant 3.200000e+01 : f32
    %152 = vector.broadcast %cst_50 : f32 to vector<128x1xf32>
    %153 = arith.divf %151, %152 : vector<128x1xf32>
    %cst_51 = arith.constant 9.99999974E-6 : f32
    %154 = vector.broadcast %cst_51 : f32 to vector<128x1xf32>
    %155 = arith.addf %153, %154 : vector<128x1xf32>
    %156 = math.rsqrt %155 : vector<128x1xf32>
    %157 = vector.broadcast %156 : vector<128x1xf32> to vector<128x32xf32>
    %158 = arith.mulf %148, %157 : vector<128x32xf32>
    %159 = vector.broadcast %12 : vector<1x32xf32> to vector<128x32xf32>
    %160 = arith.mulf %158, %159 : vector<128x32xf32>
    %161 = vector.broadcast %13 : vector<1x32xf32> to vector<128x32xf32>
    %162 = arith.addf %160, %161 : vector<128x32xf32>
    %cst_52 = arith.constant dense<0.000000e+00> : vector<128x64xf32>
    %163 = tpu.matmul %162, %4, %cst_52 {dimension_numbers = #tpu.dot_dimension_numbers<[1], [0], [0], [1], [0, 0, 1, 1], [], []>} : vector<128x32xf32>, vector<32x64xf32>, vector<128x64xf32> -> vector<128x64xf32>
    %164 = vector.broadcast %8 : vector<1x64xf32> to vector<128x64xf32>
    %165 = arith.addf %163, %164 : vector<128x64xf32>
    %cst_53 = arith.constant 0.000000e+00 : f32
    %166 = vector.broadcast %cst_53 : f32 to vector<128x64xf32>
    %167 = arith.maximumf %165, %166 : vector<128x64xf32>
    %cst_54 = arith.constant dense<0.000000e+00> : vector<128x32xf32>
    %168 = tpu.matmul %167, %1, %cst_54 {dimension_numbers = #tpu.dot_dimension_numbers<[1], [0], [0], [1], [0, 0, 1, 1], [], []>} : vector<128x64xf32>, vector<64x32xf32>, vector<128x32xf32> -> vector<128x32xf32>
    %169 = vector.broadcast %9 : vector<1x32xf32> to vector<128x32xf32>
    %170 = arith.addf %168, %169 : vector<128x32xf32>
    %171 = arith.addf %162, %170 : vector<128x32xf32>
    %cst_55 = arith.constant dense<0.000000e+00> : vector<128xf32>
    %172 = vector.multi_reduction <add>, %171, %cst_55 [1] : vector<128x32xf32> to vector<128xf32>
    %173 = vector.shape_cast %172 : vector<128xf32> to vector<128x1xf32>
    %cst_56 = arith.constant 3.200000e+01 : f32
    %174 = vector.broadcast %cst_56 : f32 to vector<128x1xf32>
    %175 = arith.divf %173, %174 : vector<128x1xf32>
    %176 = vector.broadcast %175 : vector<128x1xf32> to vector<128x32xf32>
    %177 = arith.subf %171, %176 : vector<128x32xf32>
    %178 = arith.mulf %177, %177 : vector<128x32xf32>
    %cst_57 = arith.constant dense<0.000000e+00> : vector<128xf32>
    %179 = vector.multi_reduction <add>, %178, %cst_57 [1] : vector<128x32xf32> to vector<128xf32>
    %180 = vector.shape_cast %179 : vector<128xf32> to vector<128x1xf32>
    %cst_58 = arith.constant 3.200000e+01 : f32
    %181 = vector.broadcast %cst_58 : f32 to vector<128x1xf32>
    %182 = arith.divf %180, %181 : vector<128x1xf32>
    %cst_59 = arith.constant 9.99999974E-6 : f32
    %183 = vector.broadcast %cst_59 : f32 to vector<128x1xf32>
    %184 = arith.addf %182, %183 : vector<128x1xf32>
    %185 = math.rsqrt %184 : vector<128x1xf32>
    %186 = vector.broadcast %185 : vector<128x1xf32> to vector<128x32xf32>
    %187 = arith.mulf %177, %186 : vector<128x32xf32>
    %188 = vector.broadcast %14 : vector<1x32xf32> to vector<128x32xf32>
    %189 = arith.mulf %187, %188 : vector<128x32xf32>
    %190 = vector.broadcast %15 : vector<1x32xf32> to vector<128x32xf32>
    %191 = arith.addf %189, %190 : vector<128x32xf32>
    %192 = vector.shape_cast %191 : vector<128x32xf32> to vector<8x16x32xf32>
    %c0_60 = arith.constant 0 : index
    %c0_61 = arith.constant 0 : index
    %c0_62 = arith.constant 0 : index
    %193 = vector.load %arg6[%c0_60, %c0_61, %c0_62] : memref<8x16x32xf32, #tpu.memory_space<vmem>>, vector<8x16x32xf32>
    tpu.vector_store %arg6[%c0_60, %c0_61, %c0_62], %192 {strides = array<i32>} : memref<8x16x32xf32, #tpu.memory_space<vmem>>, vector<8x16x32xf32>,
    return
  }
  func.func @transform_0(%arg0: i32) -> (i32, i32, i32) {
    %c0_i32 = arith.constant 0 : i32
    %c0_i32_0 = arith.constant 0 : i32
    %c0_i32_1 = arith.constant 0 : i32
    return %c0_i32, %arg0, %c0_i32_0 : i32, i32, i32
  }
  func.func @transform_1(%arg0: i32) -> (i32, i32, i32) {
    %c0_i32 = arith.constant 0 : i32
    %c0_i32_0 = arith.constant 0 : i32
    %c0_i32_1 = arith.constant 0 : i32
    return %c0_i32, %arg0, %c0_i32_0 : i32, i32, i32
  }
  func.func @transform_2(%arg0: i32) -> (i32, i32) {
    %c0_i32 = arith.constant 0 : i32
    %c0_i32_0 = arith.constant 0 : i32
    return %arg0, %c0_i32 : i32, i32
  }
  func.func @transform_3(%arg0: i32) -> (i32, i32) {
    %c0_i32 = arith.constant 0 : i32
    %c0_i32_0 = arith.constant 0 : i32
    %c0_i32_1 = arith.constant 0 : i32
    return %c0_i32, %c0_i32_0 : i32, i32
  }
  func.func @transform_4(%arg0: i32) -> (i32, i32) {
    %c0_i32 = arith.constant 0 : i32
    %c0_i32_0 = arith.constant 0 : i32
    %c0_i32_1 = arith.constant 0 : i32
    return %c0_i32, %c0_i32_0 : i32, i32
  }
  func.func @transform_5(%arg0: i32) -> (i32, i32, i32) {
    %c0_i32 = arith.constant 0 : i32
    %c0_i32_0 = arith.constant 0 : i32
    %c0_i32_1 = arith.constant 0 : i32
    return %c0_i32, %arg0, %c0_i32_0 : i32, i32, i32
  }
}

</mosaic_0001>

<llo_original>
// kernel: tpu_custom_call.1
$region0: #{tpu_custom_call.1}
  #allocation0 [shape = 'u32[]', space=smem, size = 0x4, offset = 0x4, fixed_abs, tag = 'smem constant byte address 0x4 - core index']
  #allocation1 [shape = 'u32[72,128]{1,0:T(1,128)}', space=vmem, size = 0x9000, scoped, tag = 'internal scratch']
  #allocation9 [shape = 's32[]', space=sflag, size = 0x4, offset = 0, fixed_abs, tag = 'sflag constant byte address 0x0 - dummy sync flag']
  #allocation11 [shape = 's32[]', space=sflag, size = 0x4, offset = 0, fixed_abs, tag = 'sflag constant byte address 0x0 - dummy sync flag']
  #allocation13 [shape = 's32[]', space=sflag, size = 0x4, offset = 0, fixed_abs, tag = 'sflag constant byte address 0x0 - dummy sync flag']
  %s0 = inlined_call_operand.hbm [shape: f32[8,32,32], index: 0, kind: input, shape index: {}]
  %s1 = inlined_call_operand.hbm [shape: f32[8,32,32], index: 1, kind: input, shape index: {}]
  %s2 = inlined_call_operand.vmem [shape: f32[32,8], index: 2, kind: input, shape index: {}]
  %s3 = inlined_call_operand.hbm [shape: f32[96,512], index: 3, kind: input, shape index: {}]
  %s4 = inlined_call_operand.vmem [shape: f32[16,128], index: 4, kind: input, shape index: {}]
  %s5 = inlined_call_operand.hbm [shape: f32[8,32,32], index: 5, kind: output, shape index: {}]
  %s6 = sld [smem:[#allocation0]]
  $region65: #{tpu_custom_call.1} parent=0
    _
  %s8 = ssub.s32 1, %s6
  %s9 = scalar_select 0, %s8, %s6
  $region1: #{tpu_custom_call.1} parent=0
    #allocation2 [shape = 'u8[131072]{0}', space=vmem, size = 0x20000, scoped, tag = 'input window, operand 0']
    #allocation3 [shape = 's32[2]{0}', space=sflag, size = 0x8, scoped, tag = 'scoped memory for tpu_custom_call.1']
    #allocation4 [shape = 's32[2]{0}', space=sflag, size = 0x8, scoped, tag = 'scoped memory for tpu_custom_call.1']
    #allocation5 [shape = 'u8[131072]{0}', space=vmem, size = 0x20000, scoped, tag = 'input window, operand 1']
    #allocation6 [shape = 's32[2]{0}', space=sflag, size = 0x8, scoped, tag = 'scoped memory for tpu_custom_call.1']
    #allocation7 [shape = 'u8[196608]{0}', space=vmem, size = 0x30000, scoped, tag = 'input window, operand 3, single buffered']
    #allocation8 [shape = 'u8[131072]{0}', space=vmem, size = 0x20000, scoped, tag = 'output window, operand 0']
    %10 = vsyncpa [#allocation3], 0
    %s11 = scalar_lea.sflag [#allocation3], 1
    %12 = vsyncpa %s11, 0
    %13 = vsyncpa [#allocation6], 0
    %s14 = scalar_lea.sflag [#allocation6], 1
    %15 = vsyncpa %s14, 0
    %16 = vsyncpa [#allocation4], 0
    %s17 = scalar_lea.sflag [#allocation4], 1
    %18 = vsyncpa %s17, 0
    loop: start=0, step=1, limit=4
    $region2: #{tpu_custom_call.1} parent=1 // loop_pre_header
      _
    $region3: #{tpu_custom_call.1} parent=1 // loop_header
      %s20 = sphi 0, %s24
      %p21 = scmp.ge.s32.totalorder %s20, 4
      %s30 = sphi 0, %s32
      %s33 = sphi 0, %s30
      %s34 = sphi 0, %s33
      %s50 = sphi 0, %s34
      %s56 = sphi 0, %s58
      %s59 = sphi 0, %s56
      %s60 = sphi 0, %s59
      %s76 = sphi 0, %s60
      %s82 = sphi 0, %s84
      %s85 = sphi 0, %s82
      %s86 = sphi 0, %s85
      %s102 = sphi 0, %s86
      %s106 = sphi 0, %s106
      %s108 = sphi 0, %s106
      %s109 = sphi 0, %s108
      %s123 = sphi 0, %s109
      %s127 = sphi 0, %s127
      %s129 = sphi 0, %s127
      %s130 = sphi 0, %s129
      %s144 = sphi 0, %s130
      %s150 = sphi 0, %s152
      %s153 = sphi 0, %s150
      %s154 = sphi 0, %s153
      %s170 = sphi 0, %s154
    $region4: #{tpu_custom_call.1} parent=1 // loop_header_branch
      %23 = sbr.rel (%p21) target = $region8
    $region5: #{tpu_custom_call.1} parent=1 // loop_body
      %s25 = ssub.s32 %s20, 1
      %s26 = ssub.s32 %s20, 2
      %s27 = sadd.s32 %s20, 1
      %s28 = ssub.s32 %s20, %s27
      %p29 = scmp.eq.s32.totalorder %s28, 0
      %s31 = sadd.s32 %s30, 1
      %s32 = scalar_select %p29, %s30, %s31
      %p35 = pneg %p29
      %p36 = scmp.eq.s32.totalorder %s20, 1
      %p37 = por %p35, %p36
      %p38 = scmp.ne.s32.totalorder %s30, %s33
      %p39 = scmp.eq.s32.totalorder %s20, 0
      %p40 = por %p38, %p39
      %p41 = scmp.ne.s32.totalorder %s30, %s33
      %p42 = scmp.eq.s32.totalorder %s25, 1
      %p43 = por %p41, %p42
      %p44 = scmp.ne.s32.totalorder %s33, %s34
      %p45 = scmp.eq.s32.totalorder %s25, 0
      %p46 = por %p44, %p45
      %p47 = scmp.ne.s32.totalorder %s33, %s34
      %p48 = scmp.eq.s32.totalorder %s26, 1
      %p49 = por %p47, %p48
      %p51 = scmp.ne.s32.totalorder %s34, %s50
      %p52 = scmp.eq.s32.totalorder %s26, 0
      %p53 = por %p51, %p52
      %s54 = ssub.s32 %s20, %s27
      %p55 = scmp.eq.s32.totalorder %s54, 0
      %s57 = sadd.s32 %s56, 1
      %s58 = scalar_select %p55, %s56, %s57
      %p61 = pneg %p55
      %p62 = scmp.eq.s32.totalorder %s20, 1
      %p63 = por %p61, %p62
      %p64 = scmp.ne.s32.totalorder %s56, %s59
      %p65 = scmp.eq.s32.totalorder %s20, 0
      %p66 = por %p64, %p65
      %p67 = scmp.ne.s32.totalorder %s56, %s59
      %p68 = scmp.eq.s32.totalorder %s25, 1
      %p69 = por %p67, %p68
      %p70 = scmp.ne.s32.totalorder %s59, %s60
      %p71 = scmp.eq.s32.totalorder %s25, 0
      %p72 = por %p70, %p71
      %p73 = scmp.ne.s32.totalorder %s59, %s60
      %p74 = scmp.eq.s32.totalorder %s26, 1
      %p75 = por %p73, %p74
      %p77 = scmp.ne.s32.totalorder %s60, %s76
      %p78 = scmp.eq.s32.totalorder %s26, 0
      %p79 = por %p77, %p78
      %s80 = ssub.s32 %s20, %s27
      %p81 = scmp.eq.s32.totalorder %s80, 0
      %s83 = sadd.s32 %s82, 1
      %s84 = scalar_select %p81, %s82, %s83
      %p87 = pneg %p81
      %p88 = scmp.eq.s32.totalorder %s20, 1
      %p89 = por %p87, %p88
      %p90 = scmp.ne.s32.totalorder %s82, %s85
      %p91 = scmp.eq.s32.totalorder %s20, 0
      %p92 = por %p90, %p91
      %p93 = scmp.ne.s32.totalorder %s82, %s85
      %p94 = scmp.eq.s32.totalorder %s25, 1
      %p95 = por %p93, %p94
      %p96 = scmp.ne.s32.totalorder %s85, %s86
      %p97 = scmp.eq.s32.totalorder %s25, 0
      %p98 = por %p96, %p97
      %p99 = scmp.ne.s32.totalorder %s85, %s86
      %p100 = scmp.eq.s32.totalorder %s26, 1
      %p101 = por %p99, %p100
      %p103 = scmp.ne.s32.totalorder %s86, %s102
      %p104 = scmp.eq.s32.totalorder %s26, 0
      %p105 = por %p103, %p104
      %s107 = sadd.s32 %s106, 1
      %p110 = scmp.eq.s32.totalorder %s20, 1
      %p111 = scmp.ne.s32.totalorder %s106, %s108
      %p112 = scmp.eq.s32.totalorder %s20, 0
      %p113 = por %p111, %p112
      %p114 = scmp.ne.s32.totalorder %s106, %s108
      %p115 = scmp.eq.s32.totalorder %s25, 1
      %p116 = por %p114, %p115
      %p117 = scmp.ne.s32.totalorder %s108, %s109
      %p118 = scmp.eq.s32.totalorder %s25, 0
      %p119 = por %p117, %p118
      %p120 = scmp.ne.s32.totalorder %s108, %s109
      %p121 = scmp.eq.s32.totalorder %s26, 1
      %p122 = por %p120, %p121
      %p124 = scmp.ne.s32.totalorder %s109, %s123
      %p125 = scmp.eq.s32.totalorder %s26, 0
      %p126 = por %p124, %p125
      %s128 = sadd.s32 %s127, 1
      %p131 = scmp.eq.s32.totalorder %s20, 1
      %p132 = scmp.ne.s32.totalorder %s127, %s129
      %p133 = scmp.eq.s32.totalorder %s20, 0
      %p134 = por %p132, %p133
      %p135 = scmp.ne.s32.totalorder %s127, %s129
      %p136 = scmp.eq.s32.totalorder %s25, 1
      %p137 = por %p135, %p136
      %p138 = scmp.ne.s32.totalorder %s129, %s130
      %p139 = scmp.eq.s32.totalorder %s25, 0
      %p140 = por %p138, %p139
      %p141 = scmp.ne.s32.totalorder %s129, %s130
      %p142 = scmp.eq.s32.totalorder %s26, 1
      %p143 = por %p141, %p142
      %p145 = scmp.ne.s32.totalorder %s130, %s144
      %p146 = scmp.eq.s32.totalorder %s26, 0
      %p147 = por %p145, %p146
      %s148 = ssub.s32 %s20, %s27
      %p149 = scmp.eq.s32.totalorder %s148, 0
      %s151 = sadd.s32 %s150, 1
      %s152 = scalar_select %p149, %s150, %s151
      %p155 = pneg %p149
      %p156 = scmp.eq.s32.totalorder %s20, 1
      %p157 = por %p155, %p156
      %p158 = scmp.ne.s32.totalorder %s150, %s153
      %p159 = scmp.eq.s32.totalorder %s20, 0
      %p160 = por %p158, %p159
      %p161 = scmp.ne.s32.totalorder %s150, %s153
      %p162 = scmp.eq.s32.totalorder %s25, 1
      %p163 = por %p161, %p162
      %p164 = scmp.ne.s32.totalorder %s153, %s154
      %p165 = scmp.eq.s32.totalorder %s25, 0
      %p166 = por %p164, %p165
      %p167 = scmp.ne.s32.totalorder %s153, %s154
      %p168 = scmp.eq.s32.totalorder %s26, 1
      %p169 = por %p167, %p168
      %p171 = scmp.ne.s32.totalorder %s154, %s170
      %p172 = scmp.eq.s32.totalorder %s26, 0
      %p173 = por %p171, %p172
      %p174 = scmp.le.s32.totalorder 1, %s20
      %p175 = scmp.lt.s32.totalorder %s20, 3
      %p176 = pnand %p174, %p175
      %p177 = pneg %p176
      // Predicated region
      $region9: #{tpu_custom_call.1} parent=5 // pred_check
        _
      $region10: #{tpu_custom_call.1} parent=5 // pred_check_branch
        %179 = sbr.rel (%p176) target = $region12
      $region11: #{tpu_custom_call.1} parent=5 // pred_region
        %s180 = ssub.s32 %s20, 1
        // Predicated region
        $region13: #{tpu_custom_call.1} parent=11 // pred_check
          %p181 = pneg %p119
        $region14: #{tpu_custom_call.1} parent=11 // pred_check_branch
          %183 = sbr.rel (%p181) target = $region16
        $region15: #{tpu_custom_call.1} parent=11 // pred_region
          %185 = vsyncadd [#allocation6], 0
          %s186 = sshll.u32 %s3, 4
          %s187 = int_to_ptr.hbm [resolvable:$true] %s186
          %s188 = sshll.u32 [#allocation7], 4
          %s189 = int_to_ptr.vmem [resolvable:$true] %s188
          %194 = dma.hbm_to_vmem [thread:$0]  %s187, 6144, %s189, [#allocation6], 512, 512, 32
        $region16: #{tpu_custom_call.1} parent=11 // pred_fallthru
          _
        // Predicated region
        $region17: #{tpu_custom_call.1} parent=11 // pred_check
          %p195 = pneg %p140
        $region18: #{tpu_custom_call.1} parent=11 // pred_check_branch
          %197 = sbr.rel (%p195) target = $region20
        $region19: #{tpu_custom_call.1} parent=11 // pred_region
          _
        $region20: #{tpu_custom_call.1} parent=11 // pred_fallthru
          _
      $region12: #{tpu_custom_call.1} parent=5 // pred_fallthru
        _
      %p198 = scmp.lt.s32.totalorder %s20, 2
      // Predicated region
      $region21: #{tpu_custom_call.1} parent=5 // pred_check
        %p199 = pneg %p198
      $region22: #{tpu_custom_call.1} parent=5 // pred_check_branch
        %201 = sbr.rel (%p199) target = $region24
      $region23: #{tpu_custom_call.1} parent=5 // pred_region
        // Predicated region
        $region25: #{tpu_custom_call.1} parent=23 // pred_check
          %p202 = pneg %p40
        $region26: #{tpu_custom_call.1} parent=23 // pred_check_branch
          %204 = sbr.rel (%p202) target = $region28
        $region27: #{tpu_custom_call.1} parent=23 // pred_region
          #allocation10 [shape = 'u32[6]{0}', space=smem, size = 0x18, scoped, tag = 'DMA stride descriptor']
          %s205 = sand.u32 %s30, 1
          %s206 = scalar_lea.sflag [#allocation3], %s205
          %s207 = sand.u32 %s30, 1
          %s208 = smul.addr %s207, 128
          %s209 = scalar_lea.vmem [#allocation2], %s208
          %s210 = smul.u32 2, %s20
          %212 = vsyncadd %s206, 0
          %s213 = smul.addr %s210, 8
          %s214 = scalar_lea.hbm %s0, %s213
          %s216 = sshll.u32 1, 14
          %s217 = sxor.u32 4294967295, %s216
          %s219 = sld [smem:[#allocation0]]
          %s220 = sadd.s32 2, %s219
          %s222 = sshll.u32 7, 26
          %s223 = sxor.u32 4294967295, %s222
          %s224 = sand.u32 0, %s223
          %s225 = sshll.u32 %s220, 26
          %s226 = sor.u32 %s224, %s225
          %s227 = sshll.u32 %s214, 4
          %s228 = int_to_ptr.hbm [resolvable:$true] %s227
          %s229 = sshll.u32 %s209, 4
          %s230 = int_to_ptr.vmem [resolvable:$true] %s229
          %236 = sst [smem:[#allocation10]] 512
          %s237 = scalar_lea.smem [#allocation10], 1
          %238 = sst [smem:[%s237]] 256
          %s239 = scalar_lea.smem [#allocation10], 2
          %240 = sst [smem:[%s239]] 2
          %s241 = scalar_lea.smem [#allocation10], 3
          %242 = sst [smem:[%s241]] 128
          %s243 = scalar_lea.smem [#allocation10], 4
          %244 = sst [smem:[%s243]] 128
          %s245 = scalar_lea.smem [#allocation10], 5
          %246 = sst [smem:[%s245]] 8
          %248 = dma.general %s228, 2048, %s230, %s206, [#allocation9], [#allocation10], %s226, 0
        $region28: #{tpu_custom_call.1} parent=23 // pred_fallthru
          _
        // Predicated region
        $region29: #{tpu_custom_call.1} parent=23 // pred_check
          %p249 = pneg %p66
        $region30: #{tpu_custom_call.1} parent=23 // pred_check_branch
          %251 = sbr.rel (%p249) target = $region32
        $region31: #{tpu_custom_call.1} parent=23 // pred_region
          #allocation12 [shape = 'u32[6]{0}', space=smem, size = 0x18, scoped, tag = 'DMA stride descriptor']
          %s252 = sand.u32 %s20, 1
          %s253 = scalar_lea.sflag [#allocation6], %s252
          %s254 = sand.u32 %s56, 1
          %s255 = smul.addr %s254, 128
          %s256 = scalar_lea.vmem [#allocation5], %s255
          %s257 = smul.u32 2, %s20
          %259 = vsyncadd %s253, 0
          %s260 = smul.addr %s257, 8
          %s261 = scalar_lea.hbm %s1, %s260
          %s263 = sshll.u32 1, 14
          %s264 = sxor.u32 4294967295, %s263
          %s266 = sld [smem:[#allocation0]]
          %s267 = sadd.s32 2, %s266
          %s269 = sshll.u32 7, 26
          %s270 = sxor.u32 4294967295, %s269
          %s271 = sand.u32 0, %s270
          %s272 = sshll.u32 %s267, 26
          %s273 = sor.u32 %s271, %s272
          %s274 = sshll.u32 %s261, 4
          %s275 = int_to_ptr.hbm [resolvable:$true] %s274
          %s276 = sshll.u32 %s256, 4
          %s277 = int_to_ptr.vmem [resolvable:$true] %s276
          %283 = sst [smem:[#allocation12]] 512
          %s284 = scalar_lea.smem [#allocation12], 1
          %285 = sst [smem:[%s284]] 256
          %s286 = scalar_lea.smem [#allocation12], 2
          %287 = sst [smem:[%s286]] 2
          %s288 = scalar_lea.smem [#allocation12], 3
          %289 = sst [smem:[%s288]] 128
          %s290 = scalar_lea.smem [#allocation12], 4
          %291 = sst [smem:[%s290]] 128
          %s292 = scalar_lea.smem [#allocation12], 5
          %293 = sst [smem:[%s292]] 8
          %295 = dma.general %s275, 2048, %s277, %s253, [#allocation11], [#allocation12], %s273, 0
        $region32: #{tpu_custom_call.1} parent=23 // pred_fallthru
          _
        // Predicated region
        $region33: #{tpu_custom_call.1} parent=23 // pred_check
          %p296 = pneg %p92
        $region34: #{tpu_custom_call.1} parent=23 // pred_check_branch
          %298 = sbr.rel (%p296) target = $region36
        $region35: #{tpu_custom_call.1} parent=23 // pred_region
          %s299 = smul.u32 2, %s20
          %p300 = scmp.lt.s32.totalorder %s299, 3
          %s301 = scalar_select %p300, %s299, 3
          %s302 = smul.addr %s301, 8
          %s303 = scalar_lea.vmem %s2, %s302
          %s304 = smul.u32 2, %s20
        $region36: #{tpu_custom_call.1} parent=23 // pred_fallthru
          _
      $region24: #{tpu_custom_call.1} parent=5 // pred_fallthru
        _
      %p305 = scmp.le.s32.totalorder 1, %s20
      %p306 = scmp.lt.s32.totalorder %s20, 3
      %p307 = pnand %p305, %p306
      %p308 = pneg %p307
      // Predicated region
      $region37: #{tpu_custom_call.1} parent=5 // pred_check
        _
      $region38: #{tpu_custom_call.1} parent=5 // pred_check_branch
        %310 = sbr.rel (%p307) target = $region40
      $region39: #{tpu_custom_call.1} parent=5 // pred_region
        %s311 = ssub.s32 %s20, 1
        %s312 = sand.u32 %s33, 1
        %s313 = scalar_lea.sflag [#allocation3], %s312
        %s314 = sand.u32 %s33, 1
        %s315 = smul.addr %s314, 128
        %s316 = scalar_lea.vmem [#allocation2], %s315
        // Predicated region
        $region41: #{tpu_custom_call.1} parent=39 // pred_check
          %p317 = pneg %p46
        $region42: #{tpu_custom_call.1} parent=39 // pred_check_branch
          %319 = sbr.rel (%p317) target = $region44
        $region43: #{tpu_custom_call.1} parent=39 // pred_region
          %321 = dma.done %s313, 2048
        $region44: #{tpu_custom_call.1} parent=39 // pred_fallthru
          _
        %s322 = sand.u32 %s25, 1
        %s323 = scalar_lea.sflag [#allocation6], %s322
        %s324 = sand.u32 %s59, 1
        %s325 = smul.addr %s324, 128
        %s326 = scalar_lea.vmem [#allocation5], %s325
        // Predicated region
        $region45: #{tpu_custom_call.1} parent=39 // pred_check
          %p327 = pneg %p72
        $region46: #{tpu_custom_call.1} parent=39 // pred_check_branch
          %329 = sbr.rel (%p327) target = $region48
        $region47: #{tpu_custom_call.1} parent=39 // pred_region
          %331 = dma.done %s323, 2048
        $region48: #{tpu_custom_call.1} parent=39 // pred_fallthru
          _
        // Predicated region
        $region49: #{tpu_custom_call.1} parent=39 // pred_check
          %p332 = pneg %p119
        $region50: #{tpu_custom_call.1} parent=39 // pred_check_branch
          %334 = sbr.rel (%p332) target = $region52
        $region51: #{tpu_custom_call.1} parent=39 // pred_region
          %336 = dma.done [#allocation6], 6144
        $region52: #{tpu_custom_call.1} parent=39 // pred_fallthru
          _
        %s337 = sand.u32 %s33, 1
        %s338 = scalar_lea.sflag [#allocation3], %s337
        %s339 = sand.u32 %s33, 1
        %s340 = smul.addr %s339, 128
        %s341 = scalar_lea.vmem [#allocation2], %s340
        %p342 = pneg %p46
        %p343 = pneg %p43
        %s344 = sand.u32 %s25, 1
        %s345 = scalar_lea.sflag [#allocation6], %s344
        %s346 = sand.u32 %s59, 1
        %s347 = smul.addr %s346, 128
        %s348 = scalar_lea.vmem [#allocation5], %s347
        %p349 = pneg %p72
        %p350 = pneg %p69
        %s351 = smul.u32 2, %s25
        %p352 = scmp.lt.s32.totalorder %s351, 3
        %s353 = scalar_select %p352, %s351, 3
        %s354 = smul.addr %s353, 8
        %s355 = scalar_lea.vmem %s2, %s354
        %p356 = pneg %p98
        %p357 = pneg %p95
        %p358 = pneg %p119
        %p359 = pneg %p116
        %p360 = pneg %p140
        %p361 = pneg %p137
        %p362 = pneg %p166
        %p363 = pneg %p163
        %s364 = sand.u32 %s153, 1
        %s365 = scalar_lea.sflag [#allocation4], %s364
        %s366 = sand.u32 %s153, 1
        %s367 = smul.addr %s366, 128
        %s368 = scalar_lea.vmem [#allocation8], %s367
        %s369 = smul.u32 2, %s25
        %s370 = smul.u32 2, %s25
        %s371 = smul.u32 2, %s25
        %p372 = scmp.lt.s32.totalorder %s371, 3
        %s373 = scalar_select %p372, %s371, 3
        %s374 = smul.addr %s373, 8
        %s375 = scalar_lea.vmem %s2, %s374
        %s376 = smul.u32 2, %s25
        %s377 = smul.u32 2, %s25
        %v378 = vld [vmem:[#allocation7] sm:$0xff]
        %v379 = vld [vmem:[#allocation7 + $0x20] sm:$0xff]
        %v380 = vld [vmem:[#allocation7 + $0x40] sm:$0xff]
        %v381 = vld [vmem:[#allocation7 + $0x60] sm:$0xff]
        %v382 = vld [vmem:[#allocation7 + $0x80] sm:$0xff]
        %v383 = vld [vmem:[#allocation7 + $0xa0] sm:$0xff]
        %v384 = vld [vmem:[#allocation7 + $0xc0] sm:$0xff]
        %v385 = vld [vmem:[#allocation7 + $0xe0] sm:$0xff]
        %v386 = vld [vmem:[#allocation7 + $0x100] sm:$0xff]
        %v387 = vld [vmem:[#allocation7 + $0x120] sm:$0xff]
        %v388 = vld [vmem:[#allocation7 + $0x140] sm:$0xff]
        %v389 = vld [vmem:[#allocation7 + $0x160] sm:$0xff]
        %v390 = vld [vmem:[#allocation7 + $0x8] sm:$0xff]
        %v391 = vld [vmem:[#allocation7 + $0x28] sm:$0xff]
        %v392 = vld [vmem:[#allocation7 + $0x48] sm:$0xff]
        %v393 = vld [vmem:[#allocation7 + $0x68] sm:$0xff]
        %v394 = vld [vmem:[#allocation7 + $0x10] sm:$0xff]
        %v395 = vld [vmem:[#allocation7 + $0x30] sm:$0xff]
        %v396 = vld [vmem:[#allocation7 + $0x50] sm:$0xff]
        %v397 = vld [vmem:[#allocation7 + $0x70] sm:$0xff]
        %v398 = vld [vmem:[#allocation7 + $0x18] sm:$0xff]
        %v399 = vld [vmem:[#allocation7 + $0x38] sm:$0xff]
        %v400 = vld [vmem:[#allocation7 + $0x58] sm:$0xff]
        %v401 = vld [vmem:[#allocation7 + $0x78] sm:$0xff]
        %v402 = vld [vmem:[%s4] sm:$0x1]
        %v403 = vld [vmem:[%s4 + $0x1] sm:$0x1]
        %v404 = vld [vmem:[%s4 + $0x2] sm:$0x1]
        %v405 = vld [vmem:[%s4 + $0x3] sm:$0x1]
        %v406 = vld [vmem:[%s4 + $0x4] sm:$0x1]
        %v407 = vld [vmem:[%s4 + $0x5] sm:$0x1]
        %v408 = vld [vmem:[%s4 + $0x6] sm:$0x1]
        %v409 = vld [vmem:[%s4 + $0x7] sm:$0x1]
        %v410 = vld [vmem:[%s4 + $0x8] sm:$0x1]
        %v411 = vld [vmem:[%s4 + $0x9] sm:$0x1]
        %v412 = vld [vmem:[%s4 + $0xa] sm:$0x1]
        %v413 = vld [vmem:[%s316] sm:$0xff]
        %v414 = vld [vmem:[%s316 + $0x8] sm:$0xff]
        %v415 = vld [vmem:[%s316 + $0x10] sm:$0xff]
        %v416 = vld [vmem:[%s316 + $0x18] sm:$0xff]
        %v417 = vld [vmem:[%s316 + $0x20] sm:$0xff]
        %v418 = vld [vmem:[%s316 + $0x28] sm:$0xff]
        %v419 = vld [vmem:[%s316 + $0x30] sm:$0xff]
        %v420 = vld [vmem:[%s316 + $0x38] sm:$0xff]
        %v421 = vld [vmem:[%s316 + $0x40] sm:$0xff]
        %v422 = vld [vmem:[%s316 + $0x48] sm:$0xff]
        %v423 = vld [vmem:[%s316 + $0x50] sm:$0xff]
        %v424 = vld [vmem:[%s316 + $0x58] sm:$0xff]
        %v425 = vld [vmem:[%s316 + $0x60] sm:$0xff]
        %v426 = vld [vmem:[%s316 + $0x68] sm:$0xff]
        %v427 = vld [vmem:[%s316 + $0x70] sm:$0xff]
        %v428 = vld [vmem:[%s316 + $0x78] sm:$0xff]
        %v429 = vld [vmem:[%s326] sm:$0xff]
        %v430 = vld [vmem:[%s326 + $0x8] sm:$0xff]
        %v431 = vld [vmem:[%s326 + $0x10] sm:$0xff]
        %v432 = vld [vmem:[%s326 + $0x18] sm:$0xff]
        %v433 = vld [vmem:[%s326 + $0x20] sm:$0xff]
        %v434 = vld [vmem:[%s326 + $0x28] sm:$0xff]
        %v435 = vld [vmem:[%s326 + $0x30] sm:$0xff]
        %v436 = vld [vmem:[%s326 + $0x38] sm:$0xff]
        %v437 = vld [vmem:[%s326 + $0x40] sm:$0xff]
        %v438 = vld [vmem:[%s326 + $0x48] sm:$0xff]
        %v439 = vld [vmem:[%s326 + $0x50] sm:$0xff]
        %v440 = vld [vmem:[%s326 + $0x58] sm:$0xff]
        %v441 = vld [vmem:[%s326 + $0x60] sm:$0xff]
        %v442 = vld [vmem:[%s326 + $0x68] sm:$0xff]
        %v443 = vld [vmem:[%s326 + $0x70] sm:$0xff]
        %v444 = vld [vmem:[%s326 + $0x78] sm:$0xff]
        %v445 = vadd.f32 %v413, %v429
        %v446 = vadd.f32 %v414, %v430
        %v447 = vadd.f32 %v415, %v431
        %v448 = vadd.f32 %v416, %v432
        %v449 = vadd.f32 %v417, %v433
        %v450 = vadd.f32 %v418, %v434
        %v451 = vadd.f32 %v419, %v435
        %v452 = vadd.f32 %v420, %v436
        %v453 = vadd.f32 %v421, %v437
        %v454 = vadd.f32 %v422, %v438
        %v455 = vadd.f32 %v423, %v439
        %v456 = vadd.f32 %v424, %v440
        %v457 = vadd.f32 %v425, %v441
        %v458 = vadd.f32 %v426, %v442
        %v459 = vadd.f32 %v427, %v443
        %v460 = vadd.f32 %v428, %v444
        %v461 = vld [vmem:[%s375] sm:$0xff]
        %v462 = vld [vmem:[%s375 + $0x8] sm:$0xff]
        %463 = vxpose.xlu0.b32.start [1/16] %v461, 128
        %464 = vxpose.xlu0.b32.cont [2/16] %v462, 128
        %465 = vxpose.xlu0.b32.cont [3/16] 0.0, 128
        %466 = vxpose.xlu0.b32.cont [4/16] 0.0, 128
        %467 = vxpose.xlu0.b32.cont [5/16] 0.0, 128
        %468 = vxpose.xlu0.b32.cont [6/16] 0.0, 128
        %469 = vxpose.xlu0.b32.cont [7/16] 0.0, 128
        %470 = vxpose.xlu0.b32.cont [8/16] 0.0, 128
        %471 = vxpose.xlu0.b32.cont [9/16] 0.0, 128
        %472 = vxpose.xlu0.b32.cont [10/16] 0.0, 128
        %473 = vxpose.xlu0.b32.cont [11/16] 0.0, 128
        %474 = vxpose.xlu0.b32.cont [12/16] 0.0, 128
        %475 = vxpose.xlu0.b32.cont [13/16] 0.0, 128
        %476 = vxpose.xlu0.b32.cont [14/16] 0.0, 128
        %477 = vxpose.xlu0.b32.cont [15/16] 0.0, 128
        %478 = vxpose.xlu0.b32.end [16/16] 0.0, 128
        %v479 = vpop.trf.xlu0
        %v480 = vpop.trf.xlu0
        %v481 = vpop.trf.xlu0
        %v482 = vpop.trf.xlu0
        %v483 = vpop.trf.xlu0
        %v484 = vpop.trf.xlu0
        %v485 = vpop.trf.xlu0
        %v486 = vpop.trf.xlu0
        %v487 = vpop.trf.xlu0
        %v488 = vpop.trf.xlu0
        %v489 = vpop.trf.xlu0
        %v490 = vpop.trf.xlu0
        %v491 = vpop.trf.xlu0
        %v492 = vpop.trf.xlu0
        %v493 = vpop.trf.xlu0
        %v494 = vpop.trf.xlu0
        %v495 = vperm.slane %v479, 0
        %v496 = vlaneseq
        %v497 = vshrl.u32 %v496, 7
        %499 = vset.pattern.permute.xlu0 %v497
        %500 = vperm.xlu0 %499, %v495
        %v501 = vpop.permute.xlu0 %500
        %v502 = vlaneseq
        %v503 = vshrl.u32 %v502, 7
        %v504 = vadd.s32 %v503, 8
        %505 = vset.pattern.permute.xlu0 %v504
        %506 = vperm.xlu0 %505, %v495
        %v507 = vpop.permute.xlu0 %506
        %v508 = vperm.slane %v479, 1
        %v509 = vlaneseq
        %v510 = vshrl.u32 %v509, 7
        %512 = vset.pattern.permute.xlu0 %v510
        %513 = vperm.xlu0 %512, %v508
        %v514 = vpop.permute.xlu0 %513
        %v515 = vlaneseq
        %v516 = vshrl.u32 %v515, 7
        %v517 = vadd.s32 %v516, 8
        %518 = vset.pattern.permute.xlu0 %v517
        %519 = vperm.xlu0 %518, %v508
        %v520 = vpop.permute.xlu0 %519
        %v521 = vperm.slane %v479, 2
        %v522 = vlaneseq
        %v523 = vshrl.u32 %v522, 7
        %525 = vset.pattern.permute.xlu0 %v523
        %526 = vperm.xlu0 %525, %v521
        %v527 = vpop.permute.xlu0 %526
        %v528 = vlaneseq
        %v529 = vshrl.u32 %v528, 7
        %v530 = vadd.s32 %v529, 8
        %531 = vset.pattern.permute.xlu0 %v530
        %532 = vperm.xlu0 %531, %v521
        %v533 = vpop.permute.xlu0 %532
        %v534 = vperm.slane %v479, 3
        %v535 = vlaneseq
        %v536 = vshrl.u32 %v535, 7
        %538 = vset.pattern.permute.xlu0 %v536
        %539 = vperm.xlu0 %538, %v534
        %v540 = vpop.permute.xlu0 %539
        %v541 = vlaneseq
        %v542 = vshrl.u32 %v541, 7
        %v543 = vadd.s32 %v542, 8
        %544 = vset.pattern.permute.xlu0 %v543
        %545 = vperm.xlu0 %544, %v534
        %v546 = vpop.permute.xlu0 %545
        %v547 = vperm.slane %v479, 4
        %v548 = vlaneseq
        %v549 = vshrl.u32 %v548, 7
        %551 = vset.pattern.permute.xlu0 %v549
        %552 = vperm.xlu0 %551, %v547
        %v553 = vpop.permute.xlu0 %552
        %v554 = vlaneseq
        %v555 = vshrl.u32 %v554, 7
        %v556 = vadd.s32 %v555, 8
        %557 = vset.pattern.permute.xlu0 %v556
        %558 = vperm.xlu0 %557, %v547
        %v559 = vpop.permute.xlu0 %558
        %v560 = vperm.slane %v479, 5
        %v561 = vlaneseq
        %v562 = vshrl.u32 %v561, 7
        %564 = vset.pattern.permute.xlu0 %v562
        %565 = vperm.xlu0 %564, %v560
        %v566 = vpop.permute.xlu0 %565
        %v567 = vlaneseq
        %v568 = vshrl.u32 %v567, 7
        %v569 = vadd.s32 %v568, 8
        %570 = vset.pattern.permute.xlu0 %v569
        %571 = vperm.xlu0 %570, %v560
        %v572 = vpop.permute.xlu0 %571
        %v573 = vperm.slane %v479, 6
        %v574 = vlaneseq
        %v575 = vshrl.u32 %v574, 7
        %577 = vset.pattern.permute.xlu0 %v575
        %578 = vperm.xlu0 %577, %v573
        %v579 = vpop.permute.xlu0 %578
        %v580 = vlaneseq
        %v581 = vshrl.u32 %v580, 7
        %v582 = vadd.s32 %v581, 8
        %583 = vset.pattern.permute.xlu0 %v582
        %584 = vperm.xlu0 %583, %v573
        %v585 = vpop.permute.xlu0 %584
        %v586 = vperm.slane %v479, 7
        %v587 = vlaneseq
        %v588 = vshrl.u32 %v587, 7
        %590 = vset.pattern.permute.xlu0 %v588
        %591 = vperm.xlu0 %590, %v586
        %v592 = vpop.permute.xlu0 %591
        %v593 = vlaneseq
        %v594 = vshrl.u32 %v593, 7
        %v595 = vadd.s32 %v594, 8
        %596 = vset.pattern.permute.xlu0 %v595
        %597 = vperm.xlu0 %596, %v586
        %v598 = vpop.permute.xlu0 %597
        %v599 = vperm.slane %v402, 0
        %vm600 = vcmask 261120
        %v602 = vsel %vm600, %v445, 0
        %v605 = vsel %vm600, %v446, 0
        %v608 = vsel %vm600, %v447, 0
        %v611 = vsel %vm600, %v448, 0
        %v614 = vsel %vm600, %v449, 0
        %v617 = vsel %vm600, %v450, 0
        %v620 = vsel %vm600, %v451, 0
        %v623 = vsel %vm600, %v452, 0
        %v626 = vsel %vm600, %v453, 0
        %v629 = vsel %vm600, %v454, 0
        %v632 = vsel %vm600, %v455, 0
        %v635 = vsel %vm600, %v456, 0
        %v638 = vsel %vm600, %v457, 0
        %v641 = vsel %vm600, %v458, 0
        %v644 = vsel %vm600, %v459, 0
        %v647 = vsel %vm600, %v460, 0
        %649 = vmatpush.msra.mxu0 0.0
        %650 = vmatpush.msra.mxu0 0.0
        %651 = vmatpush.msra.mxu0 0.0
        %652 = vmatpush.msra.mxu0 0.0
        %653 = vmatpush.msra.mxu0 0.0
        %654 = vmatpush.msra.mxu0 0.0
        %655 = vmatpush.msra.mxu0 0.0
        %656 = vmatpush.msra.mxu0 0.0
        %657 = vmatpush.msra.mxu0 0.0
        %658 = vmatpush.msra.mxu0 0.0
        %659 = vmatpush.msra.mxu0 0.0
        %660 = vmatpush.msra.mxu0 0.0
        %661 = vmatpush.msra.mxu0 %v381
        %662 = vmatpush.msra.mxu0 %v380
        %663 = vmatpush.msra.mxu0 %v379
        %664 = vmatpush.msra.mxu0 %v378
        %665 = vmatmul.f32.gmra.mxu0 %v602
        %v666 = vpop.f32.mrf.mxu0
        %v667 = vadd.f32 %v599, %v666
        %668 = vmatmul.f32.gmra.mxu0 %v605
        %v669 = vpop.f32.mrf.mxu0
        %v670 = vadd.f32 %v599, %v669
        %671 = vmatmul.f32.gmra.mxu0 %v608
        %v672 = vpop.f32.mrf.mxu0
        %v673 = vadd.f32 %v599, %v672
        %674 = vmatmul.f32.gmra.mxu0 %v611
        %v675 = vpop.f32.mrf.mxu0
        %v676 = vadd.f32 %v599, %v675
        %677 = vmatmul.f32.gmra.mxu0 %v614
        %v678 = vpop.f32.mrf.mxu0
        %v679 = vadd.f32 %v599, %v678
        %680 = vmatmul.f32.gmra.mxu0 %v617
        %v681 = vpop.f32.mrf.mxu0
        %v682 = vadd.f32 %v599, %v681
        %683 = vmatmul.f32.gmra.mxu0 %v620
        %v684 = vpop.f32.mrf.mxu0
        %v685 = vadd.f32 %v599, %v684
        %686 = vmatmul.f32.gmra.mxu0 %v623
        %v687 = vpop.f32.mrf.mxu0
        %v688 = vadd.f32 %v599, %v687
        %689 = vmatmul.f32.gmra.mxu0 %v626
        %v690 = vpop.f32.mrf.mxu0
        %v691 = vadd.f32 %v599, %v690
        %692 = vmatmul.f32.gmra.mxu0 %v629
        %v693 = vpop.f32.mrf.mxu0
        %v694 = vadd.f32 %v599, %v693
        %695 = vmatmul.f32.gmra.mxu0 %v632
        %v696 = vpop.f32.mrf.mxu0
        %v697 = vadd.f32 %v599, %v696
        %698 = vmatmul.f32.gmra.mxu0 %v635
        %v699 = vpop.f32.mrf.mxu0
        %v700 = vadd.f32 %v599, %v699
        %701 = vmatmul.f32.gmra.mxu0 %v638
        %v702 = vpop.f32.mrf.mxu0
        %v703 = vadd.f32 %v599, %v702
        %704 = vmatmul.f32.gmra.mxu0 %v641
        %v705 = vpop.f32.mrf.mxu0
        %v706 = vadd.f32 %v599, %v705
        %707 = vmatmul.f32.gmra.mxu0 %v644
        %v708 = vpop.f32.mrf.mxu0
        %v709 = vadd.f32 %v599, %v708
        %710 = vmatmul.f32.gmra.mxu0 %v647
        %v711 = vpop.f32.mrf.mxu0
        %v712 = vadd.f32 %v599, %v711
        %713 = vdwg.mxu0
        %v714 = vadd.f32 %v667, %v501
        %v715 = vadd.f32 %v670, %v507
        %v716 = vadd.f32 %v673, %v514
        %v717 = vadd.f32 %v676, %v520
        %v718 = vadd.f32 %v679, %v527
        %v719 = vadd.f32 %v682, %v533
        %v720 = vadd.f32 %v685, %v540
        %v721 = vadd.f32 %v688, %v546
        %v722 = vadd.f32 %v691, %v553
        %v723 = vadd.f32 %v694, %v559
        %v724 = vadd.f32 %v697, %v566
        %v725 = vadd.f32 %v700, %v572
        %v726 = vadd.f32 %v703, %v579
        %v727 = vadd.f32 %v706, %v585
        %v728 = vadd.f32 %v709, %v592
        %v729 = vadd.f32 %v712, %v598
        %vm730 = vcmask 556544
        %v731 = vsel %vm730, %v714, -inf
        %v732 = vsel %vm730, %v716, -inf
        %v733 = vsel %vm730, %v718, -inf
        %v734 = vmax.f32 %v731, %v733
        %v735 = vsel %vm730, %v720, -inf
        %v736 = vmax.f32 %v732, %v735
        %v737 = vsel %vm730, %v722, -inf
        %v738 = vmax.f32 %v734, %v737
        %v739 = vsel %vm730, %v724, -inf
        %v740 = vmax.f32 %v736, %v739
        %v741 = vsel %vm730, %v726, -inf
        %v742 = vmax.f32 %v738, %v741
        %v743 = vsel %vm730, %v728, -inf
        %v744 = vmax.f32 %v740, %v743
        %v745 = vmax.f32 %v742, %v744
        %v746 = vsel %vm730, %v715, -inf
        %v747 = vsel %vm730, %v717, -inf
        %v748 = vsel %vm730, %v719, -inf
        %v749 = vmax.f32 %v746, %v748
        %v750 = vsel %vm730, %v721, -inf
        %v751 = vmax.f32 %v747, %v750
        %v752 = vsel %vm730, %v723, -inf
        %v753 = vmax.f32 %v749, %v752
        %v754 = vsel %vm730, %v725, -inf
        %v755 = vmax.f32 %v751, %v754
        %v756 = vsel %vm730, %v727, -inf
        %v757 = vmax.f32 %v753, %v756
        %v758 = vsel %vm730, %v729, -inf
        %v759 = vmax.f32 %v755, %v758
        %v760 = vmax.f32 %v757, %v759
        %v761 = vsub.f32 %v714, %v745
        %v762 = vsub.f32 %v715, %v760
        %v763 = vsub.f32 %v716, %v745
        %v764 = vsub.f32 %v717, %v760
        %v765 = vsub.f32 %v718, %v745
        %v766 = vsub.f32 %v719, %v760
        %v767 = vsub.f32 %v720, %v745
        %v768 = vsub.f32 %v721, %v760
        %v769 = vsub.f32 %v722, %v745
        %v770 = vsub.f32 %v723, %v760
        %v771 = vsub.f32 %v724, %v745
        %v772 = vsub.f32 %v725, %v760
        %v773 = vsub.f32 %v726, %v745
        %v774 = vsub.f32 %v727, %v760
        %v775 = vsub.f32 %v728, %v745
        %v776 = vsub.f32 %v729, %v760
        %v777 = vmul.f32 %v761, 1.442695
        %v778 = vpow.pop %v777
        %v779 = vmul.f32 %v762, 1.442695
        %v780 = vpow.pop %v779
        %v781 = vmul.f32 %v763, 1.442695
        %v782 = vpow.pop %v781
        %v783 = vmul.f32 %v764, 1.442695
        %v784 = vpow.pop %v783
        %v785 = vmul.f32 %v765, 1.442695
        %v786 = vpow.pop %v785
        %v787 = vmul.f32 %v766, 1.442695
        %v788 = vpow.pop %v787
        %v789 = vmul.f32 %v767, 1.442695
        %v790 = vpow.pop %v789
        %v791 = vmul.f32 %v768, 1.442695
        %v792 = vpow.pop %v791
        %v793 = vmul.f32 %v769, 1.442695
        %v794 = vpow.pop %v793
        %v795 = vmul.f32 %v770, 1.442695
        %v796 = vpow.pop %v795
        %v797 = vmul.f32 %v771, 1.442695
        %v798 = vpow.pop %v797
        %v799 = vmul.f32 %v772, 1.442695
        %v800 = vpow.pop %v799
        %v801 = vmul.f32 %v773, 1.442695
        %v802 = vpow.pop %v801
        %v803 = vmul.f32 %v774, 1.442695
        %v804 = vpow.pop %v803
        %v805 = vmul.f32 %v775, 1.442695
        %v806 = vpow.pop %v805
        %v807 = vmul.f32 %v776, 1.442695
        %v808 = vpow.pop %v807
        %v809 = vsel %vm730, %v778, 0.0
        %v810 = vsel %vm730, %v782, 0.0
        %v811 = vadd.f32 %v809, %v810
        %v812 = vsel %vm730, %v786, 0.0
        %v813 = vadd.f32 %v811, %v812
        %v814 = vsel %vm730, %v790, 0.0
        %v815 = vadd.f32 %v813, %v814
        %v816 = vsel %vm730, %v794, 0.0
        %v817 = vadd.f32 %v815, %v816
        %v818 = vsel %vm730, %v798, 0.0
        %v819 = vadd.f32 %v817, %v818
        %v820 = vsel %vm730, %v802, 0.0
        %v821 = vadd.f32 %v819, %v820
        %v822 = vsel %vm730, %v806, 0.0
        %v823 = vadd.f32 %v821, %v822
        %v824 = vsel %vm730, %v780, 0.0
        %v825 = vsel %vm730, %v784, 0.0
        %v826 = vadd.f32 %v824, %v825
        %v827 = vsel %vm730, %v788, 0.0
        %v828 = vadd.f32 %v826, %v827
        %v829 = vsel %vm730, %v792, 0.0
        %v830 = vadd.f32 %v828, %v829
        %v831 = vsel %vm730, %v796, 0.0
        %v832 = vadd.f32 %v830, %v831
        %v833 = vsel %vm730, %v800, 0.0
        %v834 = vadd.f32 %v832, %v833
        %v835 = vsel %vm730, %v804, 0.0
        %v836 = vadd.f32 %v834, %v835
        %v837 = vsel %vm730, %v808, 0.0
        %v838 = vadd.f32 %v836, %v837
        %v839 = vrcp.pop %v823
        %v840 = vrcp.pop %v838
        %v841 = vmul.f32 %v778, %v839
        %v842 = vmul.f32 %v780, %v840
        %v843 = vmul.f32 %v782, %v839
        %v844 = vmul.f32 %v784, %v840
        %v845 = vmul.f32 %v786, %v839
        %v846 = vmul.f32 %v788, %v840
        %v847 = vmul.f32 %v790, %v839
        %v848 = vmul.f32 %v792, %v840
        %v849 = vmul.f32 %v794, %v839
        %v850 = vmul.f32 %v796, %v840
        %v851 = vmul.f32 %v798, %v839
        %v852 = vmul.f32 %v800, %v840
        %v853 = vmul.f32 %v802, %v839
        %v854 = vmul.f32 %v804, %v840
        %v855 = vmul.f32 %v806, %v839
        %v856 = vmul.f32 %v808, %v840
        %858 = vset.pattern.permute.xlu0 64
        %859 = vperm.xlu0 %858, %v841
        %v860 = vpop.permute.xlu0 %859
        %863 = vset.pattern.permute.xlu0 64
        %864 = vperm.xlu0 %863, %v842
        %v865 = vpop.permute.xlu0 %864
        %868 = vset.pattern.permute.xlu0 64
        %869 = vperm.xlu0 %868, %v843
        %v870 = vpop.permute.xlu0 %869
        %873 = vset.pattern.permute.xlu0 64
        %874 = vperm.xlu0 %873, %v844
        %v875 = vpop.permute.xlu0 %874
        %878 = vset.pattern.permute.xlu0 64
        %879 = vperm.xlu0 %878, %v845
        %v880 = vpop.permute.xlu0 %879
        %883 = vset.pattern.permute.xlu0 64
        %884 = vperm.xlu0 %883, %v846
        %v885 = vpop.permute.xlu0 %884
        %888 = vset.pattern.permute.xlu0 64
        %889 = vperm.xlu0 %888, %v847
        %v890 = vpop.permute.xlu0 %889
        %893 = vset.pattern.permute.xlu0 64
        %894 = vperm.xlu0 %893, %v848
        %v895 = vpop.permute.xlu0 %894
        %898 = vset.pattern.permute.xlu0 64
        %899 = vperm.xlu0 %898, %v849
        %v900 = vpop.permute.xlu0 %899
        %903 = vset.pattern.permute.xlu0 64
        %904 = vperm.xlu0 %903, %v850
        %v905 = vpop.permute.xlu0 %904
        %908 = vset.pattern.permute.xlu0 64
        %909 = vperm.xlu0 %908, %v851
        %v910 = vpop.permute.xlu0 %909
        %913 = vset.pattern.permute.xlu0 64
        %914 = vperm.xlu0 %913, %v852
        %v915 = vpop.permute.xlu0 %914
        %918 = vset.pattern.permute.xlu0 64
        %919 = vperm.xlu0 %918, %v853
        %v920 = vpop.permute.xlu0 %919
        %923 = vset.pattern.permute.xlu0 64
        %924 = vperm.xlu0 %923, %v854
        %v925 = vpop.permute.xlu0 %924
        %928 = vset.pattern.permute.xlu0 64
        %929 = vperm.xlu0 %928, %v855
        %v930 = vpop.permute.xlu0 %929
        %933 = vset.pattern.permute.xlu0 64
        %934 = vperm.xlu0 %933, %v856
        %v935 = vpop.permute.xlu0 %934
        %v937 = vmul.f32 %v667, %v860
        %v938 = vmul.f32 %v670, %v865
        %v939 = vmul.f32 %v673, %v870
        %v940 = vmul.f32 %v676, %v875
        %v941 = vmul.f32 %v679, %v880
        %v942 = vmul.f32 %v682, %v885
        %v943 = vmul.f32 %v685, %v890
        %v944 = vmul.f32 %v688, %v895
        %v945 = vmul.f32 %v691, %v900
        %v946 = vmul.f32 %v694, %v905
        %v947 = vmul.f32 %v697, %v910
        %v948 = vmul.f32 %v700, %v915
        %v949 = vmul.f32 %v703, %v920
        %v950 = vmul.f32 %v706, %v925
        %v951 = vmul.f32 %v709, %v930
        %v952 = vmul.f32 %v712, %v935
        %vm953 = vcmask 64512
        %v954 = vsel %vm953, %v937, 0.0
        %v955 = vsel %vm953, %v939, 0.0
        %v956 = vadd.f32 %v954, %v955
        %v957 = vsel %vm953, %v941, 0.0
        %v958 = vadd.f32 %v956, %v957
        %v959 = vsel %vm953, %v943, 0.0
        %v960 = vadd.f32 %v958, %v959
        %v961 = vsel %vm953, %v945, 0.0
        %v962 = vadd.f32 %v960, %v961
        %v963 = vsel %vm953, %v947, 0.0
        %v964 = vadd.f32 %v962, %v963
        %v965 = vsel %vm953, %v949, 0.0
        %v966 = vadd.f32 %v964, %v965
        %v967 = vsel %vm953, %v951, 0.0
        %v968 = vadd.f32 %v966, %v967
        %v969 = vsel %vm953, %v938, 0.0
        %v970 = vsel %vm953, %v940, 0.0
        %v971 = vadd.f32 %v969, %v970
        %v972 = vsel %vm953, %v942, 0.0
        %v973 = vadd.f32 %v971, %v972
        %v974 = vsel %vm953, %v944, 0.0
        %v975 = vadd.f32 %v973, %v974
        %v976 = vsel %vm953, %v946, 0.0
        %v977 = vadd.f32 %v975, %v976
        %v978 = vsel %vm953, %v948, 0.0
        %v979 = vadd.f32 %v977, %v978
        %v980 = vsel %vm953, %v950, 0.0
        %v981 = vadd.f32 %v979, %v980
        %v982 = vsel %vm953, %v952, 0.0
        %v983 = vadd.f32 %v981, %v982
        %984 = vset.pattern.permute.xlu0 65
        %985 = vperm.xlu0 %984, %v841
        %v986 = vpop.permute.xlu0 %985
        %988 = vset.pattern.permute.xlu0 65
        %989 = vperm.xlu0 %988, %v842
        %v990 = vpop.permute.xlu0 %989
        %992 = vset.pattern.permute.xlu0 65
        %993 = vperm.xlu0 %992, %v843
        %v994 = vpop.permute.xlu0 %993
        %996 = vset.pattern.permute.xlu0 65
        %997 = vperm.xlu0 %996, %v844
        %v998 = vpop.permute.xlu0 %997
        %1000 = vset.pattern.permute.xlu0 65
        %1001 = vperm.xlu0 %1000, %v845
        %v1002 = vpop.permute.xlu0 %1001
        %1004 = vset.pattern.permute.xlu0 65
        %1005 = vperm.xlu0 %1004, %v846
        %v1006 = vpop.permute.xlu0 %1005
        %1008 = vset.pattern.permute.xlu0 65
        %1009 = vperm.xlu0 %1008, %v847
        %v1010 = vpop.permute.xlu0 %1009
        %1012 = vset.pattern.permute.xlu0 65
        %1013 = vperm.xlu0 %1012, %v848
        %v1014 = vpop.permute.xlu0 %1013
        %1016 = vset.pattern.permute.xlu0 65
        %1017 = vperm.xlu0 %1016, %v849
        %v1018 = vpop.permute.xlu0 %1017
        %1020 = vset.pattern.permute.xlu0 65
        %1021 = vperm.xlu0 %1020, %v850
        %v1022 = vpop.permute.xlu0 %1021
        %1024 = vset.pattern.permute.xlu0 65
        %1025 = vperm.xlu0 %1024, %v851
        %v1026 = vpop.permute.xlu0 %1025
        %1028 = vset.pattern.permute.xlu0 65
        %1029 = vperm.xlu0 %1028, %v852
        %v1030 = vpop.permute.xlu0 %1029
        %1032 = vset.pattern.permute.xlu0 65
        %1033 = vperm.xlu0 %1032, %v853
        %v1034 = vpop.permute.xlu0 %1033
        %1036 = vset.pattern.permute.xlu0 65
        %1037 = vperm.xlu0 %1036, %v854
        %v1038 = vpop.permute.xlu0 %1037
        %1040 = vset.pattern.permute.xlu0 65
        %1041 = vperm.xlu0 %1040, %v855
        %v1042 = vpop.permute.xlu0 %1041
        %1044 = vset.pattern.permute.xlu0 65
        %1045 = vperm.xlu0 %1044, %v856
        %v1046 = vpop.permute.xlu0 %1045
        %v1048 = vmul.f32 %v667, %v986
        %v1049 = vmul.f32 %v670, %v990
        %v1050 = vmul.f32 %v673, %v994
        %v1051 = vmul.f32 %v676, %v998
        %v1052 = vmul.f32 %v679, %v1002
        %v1053 = vmul.f32 %v682, %v1006
        %v1054 = vmul.f32 %v685, %v1010
        %v1055 = vmul.f32 %v688, %v1014
        %v1056 = vmul.f32 %v691, %v1018
        %v1057 = vmul.f32 %v694, %v1022
        %v1058 = vmul.f32 %v697, %v1026
        %v1059 = vmul.f32 %v700, %v1030
        %v1060 = vmul.f32 %v703, %v1034
        %v1061 = vmul.f32 %v706, %v1038
        %v1062 = vmul.f32 %v709, %v1042
        %v1063 = vmul.f32 %v712, %v1046
        %vm1064 = vcmask 130112
        %v1065 = vsel %vm1064, %v1048, 0.0
        %v1066 = vsel %vm1064, %v1050, 0.0
        %v1067 = vadd.f32 %v1065, %v1066
        %v1068 = vsel %vm1064, %v1052, 0.0
        %v1069 = vadd.f32 %v1067, %v1068
        %v1070 = vsel %vm1064, %v1054, 0.0
        %v1071 = vadd.f32 %v1069, %v1070
        %v1072 = vsel %vm1064, %v1056, 0.0
        %v1073 = vadd.f32 %v1071, %v1072
        %v1074 = vsel %vm1064, %v1058, 0.0
        %v1075 = vadd.f32 %v1073, %v1074
        %v1076 = vsel %vm1064, %v1060, 0.0
        %v1077 = vadd.f32 %v1075, %v1076
        %v1078 = vsel %vm1064, %v1062, 0.0
        %v1079 = vadd.f32 %v1077, %v1078
        %v1080 = vsel %vm1064, %v1049, 0.0
        %v1081 = vsel %vm1064, %v1051, 0.0
        %v1082 = vadd.f32 %v1080, %v1081
        %v1083 = vsel %vm1064, %v1053, 0.0
        %v1084 = vadd.f32 %v1082, %v1083
        %v1085 = vsel %vm1064, %v1055, 0.0
        %v1086 = vadd.f32 %v1084, %v1085
        %v1087 = vsel %vm1064, %v1057, 0.0
        %v1088 = vadd.f32 %v1086, %v1087
        %v1089 = vsel %vm1064, %v1059, 0.0
        %v1090 = vadd.f32 %v1088, %v1089
        %v1091 = vsel %vm1064, %v1061, 0.0
        %v1092 = vadd.f32 %v1090, %v1091
        %v1093 = vsel %vm1064, %v1063, 0.0
        %v1094 = vadd.f32 %v1092, %v1093
        %1095 = vset.pattern.permute.xlu0 66
        %1096 = vperm.xlu0 %1095, %v841
        %v1097 = vpop.permute.xlu0 %1096
        %1099 = vset.pattern.permute.xlu0 66
        %1100 = vperm.xlu0 %1099, %v842
        %v1101 = vpop.permute.xlu0 %1100
        %1103 = vset.pattern.permute.xlu0 66
        %1104 = vperm.xlu0 %1103, %v843
        %v1105 = vpop.permute.xlu0 %1104
        %1107 = vset.pattern.permute.xlu0 66
        %1108 = vperm.xlu0 %1107, %v844
        %v1109 = vpop.permute.xlu0 %1108
        %1111 = vset.pattern.permute.xlu0 66
        %1112 = vperm.xlu0 %1111, %v845
        %v1113 = vpop.permute.xlu0 %1112
        %1115 = vset.pattern.permute.xlu0 66
        %1116 = vperm.xlu0 %1115, %v846
        %v1117 = vpop.permute.xlu0 %1116
        %1119 = vset.pattern.permute.xlu0 66
        %1120 = vperm.xlu0 %1119, %v847
        %v1121 = vpop.permute.xlu0 %1120
        %1123 = vset.pattern.permute.xlu0 66
        %1124 = vperm.xlu0 %1123, %v848
        %v1125 = vpop.permute.xlu0 %1124
        %1127 = vset.pattern.permute.xlu0 66
        %1128 = vperm.xlu0 %1127, %v849
        %v1129 = vpop.permute.xlu0 %1128
        %1131 = vset.pattern.permute.xlu0 66
        %1132 = vperm.xlu0 %1131, %v850
        %v1133 = vpop.permute.xlu0 %1132
        %1135 = vset.pattern.permute.xlu0 66
        %1136 = vperm.xlu0 %1135, %v851
        %v1137 = vpop.permute.xlu0 %1136
        %1139 = vset.pattern.permute.xlu0 66
        %1140 = vperm.xlu0 %1139, %v852
        %v1141 = vpop.permute.xlu0 %1140
        %1143 = vset.pattern.permute.xlu0 66
        %1144 = vperm.xlu0 %1143, %v853
        %v1145 = vpop.permute.xlu0 %1144
        %1147 = vset.pattern.permute.xlu0 66
        %1148 = vperm.xlu0 %1147, %v854
        %v1149 = vpop.permute.xlu0 %1148
        %1151 = vset.pattern.permute.xlu0 66
        %1152 = vperm.xlu0 %1151, %v855
        %v1153 = vpop.permute.xlu0 %1152
        %1155 = vset.pattern.permute.xlu0 66
        %1156 = vperm.xlu0 %1155, %v856
        %v1157 = vpop.permute.xlu0 %1156
        %v1159 = vmul.f32 %v667, %v1097
        %v1160 = vmul.f32 %v670, %v1101
        %v1161 = vmul.f32 %v673, %v1105
        %v1162 = vmul.f32 %v676, %v1109
        %v1163 = vmul.f32 %v679, %v1113
        %v1164 = vmul.f32 %v682, %v1117
        %v1165 = vmul.f32 %v685, %v1121
        %v1166 = vmul.f32 %v688, %v1125
        %v1167 = vmul.f32 %v691, %v1129
        %v1168 = vmul.f32 %v694, %v1133
        %v1169 = vmul.f32 %v697, %v1137
        %v1170 = vmul.f32 %v700, %v1141
        %v1171 = vmul.f32 %v703, %v1145
        %v1172 = vmul.f32 %v706, %v1149
        %v1173 = vmul.f32 %v709, %v1153
        %v1174 = vmul.f32 %v712, %v1157
        %vm1175 = vcmask 195712
        %v1176 = vsel %vm1175, %v1159, 0.0
        %v1177 = vsel %vm1175, %v1161, 0.0
        %v1178 = vadd.f32 %v1176, %v1177
        %v1179 = vsel %vm1175, %v1163, 0.0
        %v1180 = vadd.f32 %v1178, %v1179
        %v1181 = vsel %vm1175, %v1165, 0.0
        %v1182 = vadd.f32 %v1180, %v1181
        %v1183 = vsel %vm1175, %v1167, 0.0
        %v1184 = vadd.f32 %v1182, %v1183
        %v1185 = vsel %vm1175, %v1169, 0.0
        %v1186 = vadd.f32 %v1184, %v1185
        %v1187 = vsel %vm1175, %v1171, 0.0
        %v1188 = vadd.f32 %v1186, %v1187
        %v1189 = vsel %vm1175, %v1173, 0.0
        %v1190 = vadd.f32 %v1188, %v1189
        %v1191 = vsel %vm1175, %v1160, 0.0
        %v1192 = vsel %vm1175, %v1162, 0.0
        %v1193 = vadd.f32 %v1191, %v1192
        %v1194 = vsel %vm1175, %v1164, 0.0
        %v1195 = vadd.f32 %v1193, %v1194
        %v1196 = vsel %vm1175, %v1166, 0.0
        %v1197 = vadd.f32 %v1195, %v1196
        %v1198 = vsel %vm1175, %v1168, 0.0
        %v1199 = vadd.f32 %v1197, %v1198
        %v1200 = vsel %vm1175, %v1170, 0.0
        %v1201 = vadd.f32 %v1199, %v1200
        %v1202 = vsel %vm1175, %v1172, 0.0
        %v1203 = vadd.f32 %v1201, %v1202
        %v1204 = vsel %vm1175, %v1174, 0.0
        %v1205 = vadd.f32 %v1203, %v1204
        %1206 = vset.pattern.permute.xlu0 67
        %1207 = vperm.xlu0 %1206, %v841
        %v1208 = vpop.permute.xlu0 %1207
        %1210 = vset.pattern.permute.xlu0 67
        %1211 = vperm.xlu0 %1210, %v842
        %v1212 = vpop.permute.xlu0 %1211
        %1214 = vset.pattern.permute.xlu0 67
        %1215 = vperm.xlu0 %1214, %v843
        %v1216 = vpop.permute.xlu0 %1215
        %1218 = vset.pattern.permute.xlu0 67
        %1219 = vperm.xlu0 %1218, %v844
        %v1220 = vpop.permute.xlu0 %1219
        %1222 = vset.pattern.permute.xlu0 67
        %1223 = vperm.xlu0 %1222, %v845
        %v1224 = vpop.permute.xlu0 %1223
        %1226 = vset.pattern.permute.xlu0 67
        %1227 = vperm.xlu0 %1226, %v846
        %v1228 = vpop.permute.xlu0 %1227
        %1230 = vset.pattern.permute.xlu0 67
        %1231 = vperm.xlu0 %1230, %v847
        %v1232 = vpop.permute.xlu0 %1231
        %1234 = vset.pattern.permute.xlu0 67
        %1235 = vperm.xlu0 %1234, %v848
        %v1236 = vpop.permute.xlu0 %1235
        %1238 = vset.pattern.permute.xlu0 67
        %1239 = vperm.xlu0 %1238, %v849
        %v1240 = vpop.permute.xlu0 %1239
        %1242 = vset.pattern.permute.xlu0 67
        %1243 = vperm.xlu0 %1242, %v850
        %v1244 = vpop.permute.xlu0 %1243
        %1246 = vset.pattern.permute.xlu0 67
        %1247 = vperm.xlu0 %1246, %v851
        %v1248 = vpop.permute.xlu0 %1247
        %1250 = vset.pattern.permute.xlu0 67
        %1251 = vperm.xlu0 %1250, %v852
        %v1252 = vpop.permute.xlu0 %1251
        %1254 = vset.pattern.permute.xlu0 67
        %1255 = vperm.xlu0 %1254, %v853
        %v1256 = vpop.permute.xlu0 %1255
        %1258 = vset.pattern.permute.xlu0 67
        %1259 = vperm.xlu0 %1258, %v854
        %v1260 = vpop.permute.xlu0 %1259
        %1262 = vset.pattern.permute.xlu0 67
        %1263 = vperm.xlu0 %1262, %v855
        %v1264 = vpop.permute.xlu0 %1263
        %1266 = vset.pattern.permute.xlu0 67
        %1267 = vperm.xlu0 %1266, %v856
        %v1268 = vpop.permute.xlu0 %1267
        %v1270 = vmul.f32 %v667, %v1208
        %v1271 = vmul.f32 %v670, %v1212
        %v1272 = vmul.f32 %v673, %v1216
        %v1273 = vmul.f32 %v676, %v1220
        %v1274 = vmul.f32 %v679, %v1224
        %v1275 = vmul.f32 %v682, %v1228
        %v1276 = vmul.f32 %v685, %v1232
        %v1277 = vmul.f32 %v688, %v1236
        %v1278 = vmul.f32 %v691, %v1240
        %v1279 = vmul.f32 %v694, %v1244
        %v1280 = vmul.f32 %v697, %v1248
        %v1281 = vmul.f32 %v700, %v1252
        %v1282 = vmul.f32 %v703, %v1256
        %v1283 = vmul.f32 %v706, %v1260
        %v1284 = vmul.f32 %v709, %v1264
        %v1285 = vmul.f32 %v712, %v1268
        %vm1286 = vcmask 261312
        %v1287 = vsel %vm1286, %v1270, 0.0
        %v1288 = vsel %vm1286, %v1272, 0.0
        %v1289 = vadd.f32 %v1287, %v1288
        %v1290 = vsel %vm1286, %v1274, 0.0
        %v1291 = vadd.f32 %v1289, %v1290
        %v1292 = vsel %vm1286, %v1276, 0.0
        %v1293 = vadd.f32 %v1291, %v1292
        %v1294 = vsel %vm1286, %v1278, 0.0
        %v1295 = vadd.f32 %v1293, %v1294
        %v1296 = vsel %vm1286, %v1280, 0.0
        %v1297 = vadd.f32 %v1295, %v1296
        %v1298 = vsel %vm1286, %v1282, 0.0
        %v1299 = vadd.f32 %v1297, %v1298
        %v1300 = vsel %vm1286, %v1284, 0.0
        %v1301 = vadd.f32 %v1299, %v1300
        %v1302 = vsel %vm1286, %v1271, 0.0
        %v1303 = vsel %vm1286, %v1273, 0.0
        %v1304 = vadd.f32 %v1302, %v1303
        %v1305 = vsel %vm1286, %v1275, 0.0
        %v1306 = vadd.f32 %v1304, %v1305
        %v1307 = vsel %vm1286, %v1277, 0.0
        %v1308 = vadd.f32 %v1306, %v1307
        %v1309 = vsel %vm1286, %v1279, 0.0
        %v1310 = vadd.f32 %v1308, %v1309
        %v1311 = vsel %vm1286, %v1281, 0.0
        %v1312 = vadd.f32 %v1310, %v1311
        %v1313 = vsel %vm1286, %v1283, 0.0
        %v1314 = vadd.f32 %v1312, %v1313
        %v1315 = vsel %vm1286, %v1285, 0.0
        %v1316 = vadd.f32 %v1314, %v1315
        %v1317 = vsel %vm953, %v968, %v1079
        %v1318 = vsel %vm953, %v983, %v1094
        %vm1319 = vcmask 130048
        %v1320 = vsel %vm1319, %v1317, %v1190
        %v1321 = vsel %vm1319, %v1318, %v1205
        %vm1322 = vcmask 195584
        %v1323 = vsel %vm1322, %v1320, %v1301
        %v1324 = vsel %vm1322, %v1321, %v1316
        %1327 = vrot.lane.b32.xlu0 %v1323, 32
        %v1328 = vpop.permute.xlu0 %1327
        %1329 = vrot.lane.b32.xlu0 %v1324, 32
        %v1330 = vpop.permute.xlu0 %1329
        %v1333 = vmul.f32 %v667, %v1328
        %v1334 = vmul.f32 %v670, %v1330
        %v1335 = vmul.f32 %v673, %v1328
        %v1336 = vmul.f32 %v676, %v1330
        %v1337 = vmul.f32 %v679, %v1328
        %v1338 = vmul.f32 %v682, %v1330
        %v1339 = vmul.f32 %v685, %v1328
        %v1340 = vmul.f32 %v688, %v1330
        %v1341 = vmul.f32 %v691, %v1328
        %v1342 = vmul.f32 %v694, %v1330
        %v1343 = vmul.f32 %v697, %v1328
        %v1344 = vmul.f32 %v700, %v1330
        %v1345 = vmul.f32 %v703, %v1328
        %v1346 = vmul.f32 %v706, %v1330
        %v1347 = vmul.f32 %v709, %v1328
        %v1348 = vmul.f32 %v712, %v1330
        %v1349 = vperm.slane %v403, 0
        %1366 = vrot.lane.b32.xlu0 %v1333, 96
        %v1367 = vpop.permute.xlu0 %1366
        %1368 = vrot.lane.b32.xlu0 %v1334, 96
        %v1369 = vpop.permute.xlu0 %1368
        %1370 = vrot.lane.b32.xlu0 %v1335, 96
        %v1371 = vpop.permute.xlu0 %1370
        %1372 = vrot.lane.b32.xlu0 %v1336, 96
        %v1373 = vpop.permute.xlu0 %1372
        %1374 = vrot.lane.b32.xlu0 %v1337, 96
        %v1375 = vpop.permute.xlu0 %1374
        %1376 = vrot.lane.b32.xlu0 %v1338, 96
        %v1377 = vpop.permute.xlu0 %1376
        %1378 = vrot.lane.b32.xlu0 %v1339, 96
        %v1379 = vpop.permute.xlu0 %1378
        %1380 = vrot.lane.b32.xlu0 %v1340, 96
        %v1381 = vpop.permute.xlu0 %1380
        %1382 = vrot.lane.b32.xlu0 %v1341, 96
        %v1383 = vpop.permute.xlu0 %1382
        %1384 = vrot.lane.b32.xlu0 %v1342, 96
        %v1385 = vpop.permute.xlu0 %1384
        %1386 = vrot.lane.b32.xlu0 %v1343, 96
        %v1387 = vpop.permute.xlu0 %1386
        %1388 = vrot.lane.b32.xlu0 %v1344, 96
        %v1389 = vpop.permute.xlu0 %1388
        %1390 = vrot.lane.b32.xlu0 %v1345, 96
        %v1391 = vpop.permute.xlu0 %1390
        %1392 = vrot.lane.b32.xlu0 %v1346, 96
        %v1393 = vpop.permute.xlu0 %1392
        %1394 = vrot.lane.b32.xlu0 %v1347, 96
        %v1395 = vpop.permute.xlu0 %1394
        %1396 = vrot.lane.b32.xlu0 %v1348, 96
        %v1397 = vpop.permute.xlu0 %1396
        %v1398 = vsel %vm600, %v1367, 0
        %v1400 = vsel %vm600, %v1369, 0
        %v1402 = vsel %vm600, %v1371, 0
        %v1404 = vsel %vm600, %v1373, 0
        %v1406 = vsel %vm600, %v1375, 0
        %v1408 = vsel %vm600, %v1377, 0
        %v1410 = vsel %vm600, %v1379, 0
        %v1412 = vsel %vm600, %v1381, 0
        %v1414 = vsel %vm600, %v1383, 0
        %v1416 = vsel %vm600, %v1385, 0
        %v1418 = vsel %vm600, %v1387, 0
        %v1420 = vsel %vm600, %v1389, 0
        %v1422 = vsel %vm600, %v1391, 0
        %v1424 = vsel %vm600, %v1393, 0
        %v1426 = vsel %vm600, %v1395, 0
        %v1428 = vsel %vm600, %v1397, 0
        %1430 = vmatpush.msra.mxu0 0.0
        %1431 = vmatpush.msra.mxu0 0.0
        %1432 = vmatpush.msra.mxu0 0.0
        %1433 = vmatpush.msra.mxu0 0.0
        %1434 = vmatpush.msra.mxu0 0.0
        %1435 = vmatpush.msra.mxu0 0.0
        %1436 = vmatpush.msra.mxu0 0.0
        %1437 = vmatpush.msra.mxu0 0.0
        %1438 = vmatpush.msra.mxu0 0.0
        %1439 = vmatpush.msra.mxu0 0.0
        %1440 = vmatpush.msra.mxu0 0.0
        %1441 = vmatpush.msra.mxu0 0.0
        %1442 = vmatpush.msra.mxu0 %v393
        %1443 = vmatpush.msra.mxu0 %v392
        %1444 = vmatpush.msra.mxu0 %v391
        %1445 = vmatpush.msra.mxu0 %v390
        %1446 = vmatmul.f32.gmra.mxu0 %v1398
        %v1447 = vpop.f32.mrf.mxu0
        %v1448 = vadd.f32 %v1349, %v1447
        %1449 = vmatmul.f32.gmra.mxu0 %v1400
        %v1450 = vpop.f32.mrf.mxu0
        %v1451 = vadd.f32 %v1349, %v1450
        %1452 = vmatmul.f32.gmra.mxu0 %v1402
        %v1453 = vpop.f32.mrf.mxu0
        %v1454 = vadd.f32 %v1349, %v1453
        %1455 = vmatmul.f32.gmra.mxu0 %v1404
        %v1456 = vpop.f32.mrf.mxu0
        %v1457 = vadd.f32 %v1349, %v1456
        %1458 = vmatmul.f32.gmra.mxu0 %v1406
        %v1459 = vpop.f32.mrf.mxu0
        %v1460 = vadd.f32 %v1349, %v1459
        %1461 = vmatmul.f32.gmra.mxu0 %v1408
        %v1462 = vpop.f32.mrf.mxu0
        %v1463 = vadd.f32 %v1349, %v1462
        %1464 = vmatmul.f32.gmra.mxu0 %v1410
        %v1465 = vpop.f32.mrf.mxu0
        %v1466 = vadd.f32 %v1349, %v1465
        %1467 = vmatmul.f32.gmra.mxu0 %v1412
        %v1468 = vpop.f32.mrf.mxu0
        %v1469 = vadd.f32 %v1349, %v1468
        %1470 = vmatmul.f32.gmra.mxu0 %v1414
        %v1471 = vpop.f32.mrf.mxu0
        %v1472 = vadd.f32 %v1349, %v1471
        %1473 = vmatmul.f32.gmra.mxu0 %v1416
        %v1474 = vpop.f32.mrf.mxu0
        %v1475 = vadd.f32 %v1349, %v1474
        %1476 = vmatmul.f32.gmra.mxu0 %v1418
        %v1477 = vpop.f32.mrf.mxu0
        %v1478 = vadd.f32 %v1349, %v1477
        %1479 = vmatmul.f32.gmra.mxu0 %v1420
        %v1480 = vpop.f32.mrf.mxu0
        %v1481 = vadd.f32 %v1349, %v1480
        %1482 = vmatmul.f32.gmra.mxu0 %v1422
        %v1483 = vpop.f32.mrf.mxu0
        %v1484 = vadd.f32 %v1349, %v1483
        %1485 = vmatmul.f32.gmra.mxu0 %v1424
        %v1486 = vpop.f32.mrf.mxu0
        %v1487 = vadd.f32 %v1349, %v1486
        %1488 = vmatmul.f32.gmra.mxu0 %v1426
        %v1489 = vpop.f32.mrf.mxu0
        %v1490 = vadd.f32 %v1349, %v1489
        %1491 = vmatmul.f32.gmra.mxu0 %v1428
        %v1492 = vpop.f32.mrf.mxu0
        %v1493 = vadd.f32 %v1349, %v1492
        %1494 = vdwg.mxu0
        %v1495 = vadd.f32 %v1448, %v501
        %v1496 = vadd.f32 %v1451, %v507
        %v1497 = vadd.f32 %v1454, %v514
        %v1498 = vadd.f32 %v1457, %v520
        %v1499 = vadd.f32 %v1460, %v527
        %v1500 = vadd.f32 %v1463, %v533
        %v1501 = vadd.f32 %v1466, %v540
        %v1502 = vadd.f32 %v1469, %v546
        %v1503 = vadd.f32 %v1472, %v553
        %v1504 = vadd.f32 %v1475, %v559
        %v1505 = vadd.f32 %v1478, %v566
        %v1506 = vadd.f32 %v1481, %v572
        %v1507 = vadd.f32 %v1484, %v579
        %v1508 = vadd.f32 %v1487, %v585
        %v1509 = vadd.f32 %v1490, %v592
        %v1510 = vadd.f32 %v1493, %v598
        %vm1511 = vcmask 31744
        %v1512 = vsel %vm1511, %v1495, -inf
        %v1513 = vsel %vm1511, %v1497, -inf
        %v1514 = vsel %vm1511, %v1499, -inf
        %v1515 = vmax.f32 %v1512, %v1514
        %v1516 = vsel %vm1511, %v1501, -inf
        %v1517 = vmax.f32 %v1513, %v1516
        %v1518 = vsel %vm1511, %v1503, -inf
        %v1519 = vmax.f32 %v1515, %v1518
        %v1520 = vsel %vm1511, %v1505, -inf
        %v1521 = vmax.f32 %v1517, %v1520
        %v1522 = vsel %vm1511, %v1507, -inf
        %v1523 = vmax.f32 %v1519, %v1522
        %v1524 = vsel %vm1511, %v1509, -inf
        %v1525 = vmax.f32 %v1521, %v1524
        %v1526 = vmax.f32 %v1523, %v1525
        %v1527 = vsel %vm1511, %v1496, -inf
        %v1528 = vsel %vm1511, %v1498, -inf
        %v1529 = vsel %vm1511, %v1500, -inf
        %v1530 = vmax.f32 %v1527, %v1529
        %v1531 = vsel %vm1511, %v1502, -inf
        %v1532 = vmax.f32 %v1528, %v1531
        %v1533 = vsel %vm1511, %v1504, -inf
        %v1534 = vmax.f32 %v1530, %v1533
        %v1535 = vsel %vm1511, %v1506, -inf
        %v1536 = vmax.f32 %v1532, %v1535
        %v1537 = vsel %vm1511, %v1508, -inf
        %v1538 = vmax.f32 %v1534, %v1537
        %v1539 = vsel %vm1511, %v1510, -inf
        %v1540 = vmax.f32 %v1536, %v1539
        %v1541 = vmax.f32 %v1538, %v1540
        %v1542 = vsub.f32 %v1495, %v1526
        %v1543 = vsub.f32 %v1496, %v1541
        %v1544 = vsub.f32 %v1497, %v1526
        %v1545 = vsub.f32 %v1498, %v1541
        %v1546 = vsub.f32 %v1499, %v1526
        %v1547 = vsub.f32 %v1500, %v1541
        %v1548 = vsub.f32 %v1501, %v1526
        %v1549 = vsub.f32 %v1502, %v1541
        %v1550 = vsub.f32 %v1503, %v1526
        %v1551 = vsub.f32 %v1504, %v1541
        %v1552 = vsub.f32 %v1505, %v1526
        %v1553 = vsub.f32 %v1506, %v1541
        %v1554 = vsub.f32 %v1507, %v1526
        %v1555 = vsub.f32 %v1508, %v1541
        %v1556 = vsub.f32 %v1509, %v1526
        %v1557 = vsub.f32 %v1510, %v1541
        %v1558 = vmul.f32 %v1542, 1.442695
        %v1559 = vpow.pop %v1558
        %v1560 = vmul.f32 %v1543, 1.442695
        %v1561 = vpow.pop %v1560
        %v1562 = vmul.f32 %v1544, 1.442695
        %v1563 = vpow.pop %v1562
        %v1564 = vmul.f32 %v1545, 1.442695
        %v1565 = vpow.pop %v1564
        %v1566 = vmul.f32 %v1546, 1.442695
        %v1567 = vpow.pop %v1566
        %v1568 = vmul.f32 %v1547, 1.442695
        %v1569 = vpow.pop %v1568
        %v1570 = vmul.f32 %v1548, 1.442695
        %v1571 = vpow.pop %v1570
        %v1572 = vmul.f32 %v1549, 1.442695
        %v1573 = vpow.pop %v1572
        %v1574 = vmul.f32 %v1550, 1.442695
        %v1575 = vpow.pop %v1574
        %v1576 = vmul.f32 %v1551, 1.442695
        %v1577 = vpow.pop %v1576
        %v1578 = vmul.f32 %v1552, 1.442695
        %v1579 = vpow.pop %v1578
        %v1580 = vmul.f32 %v1553, 1.442695
        %v1581 = vpow.pop %v1580
        %v1582 = vmul.f32 %v1554, 1.442695
        %v1583 = vpow.pop %v1582
        %v1584 = vmul.f32 %v1555, 1.442695
        %v1585 = vpow.pop %v1584
        %v1586 = vmul.f32 %v1556, 1.442695
        %v1587 = vpow.pop %v1586
        %v1588 = vmul.f32 %v1557, 1.442695
        %v1589 = vpow.pop %v1588
        %v1590 = vsel %vm1511, %v1559, 0.0
        %v1591 = vsel %vm1511, %v1563, 0.0
        %v1592 = vadd.f32 %v1590, %v1591
        %v1593 = vsel %vm1511, %v1567, 0.0
        %v1594 = vadd.f32 %v1592, %v1593
        %v1595 = vsel %vm1511, %v1571, 0.0
        %v1596 = vadd.f32 %v1594, %v1595
        %v1597 = vsel %vm1511, %v1575, 0.0
        %v1598 = vadd.f32 %v1596, %v1597
        %v1599 = vsel %vm1511, %v1579, 0.0
        %v1600 = vadd.f32 %v1598, %v1599
        %v1601 = vsel %vm1511, %v1583, 0.0
        %v1602 = vadd.f32 %v1600, %v1601
        %v1603 = vsel %vm1511, %v1587, 0.0
        %v1604 = vadd.f32 %v1602, %v1603
        %v1605 = vsel %vm1511, %v1561, 0.0
        %v1606 = vsel %vm1511, %v1565, 0.0
        %v1607 = vadd.f32 %v1605, %v1606
        %v1608 = vsel %vm1511, %v1569, 0.0
        %v1609 = vadd.f32 %v1607, %v1608
        %v1610 = vsel %vm1511, %v1573, 0.0
        %v1611 = vadd.f32 %v1609, %v1610
        %v1612 = vsel %vm1511, %v1577, 0.0
        %v1613 = vadd.f32 %v1611, %v1612
        %v1614 = vsel %vm1511, %v1581, 0.0
        %v1615 = vadd.f32 %v1613, %v1614
        %v1616 = vsel %vm1511, %v1585, 0.0
        %v1617 = vadd.f32 %v1615, %v1616
        %v1618 = vsel %vm1511, %v1589, 0.0
        %v1619 = vadd.f32 %v1617, %v1618
        %v1620 = vrcp.pop %v1604
        %v1621 = vrcp.pop %v1619
        %v1622 = vmul.f32 %v1559, %v1620
        %v1623 = vmul.f32 %v1561, %v1621
        %v1624 = vmul.f32 %v1563, %v1620
        %v1625 = vmul.f32 %v1565, %v1621
        %v1626 = vmul.f32 %v1567, %v1620
        %v1627 = vmul.f32 %v1569, %v1621
        %v1628 = vmul.f32 %v1571, %v1620
        %v1629 = vmul.f32 %v1573, %v1621
        %v1630 = vmul.f32 %v1575, %v1620
        %v1631 = vmul.f32 %v1577, %v1621
        %v1632 = vmul.f32 %v1579, %v1620
        %v1633 = vmul.f32 %v1581, %v1621
        %v1634 = vmul.f32 %v1583, %v1620
        %v1635 = vmul.f32 %v1585, %v1621
        %v1636 = vmul.f32 %v1587, %v1620
        %v1637 = vmul.f32 %v1589, %v1621
        %1639 = vset.pattern.permute.xlu0 0
        %1640 = vperm.xlu0 %1639, %v1622
        %v1641 = vpop.permute.xlu0 %1640
        %1644 = vset.pattern.permute.xlu0 0
        %1645 = vperm.xlu0 %1644, %v1623
        %v1646 = vpop.permute.xlu0 %1645
        %1649 = vset.pattern.permute.xlu0 0
        %1650 = vperm.xlu0 %1649, %v1624
        %v1651 = vpop.permute.xlu0 %1650
        %1654 = vset.pattern.permute.xlu0 0
        %1655 = vperm.xlu0 %1654, %v1625
        %v1656 = vpop.permute.xlu0 %1655
        %1659 = vset.pattern.permute.xlu0 0
        %1660 = vperm.xlu0 %1659, %v1626
        %v1661 = vpop.permute.xlu0 %1660
        %1664 = vset.pattern.permute.xlu0 0
        %1665 = vperm.xlu0 %1664, %v1627
        %v1666 = vpop.permute.xlu0 %1665
        %1669 = vset.pattern.permute.xlu0 0
        %1670 = vperm.xlu0 %1669, %v1628
        %v1671 = vpop.permute.xlu0 %1670
        %1674 = vset.pattern.permute.xlu0 0
        %1675 = vperm.xlu0 %1674, %v1629
        %v1676 = vpop.permute.xlu0 %1675
        %1679 = vset.pattern.permute.xlu0 0
        %1680 = vperm.xlu0 %1679, %v1630
        %v1681 = vpop.permute.xlu0 %1680
        %1684 = vset.pattern.permute.xlu0 0
        %1685 = vperm.xlu0 %1684, %v1631
        %v1686 = vpop.permute.xlu0 %1685
        %1689 = vset.pattern.permute.xlu0 0
        %1690 = vperm.xlu0 %1689, %v1632
        %v1691 = vpop.permute.xlu0 %1690
        %1694 = vset.pattern.permute.xlu0 0
        %1695 = vperm.xlu0 %1694, %v1633
        %v1696 = vpop.permute.xlu0 %1695
        %1699 = vset.pattern.permute.xlu0 0
        %1700 = vperm.xlu0 %1699, %v1634
        %v1701 = vpop.permute.xlu0 %1700
        %1704 = vset.pattern.permute.xlu0 0
        %1705 = vperm.xlu0 %1704, %v1635
        %v1706 = vpop.permute.xlu0 %1705
        %1709 = vset.pattern.permute.xlu0 0
        %1710 = vperm.xlu0 %1709, %v1636
        %v1711 = vpop.permute.xlu0 %1710
        %1714 = vset.pattern.permute.xlu0 0
        %1715 = vperm.xlu0 %1714, %v1637
        %v1716 = vpop.permute.xlu0 %1715
        %v1718 = vmul.f32 %v1333, %v1641
        %v1719 = vmul.f32 %v1334, %v1646
        %v1720 = vmul.f32 %v1335, %v1651
        %v1721 = vmul.f32 %v1336, %v1656
        %v1722 = vmul.f32 %v1337, %v1661
        %v1723 = vmul.f32 %v1338, %v1666
        %v1724 = vmul.f32 %v1339, %v1671
        %v1725 = vmul.f32 %v1340, %v1676
        %v1726 = vmul.f32 %v1341, %v1681
        %v1727 = vmul.f32 %v1342, %v1686
        %v1728 = vmul.f32 %v1343, %v1691
        %v1729 = vmul.f32 %v1344, %v1696
        %v1730 = vmul.f32 %v1345, %v1701
        %v1731 = vmul.f32 %v1346, %v1706
        %v1732 = vmul.f32 %v1347, %v1711
        %v1733 = vmul.f32 %v1348, %v1716
        %vm1734 = vcmask 326912
        %v1735 = vsel %vm1734, %v1718, 0.0
        %v1736 = vsel %vm1734, %v1720, 0.0
        %v1737 = vadd.f32 %v1735, %v1736
        %v1738 = vsel %vm1734, %v1722, 0.0
        %v1739 = vadd.f32 %v1737, %v1738
        %v1740 = vsel %vm1734, %v1724, 0.0
        %v1741 = vadd.f32 %v1739, %v1740
        %v1742 = vsel %vm1734, %v1726, 0.0
        %v1743 = vadd.f32 %v1741, %v1742
        %v1744 = vsel %vm1734, %v1728, 0.0
        %v1745 = vadd.f32 %v1743, %v1744
        %v1746 = vsel %vm1734, %v1730, 0.0
        %v1747 = vadd.f32 %v1745, %v1746
        %v1748 = vsel %vm1734, %v1732, 0.0
        %v1749 = vadd.f32 %v1747, %v1748
        %v1750 = vsel %vm1734, %v1719, 0.0
        %v1751 = vsel %vm1734, %v1721, 0.0
        %v1752 = vadd.f32 %v1750, %v1751
        %v1753 = vsel %vm1734, %v1723, 0.0
        %v1754 = vadd.f32 %v1752, %v1753
        %v1755 = vsel %vm1734, %v1725, 0.0
        %v1756 = vadd.f32 %v1754, %v1755
        %v1757 = vsel %vm1734, %v1727, 0.0
        %v1758 = vadd.f32 %v1756, %v1757
        %v1759 = vsel %vm1734, %v1729, 0.0
        %v1760 = vadd.f32 %v1758, %v1759
        %v1761 = vsel %vm1734, %v1731, 0.0
        %v1762 = vadd.f32 %v1760, %v1761
        %v1763 = vsel %vm1734, %v1733, 0.0
        %v1764 = vadd.f32 %v1762, %v1763
        %1765 = vset.pattern.permute.xlu0 1
        %1766 = vperm.xlu0 %1765, %v1622
        %v1767 = vpop.permute.xlu0 %1766
        %1769 = vset.pattern.permute.xlu0 1
        %1770 = vperm.xlu0 %1769, %v1623
        %v1771 = vpop.permute.xlu0 %1770
        %1773 = vset.pattern.permute.xlu0 1
        %1774 = vperm.xlu0 %1773, %v1624
        %v1775 = vpop.permute.xlu0 %1774
        %1777 = vset.pattern.permute.xlu0 1
        %1778 = vperm.xlu0 %1777, %v1625
        %v1779 = vpop.permute.xlu0 %1778
        %1781 = vset.pattern.permute.xlu0 1
        %1782 = vperm.xlu0 %1781, %v1626
        %v1783 = vpop.permute.xlu0 %1782
        %1785 = vset.pattern.permute.xlu0 1
        %1786 = vperm.xlu0 %1785, %v1627
        %v1787 = vpop.permute.xlu0 %1786
        %1789 = vset.pattern.permute.xlu0 1
        %1790 = vperm.xlu0 %1789, %v1628
        %v1791 = vpop.permute.xlu0 %1790
        %1793 = vset.pattern.permute.xlu0 1
        %1794 = vperm.xlu0 %1793, %v1629
        %v1795 = vpop.permute.xlu0 %1794
        %1797 = vset.pattern.permute.xlu0 1
        %1798 = vperm.xlu0 %1797, %v1630
        %v1799 = vpop.permute.xlu0 %1798
        %1801 = vset.pattern.permute.xlu0 1
        %1802 = vperm.xlu0 %1801, %v1631
        %v1803 = vpop.permute.xlu0 %1802
        %1805 = vset.pattern.permute.xlu0 1
        %1806 = vperm.xlu0 %1805, %v1632
        %v1807 = vpop.permute.xlu0 %1806
        %1809 = vset.pattern.permute.xlu0 1
        %1810 = vperm.xlu0 %1809, %v1633
        %v1811 = vpop.permute.xlu0 %1810
        %1813 = vset.pattern.permute.xlu0 1
        %1814 = vperm.xlu0 %1813, %v1634
        %v1815 = vpop.permute.xlu0 %1814
        %1817 = vset.pattern.permute.xlu0 1
        %1818 = vperm.xlu0 %1817, %v1635
        %v1819 = vpop.permute.xlu0 %1818
        %1821 = vset.pattern.permute.xlu0 1
        %1822 = vperm.xlu0 %1821, %v1636
        %v1823 = vpop.permute.xlu0 %1822
        %1825 = vset.pattern.permute.xlu0 1
        %1826 = vperm.xlu0 %1825, %v1637
        %v1827 = vpop.permute.xlu0 %1826
        %v1829 = vmul.f32 %v1333, %v1767
        %v1830 = vmul.f32 %v1334, %v1771
        %v1831 = vmul.f32 %v1335, %v1775
        %v1832 = vmul.f32 %v1336, %v1779
        %v1833 = vmul.f32 %v1337, %v1783
        %v1834 = vmul.f32 %v1338, %v1787
        %v1835 = vmul.f32 %v1339, %v1791
        %v1836 = vmul.f32 %v1340, %v1795
        %v1837 = vmul.f32 %v1341, %v1799
        %v1838 = vmul.f32 %v1342, %v1803
        %v1839 = vmul.f32 %v1343, %v1807
        %v1840 = vmul.f32 %v1344, %v1811
        %v1841 = vmul.f32 %v1345, %v1815
        %v1842 = vmul.f32 %v1346, %v1819
        %v1843 = vmul.f32 %v1347, %v1823
        %v1844 = vmul.f32 %v1348, %v1827
        %vm1845 = vcmask 392512
        %v1846 = vsel %vm1845, %v1829, 0.0
        %v1847 = vsel %vm1845, %v1831, 0.0
        %v1848 = vadd.f32 %v1846, %v1847
        %v1849 = vsel %vm1845, %v1833, 0.0
        %v1850 = vadd.f32 %v1848, %v1849
        %v1851 = vsel %vm1845, %v1835, 0.0
        %v1852 = vadd.f32 %v1850, %v1851
        %v1853 = vsel %vm1845, %v1837, 0.0
        %v1854 = vadd.f32 %v1852, %v1853
        %v1855 = vsel %vm1845, %v1839, 0.0
        %v1856 = vadd.f32 %v1854, %v1855
        %v1857 = vsel %vm1845, %v1841, 0.0
        %v1858 = vadd.f32 %v1856, %v1857
        %v1859 = vsel %vm1845, %v1843, 0.0
        %v1860 = vadd.f32 %v1858, %v1859
        %v1861 = vsel %vm1845, %v1830, 0.0
        %v1862 = vsel %vm1845, %v1832, 0.0
        %v1863 = vadd.f32 %v1861, %v1862
        %v1864 = vsel %vm1845, %v1834, 0.0
        %v1865 = vadd.f32 %v1863, %v1864
        %v1866 = vsel %vm1845, %v1836, 0.0
        %v1867 = vadd.f32 %v1865, %v1866
        %v1868 = vsel %vm1845, %v1838, 0.0
        %v1869 = vadd.f32 %v1867, %v1868
        %v1870 = vsel %vm1845, %v1840, 0.0
        %v1871 = vadd.f32 %v1869, %v1870
        %v1872 = vsel %vm1845, %v1842, 0.0
        %v1873 = vadd.f32 %v1871, %v1872
        %v1874 = vsel %vm1845, %v1844, 0.0
        %v1875 = vadd.f32 %v1873, %v1874
        %1876 = vset.pattern.permute.xlu0 2
        %1877 = vperm.xlu0 %1876, %v1622
        %v1878 = vpop.permute.xlu0 %1877
        %1880 = vset.pattern.permute.xlu0 2
        %1881 = vperm.xlu0 %1880, %v1623
        %v1882 = vpop.permute.xlu0 %1881
        %1884 = vset.pattern.permute.xlu0 2
        %1885 = vperm.xlu0 %1884, %v1624
        %v1886 = vpop.permute.xlu0 %1885
        %1888 = vset.pattern.permute.xlu0 2
        %1889 = vperm.xlu0 %1888, %v1625
        %v1890 = vpop.permute.xlu0 %1889
        %1892 = vset.pattern.permute.xlu0 2
        %1893 = vperm.xlu0 %1892, %v1626
        %v1894 = vpop.permute.xlu0 %1893
        %1896 = vset.pattern.permute.xlu0 2
        %1897 = vperm.xlu0 %1896, %v1627
        %v1898 = vpop.permute.xlu0 %1897
        %1900 = vset.pattern.permute.xlu0 2
        %1901 = vperm.xlu0 %1900, %v1628
        %v1902 = vpop.permute.xlu0 %1901
        %1904 = vset.pattern.permute.xlu0 2
        %1905 = vperm.xlu0 %1904, %v1629
        %v1906 = vpop.permute.xlu0 %1905
        %1908 = vset.pattern.permute.xlu0 2
        %1909 = vperm.xlu0 %1908, %v1630
        %v1910 = vpop.permute.xlu0 %1909
        %1912 = vset.pattern.permute.xlu0 2
        %1913 = vperm.xlu0 %1912, %v1631
        %v1914 = vpop.permute.xlu0 %1913
        %1916 = vset.pattern.permute.xlu0 2
        %1917 = vperm.xlu0 %1916, %v1632
        %v1918 = vpop.permute.xlu0 %1917
        %1920 = vset.pattern.permute.xlu0 2
        %1921 = vperm.xlu0 %1920, %v1633
        %v1922 = vpop.permute.xlu0 %1921
        %1924 = vset.pattern.permute.xlu0 2
        %1925 = vperm.xlu0 %1924, %v1634
        %v1926 = vpop.permute.xlu0 %1925
        %1928 = vset.pattern.permute.xlu0 2
        %1929 = vperm.xlu0 %1928, %v1635
        %v1930 = vpop.permute.xlu0 %1929
        %1932 = vset.pattern.permute.xlu0 2
        %1933 = vperm.xlu0 %1932, %v1636
        %v1934 = vpop.permute.xlu0 %1933
        %1936 = vset.pattern.permute.xlu0 2
        %1937 = vperm.xlu0 %1936, %v1637
        %v1938 = vpop.permute.xlu0 %1937
        %v1940 = vmul.f32 %v1333, %v1878
        %v1941 = vmul.f32 %v1334, %v1882
        %v1942 = vmul.f32 %v1335, %v1886
        %v1943 = vmul.f32 %v1336, %v1890
        %v1944 = vmul.f32 %v1337, %v1894
        %v1945 = vmul.f32 %v1338, %v1898
        %v1946 = vmul.f32 %v1339, %v1902
        %v1947 = vmul.f32 %v1340, %v1906
        %v1948 = vmul.f32 %v1341, %v1910
        %v1949 = vmul.f32 %v1342, %v1914
        %v1950 = vmul.f32 %v1343, %v1918
        %v1951 = vmul.f32 %v1344, %v1922
        %v1952 = vmul.f32 %v1345, %v1926
        %v1953 = vmul.f32 %v1346, %v1930
        %v1954 = vmul.f32 %v1347, %v1934
        %v1955 = vmul.f32 %v1348, %v1938
        %vm1956 = vcmask 458112
        %v1957 = vsel %vm1956, %v1940, 0.0
        %v1958 = vsel %vm1956, %v1942, 0.0
        %v1959 = vadd.f32 %v1957, %v1958
        %v1960 = vsel %vm1956, %v1944, 0.0
        %v1961 = vadd.f32 %v1959, %v1960
        %v1962 = vsel %vm1956, %v1946, 0.0
        %v1963 = vadd.f32 %v1961, %v1962
        %v1964 = vsel %vm1956, %v1948, 0.0
        %v1965 = vadd.f32 %v1963, %v1964
        %v1966 = vsel %vm1956, %v1950, 0.0
        %v1967 = vadd.f32 %v1965, %v1966
        %v1968 = vsel %vm1956, %v1952, 0.0
        %v1969 = vadd.f32 %v1967, %v1968
        %v1970 = vsel %vm1956, %v1954, 0.0
        %v1971 = vadd.f32 %v1969, %v1970
        %v1972 = vsel %vm1956, %v1941, 0.0
        %v1973 = vsel %vm1956, %v1943, 0.0
        %v1974 = vadd.f32 %v1972, %v1973
        %v1975 = vsel %vm1956, %v1945, 0.0
        %v1976 = vadd.f32 %v1974, %v1975
        %v1977 = vsel %vm1956, %v1947, 0.0
        %v1978 = vadd.f32 %v1976, %v1977
        %v1979 = vsel %vm1956, %v1949, 0.0
        %v1980 = vadd.f32 %v1978, %v1979
        %v1981 = vsel %vm1956, %v1951, 0.0
        %v1982 = vadd.f32 %v1980, %v1981
        %v1983 = vsel %vm1956, %v1953, 0.0
        %v1984 = vadd.f32 %v1982, %v1983
        %v1985 = vsel %vm1956, %v1955, 0.0
        %v1986 = vadd.f32 %v1984, %v1985
        %1987 = vset.pattern.permute.xlu0 3
        %1988 = vperm.xlu0 %1987, %v1622
        %v1989 = vpop.permute.xlu0 %1988
        %1991 = vset.pattern.permute.xlu0 3
        %1992 = vperm.xlu0 %1991, %v1623
        %v1993 = vpop.permute.xlu0 %1992
        %1995 = vset.pattern.permute.xlu0 3
        %1996 = vperm.xlu0 %1995, %v1624
        %v1997 = vpop.permute.xlu0 %1996
        %1999 = vset.pattern.permute.xlu0 3
        %2000 = vperm.xlu0 %1999, %v1625
        %v2001 = vpop.permute.xlu0 %2000
        %2003 = vset.pattern.permute.xlu0 3
        %2004 = vperm.xlu0 %2003, %v1626
        %v2005 = vpop.permute.xlu0 %2004
        %2007 = vset.pattern.permute.xlu0 3
        %2008 = vperm.xlu0 %2007, %v1627
        %v2009 = vpop.permute.xlu0 %2008
        %2011 = vset.pattern.permute.xlu0 3
        %2012 = vperm.xlu0 %2011, %v1628
        %v2013 = vpop.permute.xlu0 %2012
        %2015 = vset.pattern.permute.xlu0 3
        %2016 = vperm.xlu0 %2015, %v1629
        %v2017 = vpop.permute.xlu0 %2016
        %2019 = vset.pattern.permute.xlu0 3
        %2020 = vperm.xlu0 %2019, %v1630
        %v2021 = vpop.permute.xlu0 %2020
        %2023 = vset.pattern.permute.xlu0 3
        %2024 = vperm.xlu0 %2023, %v1631
        %v2025 = vpop.permute.xlu0 %2024
        %2027 = vset.pattern.permute.xlu0 3
        %2028 = vperm.xlu0 %2027, %v1632
        %v2029 = vpop.permute.xlu0 %2028
        %2031 = vset.pattern.permute.xlu0 3
        %2032 = vperm.xlu0 %2031, %v1633
        %v2033 = vpop.permute.xlu0 %2032
        %2035 = vset.pattern.permute.xlu0 3
        %2036 = vperm.xlu0 %2035, %v1634
        %v2037 = vpop.permute.xlu0 %2036
        %2039 = vset.pattern.permute.xlu0 3
        %2040 = vperm.xlu0 %2039, %v1635
        %v2041 = vpop.permute.xlu0 %2040
        %2043 = vset.pattern.permute.xlu0 3
        %2044 = vperm.xlu0 %2043, %v1636
        %v2045 = vpop.permute.xlu0 %2044
        %2047 = vset.pattern.permute.xlu0 3
        %2048 = vperm.xlu0 %2047, %v1637
        %v2049 = vpop.permute.xlu0 %2048
        %v2051 = vmul.f32 %v1333, %v1989
        %v2052 = vmul.f32 %v1334, %v1993
        %v2053 = vmul.f32 %v1335, %v1997
        %v2054 = vmul.f32 %v1336, %v2001
        %v2055 = vmul.f32 %v1337, %v2005
        %v2056 = vmul.f32 %v1338, %v2009
        %v2057 = vmul.f32 %v1339, %v2013
        %v2058 = vmul.f32 %v1340, %v2017
        %v2059 = vmul.f32 %v1341, %v2021
        %v2060 = vmul.f32 %v1342, %v2025
        %v2061 = vmul.f32 %v1343, %v2029
        %v2062 = vmul.f32 %v1344, %v2033
        %v2063 = vmul.f32 %v1345, %v2037
        %v2064 = vmul.f32 %v1346, %v2041
        %v2065 = vmul.f32 %v1347, %v2045
        %v2066 = vmul.f32 %v1348, %v2049
        %vm2067 = vcmask 523712
        %v2068 = vsel %vm2067, %v2051, 0.0
        %v2069 = vsel %vm2067, %v2053, 0.0
        %v2070 = vadd.f32 %v2068, %v2069
        %v2071 = vsel %vm2067, %v2055, 0.0
        %v2072 = vadd.f32 %v2070, %v2071
        %v2073 = vsel %vm2067, %v2057, 0.0
        %v2074 = vadd.f32 %v2072, %v2073
        %v2075 = vsel %vm2067, %v2059, 0.0
        %v2076 = vadd.f32 %v2074, %v2075
        %v2077 = vsel %vm2067, %v2061, 0.0
        %v2078 = vadd.f32 %v2076, %v2077
        %v2079 = vsel %vm2067, %v2063, 0.0
        %v2080 = vadd.f32 %v2078, %v2079
        %v2081 = vsel %vm2067, %v2065, 0.0
        %v2082 = vadd.f32 %v2080, %v2081
        %v2083 = vsel %vm2067, %v2052, 0.0
        %v2084 = vsel %vm2067, %v2054, 0.0
        %v2085 = vadd.f32 %v2083, %v2084
        %v2086 = vsel %vm2067, %v2056, 0.0
        %v2087 = vadd.f32 %v2085, %v2086
        %v2088 = vsel %vm2067, %v2058, 0.0
        %v2089 = vadd.f32 %v2087, %v2088
        %v2090 = vsel %vm2067, %v2060, 0.0
        %v2091 = vadd.f32 %v2089, %v2090
        %v2092 = vsel %vm2067, %v2062, 0.0
        %v2093 = vadd.f32 %v2091, %v2092
        %v2094 = vsel %vm2067, %v2064, 0.0
        %v2095 = vadd.f32 %v2093, %v2094
        %v2096 = vsel %vm2067, %v2066, 0.0
        %v2097 = vadd.f32 %v2095, %v2096
        %2100 = vrot.lane.b32.xlu0 %v1749, 96
        %v2101 = vpop.permute.xlu0 %2100
        %2102 = vrot.lane.b32.xlu0 %v1764, 96
        %v2103 = vpop.permute.xlu0 %2102
        %2108 = vrot.lane.b32.xlu0 %v1860, 96
        %v2109 = vpop.permute.xlu0 %2108
        %2110 = vrot.lane.b32.xlu0 %v1875, 96
        %v2111 = vpop.permute.xlu0 %2110
        %2116 = vrot.lane.b32.xlu0 %v1971, 96
        %v2117 = vpop.permute.xlu0 %2116
        %2118 = vrot.lane.b32.xlu0 %v1986, 96
        %v2119 = vpop.permute.xlu0 %2118
        %2124 = vrot.lane.b32.xlu0 %v2082, 96
        %v2125 = vpop.permute.xlu0 %2124
        %2126 = vrot.lane.b32.xlu0 %v2097, 96
        %v2127 = vpop.permute.xlu0 %2126
        %v2130 = vsel %vm953, %v2101, %v2109
        %v2131 = vsel %vm953, %v2103, %v2111
        %v2132 = vsel %vm1319, %v2130, %v2117
        %v2133 = vsel %vm1319, %v2131, %v2119
        %v2134 = vsel %vm1322, %v2132, %v2125
        %v2135 = vsel %vm1322, %v2133, %v2127
        %v2136 = vmul.f32 %v2134, %v667
        %v2137 = vmul.f32 %v2135, %v670
        %v2138 = vmul.f32 %v2134, %v673
        %v2139 = vmul.f32 %v2135, %v676
        %v2140 = vmul.f32 %v2134, %v679
        %v2141 = vmul.f32 %v2135, %v682
        %v2142 = vmul.f32 %v2134, %v685
        %v2143 = vmul.f32 %v2135, %v688
        %v2144 = vmul.f32 %v2134, %v691
        %v2145 = vmul.f32 %v2135, %v694
        %v2146 = vmul.f32 %v2134, %v697
        %v2147 = vmul.f32 %v2135, %v700
        %v2148 = vmul.f32 %v2134, %v703
        %v2149 = vmul.f32 %v2135, %v706
        %v2150 = vmul.f32 %v2134, %v709
        %v2151 = vmul.f32 %v2135, %v712
        %v2152 = vperm.slane %v404, 0
        %v2154 = vsel %vm600, %v2136, 0
        %v2157 = vsel %vm600, %v2137, 0
        %v2160 = vsel %vm600, %v2138, 0
        %v2163 = vsel %vm600, %v2139, 0
        %v2166 = vsel %vm600, %v2140, 0
        %v2169 = vsel %vm600, %v2141, 0
        %v2172 = vsel %vm600, %v2142, 0
        %v2175 = vsel %vm600, %v2143, 0
        %v2178 = vsel %vm600, %v2144, 0
        %v2181 = vsel %vm600, %v2145, 0
        %v2184 = vsel %vm600, %v2146, 0
        %v2187 = vsel %vm600, %v2147, 0
        %v2190 = vsel %vm600, %v2148, 0
        %v2193 = vsel %vm600, %v2149, 0
        %v2196 = vsel %vm600, %v2150, 0
        %v2199 = vsel %vm600, %v2151, 0
        %2201 = vmatpush.msra.mxu0 0.0
        %2202 = vmatpush.msra.mxu0 0.0
        %2203 = vmatpush.msra.mxu0 0.0
        %2204 = vmatpush.msra.mxu0 0.0
        %2205 = vmatpush.msra.mxu0 0.0
        %2206 = vmatpush.msra.mxu0 0.0
        %2207 = vmatpush.msra.mxu0 0.0
        %2208 = vmatpush.msra.mxu0 0.0
        %2209 = vmatpush.msra.mxu0 0.0
        %2210 = vmatpush.msra.mxu0 0.0
        %2211 = vmatpush.msra.mxu0 0.0
        %2212 = vmatpush.msra.mxu0 0.0
        %2213 = vmatpush.msra.mxu0 %v397
        %2214 = vmatpush.msra.mxu0 %v396
        %2215 = vmatpush.msra.mxu0 %v395
        %2216 = vmatpush.msra.mxu0 %v394
        %2217 = vmatmul.f32.gmra.mxu0 %v2154
        %v2218 = vpop.f32.mrf.mxu0
        %v2219 = vadd.f32 %v2152, %v2218
        %2220 = vmatmul.f32.gmra.mxu0 %v2157
        %v2221 = vpop.f32.mrf.mxu0
        %v2222 = vadd.f32 %v2152, %v2221
        %2223 = vmatmul.f32.gmra.mxu0 %v2160
        %v2224 = vpop.f32.mrf.mxu0
        %v2225 = vadd.f32 %v2152, %v2224
        %2226 = vmatmul.f32.gmra.mxu0 %v2163
        %v2227 = vpop.f32.mrf.mxu0
        %v2228 = vadd.f32 %v2152, %v2227
        %2229 = vmatmul.f32.gmra.mxu0 %v2166
        %v2230 = vpop.f32.mrf.mxu0
        %v2231 = vadd.f32 %v2152, %v2230
        %2232 = vmatmul.f32.gmra.mxu0 %v2169
        %v2233 = vpop.f32.mrf.mxu0
        %v2234 = vadd.f32 %v2152, %v2233
        %2235 = vmatmul.f32.gmra.mxu0 %v2172
        %v2236 = vpop.f32.mrf.mxu0
        %v2237 = vadd.f32 %v2152, %v2236
        %2238 = vmatmul.f32.gmra.mxu0 %v2175
        %v2239 = vpop.f32.mrf.mxu0
        %v2240 = vadd.f32 %v2152, %v2239
        %2241 = vmatmul.f32.gmra.mxu0 %v2178
        %v2242 = vpop.f32.mrf.mxu0
        %v2243 = vadd.f32 %v2152, %v2242
        %2244 = vmatmul.f32.gmra.mxu0 %v2181
        %v2245 = vpop.f32.mrf.mxu0
        %v2246 = vadd.f32 %v2152, %v2245
        %2247 = vmatmul.f32.gmra.mxu0 %v2184
        %v2248 = vpop.f32.mrf.mxu0
        %v2249 = vadd.f32 %v2152, %v2248
        %2250 = vmatmul.f32.gmra.mxu0 %v2187
        %v2251 = vpop.f32.mrf.mxu0
        %v2252 = vadd.f32 %v2152, %v2251
        %2253 = vmatmul.f32.gmra.mxu0 %v2190
        %v2254 = vpop.f32.mrf.mxu0
        %v2255 = vadd.f32 %v2152, %v2254
        %2256 = vmatmul.f32.gmra.mxu0 %v2193
        %v2257 = vpop.f32.mrf.mxu0
        %v2258 = vadd.f32 %v2152, %v2257
        %2259 = vmatmul.f32.gmra.mxu0 %v2196
        %v2260 = vpop.f32.mrf.mxu0
        %v2261 = vadd.f32 %v2152, %v2260
        %2262 = vmatmul.f32.gmra.mxu0 %v2199
        %v2263 = vpop.f32.mrf.mxu0
        %v2264 = vadd.f32 %v2152, %v2263
        %2265 = vdwg.mxu0
        %v2266 = vadd.f32 %v2219, %v667
        %v2267 = vadd.f32 %v2222, %v670
        %v2268 = vadd.f32 %v2225, %v673
        %v2269 = vadd.f32 %v2228, %v676
        %v2270 = vadd.f32 %v2231, %v679
        %v2271 = vadd.f32 %v2234, %v682
        %v2272 = vadd.f32 %v2237, %v685
        %v2273 = vadd.f32 %v2240, %v688
        %v2274 = vadd.f32 %v2243, %v691
        %v2275 = vadd.f32 %v2246, %v694
        %v2276 = vadd.f32 %v2249, %v697
        %v2277 = vadd.f32 %v2252, %v700
        %v2278 = vadd.f32 %v2255, %v703
        %v2279 = vadd.f32 %v2258, %v706
        %v2280 = vadd.f32 %v2261, %v709
        %v2281 = vadd.f32 %v2264, %v712
        %v2282 = vsel %vm600, %v2266, 0.0
        %2283 = vadd.xlane.f32.xlu0 %v2282
        %v2284 = vpop.xlane.xlu0 %2283
        %v2285 = vsel %vm600, %v2267, 0.0
        %2286 = vadd.xlane.f32.xlu0 %v2285
        %v2287 = vpop.xlane.xlu0 %2286
        %v2288 = vsel %vm600, %v2268, 0.0
        %2289 = vadd.xlane.f32.xlu0 %v2288
        %v2290 = vpop.xlane.xlu0 %2289
        %v2291 = vsel %vm600, %v2269, 0.0
        %2292 = vadd.xlane.f32.xlu0 %v2291
        %v2293 = vpop.xlane.xlu0 %2292
        %v2294 = vsel %vm600, %v2270, 0.0
        %2295 = vadd.xlane.f32.xlu0 %v2294
        %v2296 = vpop.xlane.xlu0 %2295
        %v2297 = vsel %vm600, %v2271, 0.0
        %2298 = vadd.xlane.f32.xlu0 %v2297
        %v2299 = vpop.xlane.xlu0 %2298
        %v2300 = vsel %vm600, %v2272, 0.0
        %2301 = vadd.xlane.f32.xlu0 %v2300
        %v2302 = vpop.xlane.xlu0 %2301
        %v2303 = vsel %vm600, %v2273, 0.0
        %2304 = vadd.xlane.f32.xlu0 %v2303
        %v2305 = vpop.xlane.xlu0 %2304
        %v2306 = vsel %vm600, %v2274, 0.0
        %2307 = vadd.xlane.f32.xlu0 %v2306
        %v2308 = vpop.xlane.xlu0 %2307
        %v2309 = vsel %vm600, %v2275, 0.0
        %2310 = vadd.xlane.f32.xlu0 %v2309
        %v2311 = vpop.xlane.xlu0 %2310
        %v2312 = vsel %vm600, %v2276, 0.0
        %2313 = vadd.xlane.f32.xlu0 %v2312
        %v2314 = vpop.xlane.xlu0 %2313
        %v2315 = vsel %vm600, %v2277, 0.0
        %2316 = vadd.xlane.f32.xlu0 %v2315
        %v2317 = vpop.xlane.xlu0 %2316
        %v2318 = vsel %vm600, %v2278, 0.0
        %2319 = vadd.xlane.f32.xlu0 %v2318
        %v2320 = vpop.xlane.xlu0 %2319
        %v2321 = vsel %vm600, %v2279, 0.0
        %2322 = vadd.xlane.f32.xlu0 %v2321
        %v2323 = vpop.xlane.xlu0 %2322
        %v2324 = vsel %vm600, %v2280, 0.0
        %2325 = vadd.xlane.f32.xlu0 %v2324
        %v2326 = vpop.xlane.xlu0 %2325
        %v2327 = vsel %vm600, %v2281, 0.0
        %2328 = vadd.xlane.f32.xlu0 %v2327
        %v2329 = vpop.xlane.xlu0 %2328
        %v2330 = vrcp.pop 32.0
        %v2331 = vmul.f32 32.0, %v2330
        %v2332 = vsub.f32 1.0, %v2331
        %v2333 = vmul.f32 %v2330, %v2332
        %v2334 = vadd.f32 %v2330, %v2333
        %vm2335 = vweird.f32 %v2330
        %v2336 = vsel %vm2335, %v2330, %v2334
        %v2337 = vmul.f32 %v2284, %v2336
        %v2338 = vmul.f32 %v2287, %v2336
        %v2339 = vmul.f32 %v2290, %v2336
        %v2340 = vmul.f32 %v2293, %v2336
        %v2341 = vmul.f32 %v2296, %v2336
        %v2342 = vmul.f32 %v2299, %v2336
        %v2343 = vmul.f32 %v2302, %v2336
        %v2344 = vmul.f32 %v2305, %v2336
        %v2345 = vmul.f32 %v2308, %v2336
        %v2346 = vmul.f32 %v2311, %v2336
        %v2347 = vmul.f32 %v2314, %v2336
        %v2348 = vmul.f32 %v2317, %v2336
        %v2349 = vmul.f32 %v2320, %v2336
        %v2350 = vmul.f32 %v2323, %v2336
        %v2351 = vmul.f32 %v2326, %v2336
        %v2352 = vmul.f32 %v2329, %v2336
        %v2353 = vsub.f32 %v2266, %v2337
        %v2354 = vsub.f32 %v2267, %v2338
        %v2355 = vsub.f32 %v2268, %v2339
        %v2356 = vsub.f32 %v2269, %v2340
        %v2357 = vsub.f32 %v2270, %v2341
        %v2358 = vsub.f32 %v2271, %v2342
        %v2359 = vsub.f32 %v2272, %v2343
        %v2360 = vsub.f32 %v2273, %v2344
        %v2361 = vsub.f32 %v2274, %v2345
        %v2362 = vsub.f32 %v2275, %v2346
        %v2363 = vsub.f32 %v2276, %v2347
        %v2364 = vsub.f32 %v2277, %v2348
        %v2365 = vsub.f32 %v2278, %v2349
        %v2366 = vsub.f32 %v2279, %v2350
        %v2367 = vsub.f32 %v2280, %v2351
        %v2368 = vsub.f32 %v2281, %v2352
        %v2369 = vmul.f32 %v2353, %v2353
        %v2370 = vmul.f32 %v2354, %v2354
        %v2371 = vmul.f32 %v2355, %v2355
        %v2372 = vmul.f32 %v2356, %v2356
        %v2373 = vmul.f32 %v2357, %v2357
        %v2374 = vmul.f32 %v2358, %v2358
        %v2375 = vmul.f32 %v2359, %v2359
        %v2376 = vmul.f32 %v2360, %v2360
        %v2377 = vmul.f32 %v2361, %v2361
        %v2378 = vmul.f32 %v2362, %v2362
        %v2379 = vmul.f32 %v2363, %v2363
        %v2380 = vmul.f32 %v2364, %v2364
        %v2381 = vmul.f32 %v2365, %v2365
        %v2382 = vmul.f32 %v2366, %v2366
        %v2383 = vmul.f32 %v2367, %v2367
        %v2384 = vmul.f32 %v2368, %v2368
        %v2385 = vsel %vm600, %v2369, 0.0
        %2386 = vadd.xlane.f32.xlu0 %v2385
        %v2387 = vpop.xlane.xlu0 %2386
        %v2388 = vsel %vm600, %v2370, 0.0
        %2389 = vadd.xlane.f32.xlu0 %v2388
        %v2390 = vpop.xlane.xlu0 %2389
        %v2391 = vsel %vm600, %v2371, 0.0
        %2392 = vadd.xlane.f32.xlu0 %v2391
        %v2393 = vpop.xlane.xlu0 %2392
        %v2394 = vsel %vm600, %v2372, 0.0
        %2395 = vadd.xlane.f32.xlu0 %v2394
        %v2396 = vpop.xlane.xlu0 %2395
        %v2397 = vsel %vm600, %v2373, 0.0
        %2398 = vadd.xlane.f32.xlu0 %v2397
        %v2399 = vpop.xlane.xlu0 %2398
        %v2400 = vsel %vm600, %v2374, 0.0
        %2401 = vadd.xlane.f32.xlu0 %v2400
        %v2402 = vpop.xlane.xlu0 %2401
        %v2403 = vsel %vm600, %v2375, 0.0
        %2404 = vadd.xlane.f32.xlu0 %v2403
        %v2405 = vpop.xlane.xlu0 %2404
        %v2406 = vsel %vm600, %v2376, 0.0
        %2407 = vadd.xlane.f32.xlu0 %v2406
        %v2408 = vpop.xlane.xlu0 %2407
        %v2409 = vsel %vm600, %v2377, 0.0
        %2410 = vadd.xlane.f32.xlu0 %v2409
        %v2411 = vpop.xlane.xlu0 %2410
        %v2412 = vsel %vm600, %v2378, 0.0
        %2413 = vadd.xlane.f32.xlu0 %v2412
        %v2414 = vpop.xlane.xlu0 %2413
        %v2415 = vsel %vm600, %v2379, 0.0
        %2416 = vadd.xlane.f32.xlu0 %v2415
        %v2417 = vpop.xlane.xlu0 %2416
        %v2418 = vsel %vm600, %v2380, 0.0
        %2419 = vadd.xlane.f32.xlu0 %v2418
        %v2420 = vpop.xlane.xlu0 %2419
        %v2421 = vsel %vm600, %v2381, 0.0
        %2422 = vadd.xlane.f32.xlu0 %v2421
        %v2423 = vpop.xlane.xlu0 %2422
        %v2424 = vsel %vm600, %v2382, 0.0
        %2425 = vadd.xlane.f32.xlu0 %v2424
        %v2426 = vpop.xlane.xlu0 %2425
        %v2427 = vsel %vm600, %v2383, 0.0
        %2428 = vadd.xlane.f32.xlu0 %v2427
        %v2429 = vpop.xlane.xlu0 %2428
        %v2430 = vsel %vm600, %v2384, 0.0
        %2431 = vadd.xlane.f32.xlu0 %v2430
        %v2432 = vpop.xlane.xlu0 %2431
        %v2433 = vmul.f32 %v2387, %v2336
        %v2434 = vmul.f32 %v2390, %v2336
        %v2435 = vmul.f32 %v2393, %v2336
        %v2436 = vmul.f32 %v2396, %v2336
        %v2437 = vmul.f32 %v2399, %v2336
        %v2438 = vmul.f32 %v2402, %v2336
        %v2439 = vmul.f32 %v2405, %v2336
        %v2440 = vmul.f32 %v2408, %v2336
        %v2441 = vmul.f32 %v2411, %v2336
        %v2442 = vmul.f32 %v2414, %v2336
        %v2443 = vmul.f32 %v2417, %v2336
        %v2444 = vmul.f32 %v2420, %v2336
        %v2445 = vmul.f32 %v2423, %v2336
        %v2446 = vmul.f32 %v2426, %v2336
        %v2447 = vmul.f32 %v2429, %v2336
        %v2448 = vmul.f32 %v2432, %v2336
        %v2449 = vadd.f32 %v2433, 1e-05
        %v2450 = vadd.f32 %v2434, 1e-05
        %v2451 = vadd.f32 %v2435, 1e-05
        %v2452 = vadd.f32 %v2436, 1e-05
        %v2453 = vadd.f32 %v2437, 1e-05
        %v2454 = vadd.f32 %v2438, 1e-05
        %v2455 = vadd.f32 %v2439, 1e-05
        %v2456 = vadd.f32 %v2440, 1e-05
        %v2457 = vadd.f32 %v2441, 1e-05
        %v2458 = vadd.f32 %v2442, 1e-05
        %v2459 = vadd.f32 %v2443, 1e-05
        %v2460 = vadd.f32 %v2444, 1e-05
        %v2461 = vadd.f32 %v2445, 1e-05
        %v2462 = vadd.f32 %v2446, 1e-05
        %v2463 = vadd.f32 %v2447, 1e-05
        %v2464 = vadd.f32 %v2448, 1e-05
        %v2465 = vrsqrt.pop %v2449
        %v2466 = vmul.f32 %v2465, %v2449
        %v2467 = vmul.f32 %v2466, %v2465
        %v2468 = vmul.f32 0.5, %v2467
        %v2469 = vsub.f32 1.5, %v2468
        %v2470 = vmul.f32 %v2465, %v2469
        %vm2471 = vweird.f32 %v2449
        %vm2472 = vweird.f32 %v2465
        %vm2473 = vmor %vm2471, %vm2472
        %v2474 = vsel %vm2473, %v2465, %v2470
        %v2475 = vrsqrt.pop %v2450
        %v2476 = vmul.f32 %v2475, %v2450
        %v2477 = vmul.f32 %v2476, %v2475
        %v2478 = vmul.f32 0.5, %v2477
        %v2479 = vsub.f32 1.5, %v2478
        %v2480 = vmul.f32 %v2475, %v2479
        %vm2481 = vweird.f32 %v2450
        %vm2482 = vweird.f32 %v2475
        %vm2483 = vmor %vm2481, %vm2482
        %v2484 = vsel %vm2483, %v2475, %v2480
        %v2485 = vrsqrt.pop %v2451
        %v2486 = vmul.f32 %v2485, %v2451
        %v2487 = vmul.f32 %v2486, %v2485
        %v2488 = vmul.f32 0.5, %v2487
        %v2489 = vsub.f32 1.5, %v2488
        %v2490 = vmul.f32 %v2485, %v2489
        %vm2491 = vweird.f32 %v2451
        %vm2492 = vweird.f32 %v2485
        %vm2493 = vmor %vm2491, %vm2492
        %v2494 = vsel %vm2493, %v2485, %v2490
        %v2495 = vrsqrt.pop %v2452
        %v2496 = vmul.f32 %v2495, %v2452
        %v2497 = vmul.f32 %v2496, %v2495
        %v2498 = vmul.f32 0.5, %v2497
        %v2499 = vsub.f32 1.5, %v2498
        %v2500 = vmul.f32 %v2495, %v2499
        %vm2501 = vweird.f32 %v2452
        %vm2502 = vweird.f32 %v2495
        %vm2503 = vmor %vm2501, %vm2502
        %v2504 = vsel %vm2503, %v2495, %v2500
        %v2505 = vrsqrt.pop %v2453
        %v2506 = vmul.f32 %v2505, %v2453
        %v2507 = vmul.f32 %v2506, %v2505
        %v2508 = vmul.f32 0.5, %v2507
        %v2509 = vsub.f32 1.5, %v2508
        %v2510 = vmul.f32 %v2505, %v2509
        %vm2511 = vweird.f32 %v2453
        %vm2512 = vweird.f32 %v2505
        %vm2513 = vmor %vm2511, %vm2512
        %v2514 = vsel %vm2513, %v2505, %v2510
        %v2515 = vrsqrt.pop %v2454
        %v2516 = vmul.f32 %v2515, %v2454
        %v2517 = vmul.f32 %v2516, %v2515
        %v2518 = vmul.f32 0.5, %v2517
        %v2519 = vsub.f32 1.5, %v2518
        %v2520 = vmul.f32 %v2515, %v2519
        %vm2521 = vweird.f32 %v2454
        %vm2522 = vweird.f32 %v2515
        %vm2523 = vmor %vm2521, %vm2522
        %v2524 = vsel %vm2523, %v2515, %v2520
        %v2525 = vrsqrt.pop %v2455
        %v2526 = vmul.f32 %v2525, %v2455
        %v2527 = vmul.f32 %v2526, %v2525
        %v2528 = vmul.f32 0.5, %v2527
        %v2529 = vsub.f32 1.5, %v2528
        %v2530 = vmul.f32 %v2525, %v2529
        %vm2531 = vweird.f32 %v2455
        %vm2532 = vweird.f32 %v2525
        %vm2533 = vmor %vm2531, %vm2532
        %v2534 = vsel %vm2533, %v2525, %v2530
        %v2535 = vrsqrt.pop %v2456
        %v2536 = vmul.f32 %v2535, %v2456
        %v2537 = vmul.f32 %v2536, %v2535
        %v2538 = vmul.f32 0.5, %v2537
        %v2539 = vsub.f32 1.5, %v2538
        %v2540 = vmul.f32 %v2535, %v2539
        %vm2541 = vweird.f32 %v2456
        %vm2542 = vweird.f32 %v2535
        %vm2543 = vmor %vm2541, %vm2542
        %v2544 = vsel %vm2543, %v2535, %v2540
        %v2545 = vrsqrt.pop %v2457
        %v2546 = vmul.f32 %v2545, %v2457
        %v2547 = vmul.f32 %v2546, %v2545
        %v2548 = vmul.f32 0.5, %v2547
        %v2549 = vsub.f32 1.5, %v2548
        %v2550 = vmul.f32 %v2545, %v2549
        %vm2551 = vweird.f32 %v2457
        %vm2552 = vweird.f32 %v2545
        %vm2553 = vmor %vm2551, %vm2552
        %v2554 = vsel %vm2553, %v2545, %v2550
        %v2555 = vrsqrt.pop %v2458
        %v2556 = vmul.f32 %v2555, %v2458
        %v2557 = vmul.f32 %v2556, %v2555
        %v2558 = vmul.f32 0.5, %v2557
        %v2559 = vsub.f32 1.5, %v2558
        %v2560 = vmul.f32 %v2555, %v2559
        %vm2561 = vweird.f32 %v2458
        %vm2562 = vweird.f32 %v2555
        %vm2563 = vmor %vm2561, %vm2562
        %v2564 = vsel %vm2563, %v2555, %v2560
        %v2565 = vrsqrt.pop %v2459
        %v2566 = vmul.f32 %v2565, %v2459
        %v2567 = vmul.f32 %v2566, %v2565
        %v2568 = vmul.f32 0.5, %v2567
        %v2569 = vsub.f32 1.5, %v2568
        %v2570 = vmul.f32 %v2565, %v2569
        %vm2571 = vweird.f32 %v2459
        %vm2572 = vweird.f32 %v2565
        %vm2573 = vmor %vm2571, %vm2572
        %v2574 = vsel %vm2573, %v2565, %v2570
        %v2575 = vrsqrt.pop %v2460
        %v2576 = vmul.f32 %v2575, %v2460
        %v2577 = vmul.f32 %v2576, %v2575
        %v2578 = vmul.f32 0.5, %v2577
        %v2579 = vsub.f32 1.5, %v2578
        %v2580 = vmul.f32 %v2575, %v2579
        %vm2581 = vweird.f32 %v2460
        %vm2582 = vweird.f32 %v2575
        %vm2583 = vmor %vm2581, %vm2582
        %v2584 = vsel %vm2583, %v2575, %v2580
        %v2585 = vrsqrt.pop %v2461
        %v2586 = vmul.f32 %v2585, %v2461
        %v2587 = vmul.f32 %v2586, %v2585
        %v2588 = vmul.f32 0.5, %v2587
        %v2589 = vsub.f32 1.5, %v2588
        %v2590 = vmul.f32 %v2585, %v2589
        %vm2591 = vweird.f32 %v2461
        %vm2592 = vweird.f32 %v2585
        %vm2593 = vmor %vm2591, %vm2592
        %v2594 = vsel %vm2593, %v2585, %v2590
        %v2595 = vrsqrt.pop %v2462
        %v2596 = vmul.f32 %v2595, %v2462
        %v2597 = vmul.f32 %v2596, %v2595
        %v2598 = vmul.f32 0.5, %v2597
        %v2599 = vsub.f32 1.5, %v2598
        %v2600 = vmul.f32 %v2595, %v2599
        %vm2601 = vweird.f32 %v2462
        %vm2602 = vweird.f32 %v2595
        %vm2603 = vmor %vm2601, %vm2602
        %v2604 = vsel %vm2603, %v2595, %v2600
        %v2605 = vrsqrt.pop %v2463
        %v2606 = vmul.f32 %v2605, %v2463
        %v2607 = vmul.f32 %v2606, %v2605
        %v2608 = vmul.f32 0.5, %v2607
        %v2609 = vsub.f32 1.5, %v2608
        %v2610 = vmul.f32 %v2605, %v2609
        %vm2611 = vweird.f32 %v2463
        %vm2612 = vweird.f32 %v2605
        %vm2613 = vmor %vm2611, %vm2612
        %v2614 = vsel %vm2613, %v2605, %v2610
        %v2615 = vrsqrt.pop %v2464
        %v2616 = vmul.f32 %v2615, %v2464
        %v2617 = vmul.f32 %v2616, %v2615
        %v2618 = vmul.f32 0.5, %v2617
        %v2619 = vsub.f32 1.5, %v2618
        %v2620 = vmul.f32 %v2615, %v2619
        %vm2621 = vweird.f32 %v2464
        %vm2622 = vweird.f32 %v2615
        %vm2623 = vmor %vm2621, %vm2622
        %v2624 = vsel %vm2623, %v2615, %v2620
        %v2625 = vmul.f32 %v2353, %v2474
        %v2626 = vmul.f32 %v2354, %v2484
        %v2627 = vmul.f32 %v2355, %v2494
        %v2628 = vmul.f32 %v2356, %v2504
        %v2629 = vmul.f32 %v2357, %v2514
        %v2630 = vmul.f32 %v2358, %v2524
        %v2631 = vmul.f32 %v2359, %v2534
        %v2632 = vmul.f32 %v2360, %v2544
        %v2633 = vmul.f32 %v2361, %v2554
        %v2634 = vmul.f32 %v2362, %v2564
        %v2635 = vmul.f32 %v2363, %v2574
        %v2636 = vmul.f32 %v2364, %v2584
        %v2637 = vmul.f32 %v2365, %v2594
        %v2638 = vmul.f32 %v2366, %v2604
        %v2639 = vmul.f32 %v2367, %v2614
        %v2640 = vmul.f32 %v2368, %v2624
        %v2641 = vperm.slane %v407, 0
        %v2642 = vmul.f32 %v2625, %v2641
        %v2643 = vmul.f32 %v2626, %v2641
        %v2644 = vmul.f32 %v2627, %v2641
        %v2645 = vmul.f32 %v2628, %v2641
        %v2646 = vmul.f32 %v2629, %v2641
        %v2647 = vmul.f32 %v2630, %v2641
        %v2648 = vmul.f32 %v2631, %v2641
        %v2649 = vmul.f32 %v2632, %v2641
        %v2650 = vmul.f32 %v2633, %v2641
        %v2651 = vmul.f32 %v2634, %v2641
        %v2652 = vmul.f32 %v2635, %v2641
        %v2653 = vmul.f32 %v2636, %v2641
        %v2654 = vmul.f32 %v2637, %v2641
        %v2655 = vmul.f32 %v2638, %v2641
        %v2656 = vmul.f32 %v2639, %v2641
        %v2657 = vmul.f32 %v2640, %v2641
        %v2658 = vperm.slane %v408, 0
        %v2659 = vadd.f32 %v2642, %v2658
        %v2660 = vadd.f32 %v2643, %v2658
        %v2661 = vadd.f32 %v2644, %v2658
        %v2662 = vadd.f32 %v2645, %v2658
        %v2663 = vadd.f32 %v2646, %v2658
        %v2664 = vadd.f32 %v2647, %v2658
        %v2665 = vadd.f32 %v2648, %v2658
        %v2666 = vadd.f32 %v2649, %v2658
        %v2667 = vadd.f32 %v2650, %v2658
        %v2668 = vadd.f32 %v2651, %v2658
        %v2669 = vadd.f32 %v2652, %v2658
        %v2670 = vadd.f32 %v2653, %v2658
        %v2671 = vadd.f32 %v2654, %v2658
        %v2672 = vadd.f32 %v2655, %v2658
        %v2673 = vadd.f32 %v2656, %v2658
        %v2674 = vadd.f32 %v2657, %v2658
        %v2675 = vadd.f32 %v413, %v2659
        %v2676 = vadd.f32 %v414, %v2660
        %v2677 = vadd.f32 %v415, %v2661
        %v2678 = vadd.f32 %v416, %v2662
        %v2679 = vadd.f32 %v417, %v2663
        %v2680 = vadd.f32 %v418, %v2664
        %v2681 = vadd.f32 %v419, %v2665
        %v2682 = vadd.f32 %v420, %v2666
        %v2683 = vadd.f32 %v421, %v2667
        %v2684 = vadd.f32 %v422, %v2668
        %v2685 = vadd.f32 %v423, %v2669
        %v2686 = vadd.f32 %v424, %v2670
        %v2687 = vadd.f32 %v425, %v2671
        %v2688 = vadd.f32 %v426, %v2672
        %v2689 = vadd.f32 %v427, %v2673
        %v2690 = vadd.f32 %v428, %v2674
        %v2691 = vsel %vm600, %v2675, 0.0
        %2692 = vadd.xlane.f32.xlu0 %v2691
        %v2693 = vpop.xlane.xlu0 %2692
        %v2694 = vsel %vm600, %v2676, 0.0
        %2695 = vadd.xlane.f32.xlu0 %v2694
        %v2696 = vpop.xlane.xlu0 %2695
        %v2697 = vsel %vm600, %v2677, 0.0
        %2698 = vadd.xlane.f32.xlu0 %v2697
        %v2699 = vpop.xlane.xlu0 %2698
        %v2700 = vsel %vm600, %v2678, 0.0
        %2701 = vadd.xlane.f32.xlu0 %v2700
        %v2702 = vpop.xlane.xlu0 %2701
        %v2703 = vsel %vm600, %v2679, 0.0
        %2704 = vadd.xlane.f32.xlu0 %v2703
        %v2705 = vpop.xlane.xlu0 %2704
        %v2706 = vsel %vm600, %v2680, 0.0
        %2707 = vadd.xlane.f32.xlu0 %v2706
        %v2708 = vpop.xlane.xlu0 %2707
        %v2709 = vsel %vm600, %v2681, 0.0
        %2710 = vadd.xlane.f32.xlu0 %v2709
        %v2711 = vpop.xlane.xlu0 %2710
        %v2712 = vsel %vm600, %v2682, 0.0
        %2713 = vadd.xlane.f32.xlu0 %v2712
        %v2714 = vpop.xlane.xlu0 %2713
        %v2715 = vsel %vm600, %v2683, 0.0
        %2716 = vadd.xlane.f32.xlu0 %v2715
        %v2717 = vpop.xlane.xlu0 %2716
        %v2718 = vsel %vm600, %v2684, 0.0
        %2719 = vadd.xlane.f32.xlu0 %v2718
        %v2720 = vpop.xlane.xlu0 %2719
        %v2721 = vsel %vm600, %v2685, 0.0
        %2722 = vadd.xlane.f32.xlu0 %v2721
        %v2723 = vpop.xlane.xlu0 %2722
        %v2724 = vsel %vm600, %v2686, 0.0
        %2725 = vadd.xlane.f32.xlu0 %v2724
        %v2726 = vpop.xlane.xlu0 %2725
        %v2727 = vsel %vm600, %v2687, 0.0
        %2728 = vadd.xlane.f32.xlu0 %v2727
        %v2729 = vpop.xlane.xlu0 %2728
        %v2730 = vsel %vm600, %v2688, 0.0
        %2731 = vadd.xlane.f32.xlu0 %v2730
        %v2732 = vpop.xlane.xlu0 %2731
        %v2733 = vsel %vm600, %v2689, 0.0
        %2734 = vadd.xlane.f32.xlu0 %v2733
        %v2735 = vpop.xlane.xlu0 %2734
        %v2736 = vsel %vm600, %v2690, 0.0
        %2737 = vadd.xlane.f32.xlu0 %v2736
        %v2738 = vpop.xlane.xlu0 %2737
        %v2739 = vmul.f32 %v2693, %v2336
        %v2740 = vmul.f32 %v2696, %v2336
        %v2741 = vmul.f32 %v2699, %v2336
        %v2742 = vmul.f32 %v2702, %v2336
        %v2743 = vmul.f32 %v2705, %v2336
        %v2744 = vmul.f32 %v2708, %v2336
        %v2745 = vmul.f32 %v2711, %v2336
        %v2746 = vmul.f32 %v2714, %v2336
        %v2747 = vmul.f32 %v2717, %v2336
        %v2748 = vmul.f32 %v2720, %v2336
        %v2749 = vmul.f32 %v2723, %v2336
        %v2750 = vmul.f32 %v2726, %v2336
        %v2751 = vmul.f32 %v2729, %v2336
        %v2752 = vmul.f32 %v2732, %v2336
        %v2753 = vmul.f32 %v2735, %v2336
        %v2754 = vmul.f32 %v2738, %v2336
        %v2755 = vsub.f32 %v2675, %v2739
        %v2756 = vsub.f32 %v2676, %v2740
        %v2757 = vsub.f32 %v2677, %v2741
        %v2758 = vsub.f32 %v2678, %v2742
        %v2759 = vsub.f32 %v2679, %v2743
        %v2760 = vsub.f32 %v2680, %v2744
        %v2761 = vsub.f32 %v2681, %v2745
        %v2762 = vsub.f32 %v2682, %v2746
        %v2763 = vsub.f32 %v2683, %v2747
        %v2764 = vsub.f32 %v2684, %v2748
        %v2765 = vsub.f32 %v2685, %v2749
        %v2766 = vsub.f32 %v2686, %v2750
        %v2767 = vsub.f32 %v2687, %v2751
        %v2768 = vsub.f32 %v2688, %v2752
        %v2769 = vsub.f32 %v2689, %v2753
        %v2770 = vsub.f32 %v2690, %v2754
        %v2771 = vmul.f32 %v2755, %v2755
        %v2772 = vmul.f32 %v2756, %v2756
        %v2773 = vmul.f32 %v2757, %v2757
        %v2774 = vmul.f32 %v2758, %v2758
        %v2775 = vmul.f32 %v2759, %v2759
        %v2776 = vmul.f32 %v2760, %v2760
        %v2777 = vmul.f32 %v2761, %v2761
        %v2778 = vmul.f32 %v2762, %v2762
        %v2779 = vmul.f32 %v2763, %v2763
        %v2780 = vmul.f32 %v2764, %v2764
        %v2781 = vmul.f32 %v2765, %v2765
        %v2782 = vmul.f32 %v2766, %v2766
        %v2783 = vmul.f32 %v2767, %v2767
        %v2784 = vmul.f32 %v2768, %v2768
        %v2785 = vmul.f32 %v2769, %v2769
        %v2786 = vmul.f32 %v2770, %v2770
        %v2787 = vsel %vm600, %v2771, 0.0
        %2788 = vadd.xlane.f32.xlu0 %v2787
        %v2789 = vpop.xlane.xlu0 %2788
        %v2790 = vsel %vm600, %v2772, 0.0
        %2791 = vadd.xlane.f32.xlu0 %v2790
        %v2792 = vpop.xlane.xlu0 %2791
        %v2793 = vsel %vm600, %v2773, 0.0
        %2794 = vadd.xlane.f32.xlu0 %v2793
        %v2795 = vpop.xlane.xlu0 %2794
        %v2796 = vsel %vm600, %v2774, 0.0
        %2797 = vadd.xlane.f32.xlu0 %v2796
        %v2798 = vpop.xlane.xlu0 %2797
        %v2799 = vsel %vm600, %v2775, 0.0
        %2800 = vadd.xlane.f32.xlu0 %v2799
        %v2801 = vpop.xlane.xlu0 %2800
        %v2802 = vsel %vm600, %v2776, 0.0
        %2803 = vadd.xlane.f32.xlu0 %v2802
        %v2804 = vpop.xlane.xlu0 %2803
        %v2805 = vsel %vm600, %v2777, 0.0
        %2806 = vadd.xlane.f32.xlu0 %v2805
        %v2807 = vpop.xlane.xlu0 %2806
        %v2808 = vsel %vm600, %v2778, 0.0
        %2809 = vadd.xlane.f32.xlu0 %v2808
        %v2810 = vpop.xlane.xlu0 %2809
        %v2811 = vsel %vm600, %v2779, 0.0
        %2812 = vadd.xlane.f32.xlu0 %v2811
        %v2813 = vpop.xlane.xlu0 %2812
        %v2814 = vsel %vm600, %v2780, 0.0
        %2815 = vadd.xlane.f32.xlu0 %v2814
        %v2816 = vpop.xlane.xlu0 %2815
        %v2817 = vsel %vm600, %v2781, 0.0
        %2818 = vadd.xlane.f32.xlu0 %v2817
        %v2819 = vpop.xlane.xlu0 %2818
        %v2820 = vsel %vm600, %v2782, 0.0
        %2821 = vadd.xlane.f32.xlu0 %v2820
        %v2822 = vpop.xlane.xlu0 %2821
        %v2823 = vsel %vm600, %v2783, 0.0
        %2824 = vadd.xlane.f32.xlu0 %v2823
        %v2825 = vpop.xlane.xlu0 %2824
        %v2826 = vsel %vm600, %v2784, 0.0
        %2827 = vadd.xlane.f32.xlu0 %v2826
        %v2828 = vpop.xlane.xlu0 %2827
        %v2829 = vsel %vm600, %v2785, 0.0
        %2830 = vadd.xlane.f32.xlu0 %v2829
        %v2831 = vpop.xlane.xlu0 %2830
        %v2832 = vsel %vm600, %v2786, 0.0
        %2833 = vadd.xlane.f32.xlu0 %v2832
        %v2834 = vpop.xlane.xlu0 %2833
        %v2835 = vmul.f32 %v2789, %v2336
        %v2836 = vmul.f32 %v2792, %v2336
        %v2837 = vmul.f32 %v2795, %v2336
        %v2838 = vmul.f32 %v2798, %v2336
        %v2839 = vmul.f32 %v2801, %v2336
        %v2840 = vmul.f32 %v2804, %v2336
        %v2841 = vmul.f32 %v2807, %v2336
        %v2842 = vmul.f32 %v2810, %v2336
        %v2843 = vmul.f32 %v2813, %v2336
        %v2844 = vmul.f32 %v2816, %v2336
        %v2845 = vmul.f32 %v2819, %v2336
        %v2846 = vmul.f32 %v2822, %v2336
        %v2847 = vmul.f32 %v2825, %v2336
        %v2848 = vmul.f32 %v2828, %v2336
        %v2849 = vmul.f32 %v2831, %v2336
        %v2850 = vmul.f32 %v2834, %v2336
        %v2851 = vadd.f32 %v2835, 1e-05
        %v2852 = vadd.f32 %v2836, 1e-05
        %v2853 = vadd.f32 %v2837, 1e-05
        %v2854 = vadd.f32 %v2838, 1e-05
        %v2855 = vadd.f32 %v2839, 1e-05
        %v2856 = vadd.f32 %v2840, 1e-05
        %v2857 = vadd.f32 %v2841, 1e-05
        %v2858 = vadd.f32 %v2842, 1e-05
        %v2859 = vadd.f32 %v2843, 1e-05
        %v2860 = vadd.f32 %v2844, 1e-05
        %v2861 = vadd.f32 %v2845, 1e-05
        %v2862 = vadd.f32 %v2846, 1e-05
        %v2863 = vadd.f32 %v2847, 1e-05
        %v2864 = vadd.f32 %v2848, 1e-05
        %v2865 = vadd.f32 %v2849, 1e-05
        %v2866 = vadd.f32 %v2850, 1e-05
        %v2867 = vrsqrt.pop %v2851
        %v2868 = vmul.f32 %v2867, %v2851
        %v2869 = vmul.f32 %v2868, %v2867
        %v2870 = vmul.f32 0.5, %v2869
        %v2871 = vsub.f32 1.5, %v2870
        %v2872 = vmul.f32 %v2867, %v2871
        %vm2873 = vweird.f32 %v2851
        %vm2874 = vweird.f32 %v2867
        %vm2875 = vmor %vm2873, %vm2874
        %v2876 = vsel %vm2875, %v2867, %v2872
        %v2877 = vrsqrt.pop %v2852
        %v2878 = vmul.f32 %v2877, %v2852
        %v2879 = vmul.f32 %v2878, %v2877
        %v2880 = vmul.f32 0.5, %v2879
        %v2881 = vsub.f32 1.5, %v2880
        %v2882 = vmul.f32 %v2877, %v2881
        %vm2883 = vweird.f32 %v2852
        %vm2884 = vweird.f32 %v2877
        %vm2885 = vmor %vm2883, %vm2884
        %v2886 = vsel %vm2885, %v2877, %v2882
        %v2887 = vrsqrt.pop %v2853
        %v2888 = vmul.f32 %v2887, %v2853
        %v2889 = vmul.f32 %v2888, %v2887
        %v2890 = vmul.f32 0.5, %v2889
        %v2891 = vsub.f32 1.5, %v2890
        %v2892 = vmul.f32 %v2887, %v2891
        %vm2893 = vweird.f32 %v2853
        %vm2894 = vweird.f32 %v2887
        %vm2895 = vmor %vm2893, %vm2894
        %v2896 = vsel %vm2895, %v2887, %v2892
        %v2897 = vrsqrt.pop %v2854
        %v2898 = vmul.f32 %v2897, %v2854
        %v2899 = vmul.f32 %v2898, %v2897
        %v2900 = vmul.f32 0.5, %v2899
        %v2901 = vsub.f32 1.5, %v2900
        %v2902 = vmul.f32 %v2897, %v2901
        %vm2903 = vweird.f32 %v2854
        %vm2904 = vweird.f32 %v2897
        %vm2905 = vmor %vm2903, %vm2904
        %v2906 = vsel %vm2905, %v2897, %v2902
        %v2907 = vrsqrt.pop %v2855
        %v2908 = vmul.f32 %v2907, %v2855
        %v2909 = vmul.f32 %v2908, %v2907
        %v2910 = vmul.f32 0.5, %v2909
        %v2911 = vsub.f32 1.5, %v2910
        %v2912 = vmul.f32 %v2907, %v2911
        %vm2913 = vweird.f32 %v2855
        %vm2914 = vweird.f32 %v2907
        %vm2915 = vmor %vm2913, %vm2914
        %v2916 = vsel %vm2915, %v2907, %v2912
        %v2917 = vrsqrt.pop %v2856
        %v2918 = vmul.f32 %v2917, %v2856
        %v2919 = vmul.f32 %v2918, %v2917
        %v2920 = vmul.f32 0.5, %v2919
        %v2921 = vsub.f32 1.5, %v2920
        %v2922 = vmul.f32 %v2917, %v2921
        %vm2923 = vweird.f32 %v2856
        %vm2924 = vweird.f32 %v2917
        %vm2925 = vmor %vm2923, %vm2924
        %v2926 = vsel %vm2925, %v2917, %v2922
        %v2927 = vrsqrt.pop %v2857
        %v2928 = vmul.f32 %v2927, %v2857
        %v2929 = vmul.f32 %v2928, %v2927
        %v2930 = vmul.f32 0.5, %v2929
        %v2931 = vsub.f32 1.5, %v2930
        %v2932 = vmul.f32 %v2927, %v2931
        %vm2933 = vweird.f32 %v2857
        %vm2934 = vweird.f32 %v2927
        %vm2935 = vmor %vm2933, %vm2934
        %v2936 = vsel %vm2935, %v2927, %v2932
        %v2937 = vrsqrt.pop %v2858
        %v2938 = vmul.f32 %v2937, %v2858
        %v2939 = vmul.f32 %v2938, %v2937
        %v2940 = vmul.f32 0.5, %v2939
        %v2941 = vsub.f32 1.5, %v2940
        %v2942 = vmul.f32 %v2937, %v2941
        %vm2943 = vweird.f32 %v2858
        %vm2944 = vweird.f32 %v2937
        %vm2945 = vmor %vm2943, %vm2944
        %v2946 = vsel %vm2945, %v2937, %v2942
        %v2947 = vrsqrt.pop %v2859
        %v2948 = vmul.f32 %v2947, %v2859
        %v2949 = vmul.f32 %v2948, %v2947
        %v2950 = vmul.f32 0.5, %v2949
        %v2951 = vsub.f32 1.5, %v2950
        %v2952 = vmul.f32 %v2947, %v2951
        %vm2953 = vweird.f32 %v2859
        %vm2954 = vweird.f32 %v2947
        %vm2955 = vmor %vm2953, %vm2954
        %v2956 = vsel %vm2955, %v2947, %v2952
        %v2957 = vrsqrt.pop %v2860
        %v2958 = vmul.f32 %v2957, %v2860
        %v2959 = vmul.f32 %v2958, %v2957
        %v2960 = vmul.f32 0.5, %v2959
        %v2961 = vsub.f32 1.5, %v2960
        %v2962 = vmul.f32 %v2957, %v2961
        %vm2963 = vweird.f32 %v2860
        %vm2964 = vweird.f32 %v2957
        %vm2965 = vmor %vm2963, %vm2964
        %v2966 = vsel %vm2965, %v2957, %v2962
        %v2967 = vrsqrt.pop %v2861
        %v2968 = vmul.f32 %v2967, %v2861
        %v2969 = vmul.f32 %v2968, %v2967
        %v2970 = vmul.f32 0.5, %v2969
        %v2971 = vsub.f32 1.5, %v2970
        %v2972 = vmul.f32 %v2967, %v2971
        %vm2973 = vweird.f32 %v2861
        %vm2974 = vweird.f32 %v2967
        %vm2975 = vmor %vm2973, %vm2974
        %v2976 = vsel %vm2975, %v2967, %v2972
        %v2977 = vrsqrt.pop %v2862
        %v2978 = vmul.f32 %v2977, %v2862
        %v2979 = vmul.f32 %v2978, %v2977
        %v2980 = vmul.f32 0.5, %v2979
        %v2981 = vsub.f32 1.5, %v2980
        %v2982 = vmul.f32 %v2977, %v2981
        %vm2983 = vweird.f32 %v2862
        %vm2984 = vweird.f32 %v2977
        %vm2985 = vmor %vm2983, %vm2984
        %v2986 = vsel %vm2985, %v2977, %v2982
        %v2987 = vrsqrt.pop %v2863
        %v2988 = vmul.f32 %v2987, %v2863
        %v2989 = vmul.f32 %v2988, %v2987
        %v2990 = vmul.f32 0.5, %v2989
        %v2991 = vsub.f32 1.5, %v2990
        %v2992 = vmul.f32 %v2987, %v2991
        %vm2993 = vweird.f32 %v2863
        %vm2994 = vweird.f32 %v2987
        %vm2995 = vmor %vm2993, %vm2994
        %v2996 = vsel %vm2995, %v2987, %v2992
        %v2997 = vrsqrt.pop %v2864
        %v2998 = vmul.f32 %v2997, %v2864
        %v2999 = vmul.f32 %v2998, %v2997
        %v3000 = vmul.f32 0.5, %v2999
        %v3001 = vsub.f32 1.5, %v3000
        %v3002 = vmul.f32 %v2997, %v3001
        %vm3003 = vweird.f32 %v2864
        %vm3004 = vweird.f32 %v2997
        %vm3005 = vmor %vm3003, %vm3004
        %v3006 = vsel %vm3005, %v2997, %v3002
        %v3007 = vrsqrt.pop %v2865
        %v3008 = vmul.f32 %v3007, %v2865
        %v3009 = vmul.f32 %v3008, %v3007
        %v3010 = vmul.f32 0.5, %v3009
        %v3011 = vsub.f32 1.5, %v3010
        %v3012 = vmul.f32 %v3007, %v3011
        %vm3013 = vweird.f32 %v2865
        %vm3014 = vweird.f32 %v3007
        %vm3015 = vmor %vm3013, %vm3014
        %v3016 = vsel %vm3015, %v3007, %v3012
        %v3017 = vrsqrt.pop %v2866
        %v3018 = vmul.f32 %v3017, %v2866
        %v3019 = vmul.f32 %v3018, %v3017
        %v3020 = vmul.f32 0.5, %v3019
        %v3021 = vsub.f32 1.5, %v3020
        %v3022 = vmul.f32 %v3017, %v3021
        %vm3023 = vweird.f32 %v2866
        %vm3024 = vweird.f32 %v3017
        %vm3025 = vmor %vm3023, %vm3024
        %v3026 = vsel %vm3025, %v3017, %v3022
        %v3027 = vmul.f32 %v2755, %v2876
        %v3028 = vmul.f32 %v2756, %v2886
        %v3029 = vmul.f32 %v2757, %v2896
        %v3030 = vmul.f32 %v2758, %v2906
        %v3031 = vmul.f32 %v2759, %v2916
        %v3032 = vmul.f32 %v2760, %v2926
        %v3033 = vmul.f32 %v2761, %v2936
        %v3034 = vmul.f32 %v2762, %v2946
        %v3035 = vmul.f32 %v2763, %v2956
        %v3036 = vmul.f32 %v2764, %v2966
        %v3037 = vmul.f32 %v2765, %v2976
        %v3038 = vmul.f32 %v2766, %v2986
        %v3039 = vmul.f32 %v2767, %v2996
        %v3040 = vmul.f32 %v2768, %v3006
        %v3041 = vmul.f32 %v2769, %v3016
        %v3042 = vmul.f32 %v2770, %v3026
        %v3043 = vperm.slane %v409, 0
        %v3044 = vmul.f32 %v3027, %v3043
        %v3045 = vmul.f32 %v3028, %v3043
        %v3046 = vmul.f32 %v3029, %v3043
        %v3047 = vmul.f32 %v3030, %v3043
        %v3048 = vmul.f32 %v3031, %v3043
        %v3049 = vmul.f32 %v3032, %v3043
        %v3050 = vmul.f32 %v3033, %v3043
        %v3051 = vmul.f32 %v3034, %v3043
        %v3052 = vmul.f32 %v3035, %v3043
        %v3053 = vmul.f32 %v3036, %v3043
        %v3054 = vmul.f32 %v3037, %v3043
        %v3055 = vmul.f32 %v3038, %v3043
        %v3056 = vmul.f32 %v3039, %v3043
        %v3057 = vmul.f32 %v3040, %v3043
        %v3058 = vmul.f32 %v3041, %v3043
        %v3059 = vmul.f32 %v3042, %v3043
        %v3060 = vperm.slane %v410, 0
        %v3061 = vadd.f32 %v3044, %v3060
        %v3062 = vadd.f32 %v3045, %v3060
        %v3063 = vadd.f32 %v3046, %v3060
        %v3064 = vadd.f32 %v3047, %v3060
        %v3065 = vadd.f32 %v3048, %v3060
        %v3066 = vadd.f32 %v3049, %v3060
        %v3067 = vadd.f32 %v3050, %v3060
        %v3068 = vadd.f32 %v3051, %v3060
        %v3069 = vadd.f32 %v3052, %v3060
        %v3070 = vadd.f32 %v3053, %v3060
        %v3071 = vadd.f32 %v3054, %v3060
        %v3072 = vadd.f32 %v3055, %v3060
        %v3073 = vadd.f32 %v3056, %v3060
        %v3074 = vadd.f32 %v3057, %v3060
        %v3075 = vadd.f32 %v3058, %v3060
        %v3076 = vadd.f32 %v3059, %v3060
        %v3077 = vperm.slane %v405, 0
        %v3079 = vsel %vm600, %v3061, 0
        %v3082 = vsel %vm600, %v3062, 0
        %v3085 = vsel %vm600, %v3063, 0
        %v3088 = vsel %vm600, %v3064, 0
        %v3091 = vsel %vm600, %v3065, 0
        %v3094 = vsel %vm600, %v3066, 0
        %v3097 = vsel %vm600, %v3067, 0
        %v3100 = vsel %vm600, %v3068, 0
        %v3103 = vsel %vm600, %v3069, 0
        %v3106 = vsel %vm600, %v3070, 0
        %v3109 = vsel %vm600, %v3071, 0
        %v3112 = vsel %vm600, %v3072, 0
        %v3115 = vsel %vm600, %v3073, 0
        %v3118 = vsel %vm600, %v3074, 0
        %v3121 = vsel %vm600, %v3075, 0
        %v3124 = vsel %vm600, %v3076, 0
        %3126 = vmatpush.msra.mxu0 0.0
        %3127 = vmatpush.msra.mxu0 0.0
        %3128 = vmatpush.msra.mxu0 0.0
        %3129 = vmatpush.msra.mxu0 0.0
        %3130 = vmatpush.msra.mxu0 0.0
        %3131 = vmatpush.msra.mxu0 0.0
        %3132 = vmatpush.msra.mxu0 0.0
        %3133 = vmatpush.msra.mxu0 0.0
        %3134 = vmatpush.msra.mxu0 0.0
        %3135 = vmatpush.msra.mxu0 0.0
        %3136 = vmatpush.msra.mxu0 0.0
        %3137 = vmatpush.msra.mxu0 0.0
        %3138 = vmatpush.msra.mxu0 %v401
        %3139 = vmatpush.msra.mxu0 %v400
        %3140 = vmatpush.msra.mxu0 %v399
        %3141 = vmatpush.msra.mxu0 %v398
        %3142 = vmatmul.f32.gmra.mxu0 %v3079
        %v3143 = vpop.f32.mrf.mxu0
        %v3144 = vadd.f32 %v3077, %v3143
        %3145 = vmatmul.f32.gmra.mxu0 %v3082
        %v3146 = vpop.f32.mrf.mxu0
        %v3147 = vadd.f32 %v3077, %v3146
        %3148 = vmatmul.f32.gmra.mxu0 %v3085
        %v3149 = vpop.f32.mrf.mxu0
        %v3150 = vadd.f32 %v3077, %v3149
        %3151 = vmatmul.f32.gmra.mxu0 %v3088
        %v3152 = vpop.f32.mrf.mxu0
        %v3153 = vadd.f32 %v3077, %v3152
        %3154 = vmatmul.f32.gmra.mxu0 %v3091
        %v3155 = vpop.f32.mrf.mxu0
        %v3156 = vadd.f32 %v3077, %v3155
        %3157 = vmatmul.f32.gmra.mxu0 %v3094
        %v3158 = vpop.f32.mrf.mxu0
        %v3159 = vadd.f32 %v3077, %v3158
        %3160 = vmatmul.f32.gmra.mxu0 %v3097
        %v3161 = vpop.f32.mrf.mxu0
        %v3162 = vadd.f32 %v3077, %v3161
        %3163 = vmatmul.f32.gmra.mxu0 %v3100
        %v3164 = vpop.f32.mrf.mxu0
        %v3165 = vadd.f32 %v3077, %v3164
        %3166 = vmatmul.f32.gmra.mxu0 %v3103
        %v3167 = vpop.f32.mrf.mxu0
        %v3168 = vadd.f32 %v3077, %v3167
        %3169 = vmatmul.f32.gmra.mxu0 %v3106
        %v3170 = vpop.f32.mrf.mxu0
        %v3171 = vadd.f32 %v3077, %v3170
        %3172 = vmatmul.f32.gmra.mxu0 %v3109
        %v3173 = vpop.f32.mrf.mxu0
        %v3174 = vadd.f32 %v3077, %v3173
        %3175 = vmatmul.f32.gmra.mxu0 %v3112
        %v3176 = vpop.f32.mrf.mxu0
        %v3177 = vadd.f32 %v3077, %v3176
        %3178 = vmatmul.f32.gmra.mxu0 %v3115
        %v3179 = vpop.f32.mrf.mxu0
        %v3180 = vadd.f32 %v3077, %v3179
        %3181 = vmatmul.f32.gmra.mxu0 %v3118
        %v3182 = vpop.f32.mrf.mxu0
        %v3183 = vadd.f32 %v3077, %v3182
        %3184 = vmatmul.f32.gmra.mxu0 %v3121
        %v3185 = vpop.f32.mrf.mxu0
        %v3186 = vadd.f32 %v3077, %v3185
        %3187 = vmatmul.f32.gmra.mxu0 %v3124
        %v3188 = vpop.f32.mrf.mxu0
        %v3189 = vadd.f32 %v3077, %v3188
        %3190 = vdwg.mxu0
        %v3191 = vmax.f32 %v3144, 0.0
        %v3192 = vmax.f32 %v3147, 0.0
        %v3193 = vmax.f32 %v3150, 0.0
        %v3194 = vmax.f32 %v3153, 0.0
        %v3195 = vmax.f32 %v3156, 0.0
        %v3196 = vmax.f32 %v3159, 0.0
        %v3197 = vmax.f32 %v3162, 0.0
        %v3198 = vmax.f32 %v3165, 0.0
        %v3199 = vmax.f32 %v3168, 0.0
        %v3200 = vmax.f32 %v3171, 0.0
        %v3201 = vmax.f32 %v3174, 0.0
        %v3202 = vmax.f32 %v3177, 0.0
        %v3203 = vmax.f32 %v3180, 0.0
        %v3204 = vmax.f32 %v3183, 0.0
        %v3205 = vmax.f32 %v3186, 0.0
        %v3206 = vmax.f32 %v3189, 0.0
        %v3207 = vperm.slane %v406, 0
        %vm3208 = vcmask 523264
        %v3210 = vsel %vm3208, %v3191, 0
        %v3213 = vsel %vm3208, %v3192, 0
        %v3216 = vsel %vm3208, %v3193, 0
        %v3219 = vsel %vm3208, %v3194, 0
        %v3222 = vsel %vm3208, %v3195, 0
        %v3225 = vsel %vm3208, %v3196, 0
        %v3228 = vsel %vm3208, %v3197, 0
        %v3231 = vsel %vm3208, %v3198, 0
        %v3234 = vsel %vm3208, %v3199, 0
        %v3237 = vsel %vm3208, %v3200, 0
        %v3240 = vsel %vm3208, %v3201, 0
        %v3243 = vsel %vm3208, %v3202, 0
        %v3246 = vsel %vm3208, %v3203, 0
        %v3249 = vsel %vm3208, %v3204, 0
        %v3252 = vsel %vm3208, %v3205, 0
        %v3255 = vsel %vm3208, %v3206, 0
        %3257 = vmatpush.msra.mxu0 0.0
        %3258 = vmatpush.msra.mxu0 0.0
        %3259 = vmatpush.msra.mxu0 0.0
        %3260 = vmatpush.msra.mxu0 0.0
        %3261 = vmatpush.msra.mxu0 0.0
        %3262 = vmatpush.msra.mxu0 0.0
        %3263 = vmatpush.msra.mxu0 0.0
        %3264 = vmatpush.msra.mxu0 0.0
        %3265 = vmatpush.msra.mxu0 %v389
        %3266 = vmatpush.msra.mxu0 %v388
        %3267 = vmatpush.msra.mxu0 %v387
        %3268 = vmatpush.msra.mxu0 %v386
        %3269 = vmatpush.msra.mxu0 %v385
        %3270 = vmatpush.msra.mxu0 %v384
        %3271 = vmatpush.msra.mxu0 %v383
        %3272 = vmatpush.msra.mxu0 %v382
        %3273 = vmatmul.f32.gmra.mxu0 %v3210
        %v3274 = vpop.f32.mrf.mxu0
        %v3275 = vadd.f32 %v3207, %v3274
        %3276 = vmatmul.f32.gmra.mxu0 %v3213
        %v3277 = vpop.f32.mrf.mxu0
        %v3278 = vadd.f32 %v3207, %v3277
        %3279 = vmatmul.f32.gmra.mxu0 %v3216
        %v3280 = vpop.f32.mrf.mxu0
        %v3281 = vadd.f32 %v3207, %v3280
        %3282 = vmatmul.f32.gmra.mxu0 %v3219
        %v3283 = vpop.f32.mrf.mxu0
        %v3284 = vadd.f32 %v3207, %v3283
        %3285 = vmatmul.f32.gmra.mxu0 %v3222
        %v3286 = vpop.f32.mrf.mxu0
        %v3287 = vadd.f32 %v3207, %v3286
        %3288 = vmatmul.f32.gmra.mxu0 %v3225
        %v3289 = vpop.f32.mrf.mxu0
        %v3290 = vadd.f32 %v3207, %v3289
        %3291 = vmatmul.f32.gmra.mxu0 %v3228
        %v3292 = vpop.f32.mrf.mxu0
        %v3293 = vadd.f32 %v3207, %v3292
        %3294 = vmatmul.f32.gmra.mxu0 %v3231
        %v3295 = vpop.f32.mrf.mxu0
        %v3296 = vadd.f32 %v3207, %v3295
        %3297 = vmatmul.f32.gmra.mxu0 %v3234
        %v3298 = vpop.f32.mrf.mxu0
        %v3299 = vadd.f32 %v3207, %v3298
        %3300 = vmatmul.f32.gmra.mxu0 %v3237
        %v3301 = vpop.f32.mrf.mxu0
        %v3302 = vadd.f32 %v3207, %v3301
        %3303 = vmatmul.f32.gmra.mxu0 %v3240
        %v3304 = vpop.f32.mrf.mxu0
        %v3305 = vadd.f32 %v3207, %v3304
        %3306 = vmatmul.f32.gmra.mxu0 %v3243
        %v3307 = vpop.f32.mrf.mxu0
        %v3308 = vadd.f32 %v3207, %v3307
        %3309 = vmatmul.f32.gmra.mxu0 %v3246
        %v3310 = vpop.f32.mrf.mxu0
        %v3311 = vadd.f32 %v3207, %v3310
        %3312 = vmatmul.f32.gmra.mxu0 %v3249
        %v3313 = vpop.f32.mrf.mxu0
        %v3314 = vadd.f32 %v3207, %v3313
        %3315 = vmatmul.f32.gmra.mxu0 %v3252
        %v3316 = vpop.f32.mrf.mxu0
        %v3317 = vadd.f32 %v3207, %v3316
        %3318 = vmatmul.f32.gmra.mxu0 %v3255
        %v3319 = vpop.f32.mrf.mxu0
        %v3320 = vadd.f32 %v3207, %v3319
        %3321 = vdwg.mxu0
        %v3322 = vadd.f32 %v3061, %v3275
        %v3323 = vadd.f32 %v3062, %v3278
        %v3324 = vadd.f32 %v3063, %v3281
        %v3325 = vadd.f32 %v3064, %v3284
        %v3326 = vadd.f32 %v3065, %v3287
        %v3327 = vadd.f32 %v3066, %v3290
        %v3328 = vadd.f32 %v3067, %v3293
        %v3329 = vadd.f32 %v3068, %v3296
        %v3330 = vadd.f32 %v3069, %v3299
        %v3331 = vadd.f32 %v3070, %v3302
        %v3332 = vadd.f32 %v3071, %v3305
        %v3333 = vadd.f32 %v3072, %v3308
        %v3334 = vadd.f32 %v3073, %v3311
        %v3335 = vadd.f32 %v3074, %v3314
        %v3336 = vadd.f32 %v3075, %v3317
        %v3337 = vadd.f32 %v3076, %v3320
        %v3338 = vsel %vm600, %v3322, 0.0
        %3339 = vadd.xlane.f32.xlu0 %v3338
        %v3340 = vpop.xlane.xlu0 %3339
        %v3341 = vsel %vm600, %v3323, 0.0
        %3342 = vadd.xlane.f32.xlu0 %v3341
        %v3343 = vpop.xlane.xlu0 %3342
        %v3344 = vsel %vm600, %v3324, 0.0
        %3345 = vadd.xlane.f32.xlu0 %v3344
        %v3346 = vpop.xlane.xlu0 %3345
        %v3347 = vsel %vm600, %v3325, 0.0
        %3348 = vadd.xlane.f32.xlu0 %v3347
        %v3349 = vpop.xlane.xlu0 %3348
        %v3350 = vsel %vm600, %v3326, 0.0
        %3351 = vadd.xlane.f32.xlu0 %v3350
        %v3352 = vpop.xlane.xlu0 %3351
        %v3353 = vsel %vm600, %v3327, 0.0
        %3354 = vadd.xlane.f32.xlu0 %v3353
        %v3355 = vpop.xlane.xlu0 %3354
        %v3356 = vsel %vm600, %v3328, 0.0
        %3357 = vadd.xlane.f32.xlu0 %v3356
        %v3358 = vpop.xlane.xlu0 %3357
        %v3359 = vsel %vm600, %v3329, 0.0
        %3360 = vadd.xlane.f32.xlu0 %v3359
        %v3361 = vpop.xlane.xlu0 %3360
        %v3362 = vsel %vm600, %v3330, 0.0
        %3363 = vadd.xlane.f32.xlu0 %v3362
        %v3364 = vpop.xlane.xlu0 %3363
        %v3365 = vsel %vm600, %v3331, 0.0
        %3366 = vadd.xlane.f32.xlu0 %v3365
        %v3367 = vpop.xlane.xlu0 %3366
        %v3368 = vsel %vm600, %v3332, 0.0
        %3369 = vadd.xlane.f32.xlu0 %v3368
        %v3370 = vpop.xlane.xlu0 %3369
        %v3371 = vsel %vm600, %v3333, 0.0
        %3372 = vadd.xlane.f32.xlu0 %v3371
        %v3373 = vpop.xlane.xlu0 %3372
        %v3374 = vsel %vm600, %v3334, 0.0
        %3375 = vadd.xlane.f32.xlu0 %v3374
        %v3376 = vpop.xlane.xlu0 %3375
        %v3377 = vsel %vm600, %v3335, 0.0
        %3378 = vadd.xlane.f32.xlu0 %v3377
        %v3379 = vpop.xlane.xlu0 %3378
        %v3380 = vsel %vm600, %v3336, 0.0
        %3381 = vadd.xlane.f32.xlu0 %v3380
        %v3382 = vpop.xlane.xlu0 %3381
        %v3383 = vsel %vm600, %v3337, 0.0
        %3384 = vadd.xlane.f32.xlu0 %v3383
        %v3385 = vpop.xlane.xlu0 %3384
        %v3386 = vmul.f32 %v3340, %v2336
        %v3387 = vmul.f32 %v3343, %v2336
        %v3388 = vmul.f32 %v3346, %v2336
        %v3389 = vmul.f32 %v3349, %v2336
        %v3390 = vmul.f32 %v3352, %v2336
        %v3391 = vmul.f32 %v3355, %v2336
        %v3392 = vmul.f32 %v3358, %v2336
        %v3393 = vmul.f32 %v3361, %v2336
        %v3394 = vmul.f32 %v3364, %v2336
        %v3395 = vmul.f32 %v3367, %v2336
        %v3396 = vmul.f32 %v3370, %v2336
        %v3397 = vmul.f32 %v3373, %v2336
        %v3398 = vmul.f32 %v3376, %v2336
        %v3399 = vmul.f32 %v3379, %v2336
        %v3400 = vmul.f32 %v3382, %v2336
        %v3401 = vmul.f32 %v3385, %v2336
        %v3402 = vsub.f32 %v3322, %v3386
        %v3403 = vsub.f32 %v3323, %v3387
        %v3404 = vsub.f32 %v3324, %v3388
        %v3405 = vsub.f32 %v3325, %v3389
        %v3406 = vsub.f32 %v3326, %v3390
        %v3407 = vsub.f32 %v3327, %v3391
        %v3408 = vsub.f32 %v3328, %v3392
        %v3409 = vsub.f32 %v3329, %v3393
        %v3410 = vsub.f32 %v3330, %v3394
        %v3411 = vsub.f32 %v3331, %v3395
        %v3412 = vsub.f32 %v3332, %v3396
        %v3413 = vsub.f32 %v3333, %v3397
        %v3414 = vsub.f32 %v3334, %v3398
        %v3415 = vsub.f32 %v3335, %v3399
        %v3416 = vsub.f32 %v3336, %v3400
        %v3417 = vsub.f32 %v3337, %v3401
        %v3418 = vmul.f32 %v3402, %v3402
        %v3419 = vmul.f32 %v3403, %v3403
        %v3420 = vmul.f32 %v3404, %v3404
        %v3421 = vmul.f32 %v3405, %v3405
        %v3422 = vmul.f32 %v3406, %v3406
        %v3423 = vmul.f32 %v3407, %v3407
        %v3424 = vmul.f32 %v3408, %v3408
        %v3425 = vmul.f32 %v3409, %v3409
        %v3426 = vmul.f32 %v3410, %v3410
        %v3427 = vmul.f32 %v3411, %v3411
        %v3428 = vmul.f32 %v3412, %v3412
        %v3429 = vmul.f32 %v3413, %v3413
        %v3430 = vmul.f32 %v3414, %v3414
        %v3431 = vmul.f32 %v3415, %v3415
        %v3432 = vmul.f32 %v3416, %v3416
        %v3433 = vmul.f32 %v3417, %v3417
        %v3434 = vsel %vm600, %v3418, 0.0
        %3435 = vadd.xlane.f32.xlu0 %v3434
        %v3436 = vpop.xlane.xlu0 %3435
        %v3437 = vsel %vm600, %v3419, 0.0
        %3438 = vadd.xlane.f32.xlu0 %v3437
        %v3439 = vpop.xlane.xlu0 %3438
        %v3440 = vsel %vm600, %v3420, 0.0
        %3441 = vadd.xlane.f32.xlu0 %v3440
        %v3442 = vpop.xlane.xlu0 %3441
        %v3443 = vsel %vm600, %v3421, 0.0
        %3444 = vadd.xlane.f32.xlu0 %v3443
        %v3445 = vpop.xlane.xlu0 %3444
        %v3446 = vsel %vm600, %v3422, 0.0
        %3447 = vadd.xlane.f32.xlu0 %v3446
        %v3448 = vpop.xlane.xlu0 %3447
        %v3449 = vsel %vm600, %v3423, 0.0
        %3450 = vadd.xlane.f32.xlu0 %v3449
        %v3451 = vpop.xlane.xlu0 %3450
        %v3452 = vsel %vm600, %v3424, 0.0
        %3453 = vadd.xlane.f32.xlu0 %v3452
        %v3454 = vpop.xlane.xlu0 %3453
        %v3455 = vsel %vm600, %v3425, 0.0
        %3456 = vadd.xlane.f32.xlu0 %v3455
        %v3457 = vpop.xlane.xlu0 %3456
        %v3458 = vsel %vm600, %v3426, 0.0
        %3459 = vadd.xlane.f32.xlu0 %v3458
        %v3460 = vpop.xlane.xlu0 %3459
        %v3461 = vsel %vm600, %v3427, 0.0
        %3462 = vadd.xlane.f32.xlu0 %v3461
        %v3463 = vpop.xlane.xlu0 %3462
        %v3464 = vsel %vm600, %v3428, 0.0
        %3465 = vadd.xlane.f32.xlu0 %v3464
        %v3466 = vpop.xlane.xlu0 %3465
        %v3467 = vsel %vm600, %v3429, 0.0
        %3468 = vadd.xlane.f32.xlu0 %v3467
        %v3469 = vpop.xlane.xlu0 %3468
        %v3470 = vsel %vm600, %v3430, 0.0
        %3471 = vadd.xlane.f32.xlu0 %v3470
        %v3472 = vpop.xlane.xlu0 %3471
        %v3473 = vsel %vm600, %v3431, 0.0
        %3474 = vadd.xlane.f32.xlu0 %v3473
        %v3475 = vpop.xlane.xlu0 %3474
        %v3476 = vsel %vm600, %v3432, 0.0
        %3477 = vadd.xlane.f32.xlu0 %v3476
        %v3478 = vpop.xlane.xlu0 %3477
        %v3479 = vsel %vm600, %v3433, 0.0
        %3480 = vadd.xlane.f32.xlu0 %v3479
        %v3481 = vpop.xlane.xlu0 %3480
        %v3482 = vmul.f32 %v3436, %v2336
        %v3483 = vmul.f32 %v3439, %v2336
        %v3484 = vmul.f32 %v3442, %v2336
        %v3485 = vmul.f32 %v3445, %v2336
        %v3486 = vmul.f32 %v3448, %v2336
        %v3487 = vmul.f32 %v3451, %v2336
        %v3488 = vmul.f32 %v3454, %v2336
        %v3489 = vmul.f32 %v3457, %v2336
        %v3490 = vmul.f32 %v3460, %v2336
        %v3491 = vmul.f32 %v3463, %v2336
        %v3492 = vmul.f32 %v3466, %v2336
        %v3493 = vmul.f32 %v3469, %v2336
        %v3494 = vmul.f32 %v3472, %v2336
        %v3495 = vmul.f32 %v3475, %v2336
        %v3496 = vmul.f32 %v3478, %v2336
        %v3497 = vmul.f32 %v3481, %v2336
        %v3498 = vadd.f32 %v3482, 1e-05
        %v3499 = vadd.f32 %v3483, 1e-05
        %v3500 = vadd.f32 %v3484, 1e-05
        %v3501 = vadd.f32 %v3485, 1e-05
        %v3502 = vadd.f32 %v3486, 1e-05
        %v3503 = vadd.f32 %v3487, 1e-05
        %v3504 = vadd.f32 %v3488, 1e-05
        %v3505 = vadd.f32 %v3489, 1e-05
        %v3506 = vadd.f32 %v3490, 1e-05
        %v3507 = vadd.f32 %v3491, 1e-05
        %v3508 = vadd.f32 %v3492, 1e-05
        %v3509 = vadd.f32 %v3493, 1e-05
        %v3510 = vadd.f32 %v3494, 1e-05
        %v3511 = vadd.f32 %v3495, 1e-05
        %v3512 = vadd.f32 %v3496, 1e-05
        %v3513 = vadd.f32 %v3497, 1e-05
        %v3514 = vrsqrt.pop %v3498
        %v3515 = vmul.f32 %v3514, %v3498
        %v3516 = vmul.f32 %v3515, %v3514
        %v3517 = vmul.f32 0.5, %v3516
        %v3518 = vsub.f32 1.5, %v3517
        %v3519 = vmul.f32 %v3514, %v3518
        %vm3520 = vweird.f32 %v3498
        %vm3521 = vweird.f32 %v3514
        %vm3522 = vmor %vm3520, %vm3521
        %v3523 = vsel %vm3522, %v3514, %v3519
        %v3524 = vrsqrt.pop %v3499
        %v3525 = vmul.f32 %v3524, %v3499
        %v3526 = vmul.f32 %v3525, %v3524
        %v3527 = vmul.f32 0.5, %v3526
        %v3528 = vsub.f32 1.5, %v3527
        %v3529 = vmul.f32 %v3524, %v3528
        %vm3530 = vweird.f32 %v3499
        %vm3531 = vweird.f32 %v3524
        %vm3532 = vmor %vm3530, %vm3531
        %v3533 = vsel %vm3532, %v3524, %v3529
        %v3534 = vrsqrt.pop %v3500
        %v3535 = vmul.f32 %v3534, %v3500
        %v3536 = vmul.f32 %v3535, %v3534
        %v3537 = vmul.f32 0.5, %v3536
        %v3538 = vsub.f32 1.5, %v3537
        %v3539 = vmul.f32 %v3534, %v3538
        %vm3540 = vweird.f32 %v3500
        %vm3541 = vweird.f32 %v3534
        %vm3542 = vmor %vm3540, %vm3541
        %v3543 = vsel %vm3542, %v3534, %v3539
        %v3544 = vrsqrt.pop %v3501
        %v3545 = vmul.f32 %v3544, %v3501
        %v3546 = vmul.f32 %v3545, %v3544
        %v3547 = vmul.f32 0.5, %v3546
        %v3548 = vsub.f32 1.5, %v3547
        %v3549 = vmul.f32 %v3544, %v3548
        %vm3550 = vweird.f32 %v3501
        %vm3551 = vweird.f32 %v3544
        %vm3552 = vmor %vm3550, %vm3551
        %v3553 = vsel %vm3552, %v3544, %v3549
        %v3554 = vrsqrt.pop %v3502
        %v3555 = vmul.f32 %v3554, %v3502
        %v3556 = vmul.f32 %v3555, %v3554
        %v3557 = vmul.f32 0.5, %v3556
        %v3558 = vsub.f32 1.5, %v3557
        %v3559 = vmul.f32 %v3554, %v3558
        %vm3560 = vweird.f32 %v3502
        %vm3561 = vweird.f32 %v3554
        %vm3562 = vmor %vm3560, %vm3561
        %v3563 = vsel %vm3562, %v3554, %v3559
        %v3564 = vrsqrt.pop %v3503
        %v3565 = vmul.f32 %v3564, %v3503
        %v3566 = vmul.f32 %v3565, %v3564
        %v3567 = vmul.f32 0.5, %v3566
        %v3568 = vsub.f32 1.5, %v3567
        %v3569 = vmul.f32 %v3564, %v3568
        %vm3570 = vweird.f32 %v3503
        %vm3571 = vweird.f32 %v3564
        %vm3572 = vmor %vm3570, %vm3571
        %v3573 = vsel %vm3572, %v3564, %v3569
        %v3574 = vrsqrt.pop %v3504
        %v3575 = vmul.f32 %v3574, %v3504
        %v3576 = vmul.f32 %v3575, %v3574
        %v3577 = vmul.f32 0.5, %v3576
        %v3578 = vsub.f32 1.5, %v3577
        %v3579 = vmul.f32 %v3574, %v3578
        %vm3580 = vweird.f32 %v3504
        %vm3581 = vweird.f32 %v3574
        %vm3582 = vmor %vm3580, %vm3581
        %v3583 = vsel %vm3582, %v3574, %v3579
        %v3584 = vrsqrt.pop %v3505
        %v3585 = vmul.f32 %v3584, %v3505
        %v3586 = vmul.f32 %v3585, %v3584
        %v3587 = vmul.f32 0.5, %v3586
        %v3588 = vsub.f32 1.5, %v3587
        %v3589 = vmul.f32 %v3584, %v3588
        %vm3590 = vweird.f32 %v3505
        %vm3591 = vweird.f32 %v3584
        %vm3592 = vmor %vm3590, %vm3591
        %v3593 = vsel %vm3592, %v3584, %v3589
        %v3594 = vrsqrt.pop %v3506
        %v3595 = vmul.f32 %v3594, %v3506
        %v3596 = vmul.f32 %v3595, %v3594
        %v3597 = vmul.f32 0.5, %v3596
        %v3598 = vsub.f32 1.5, %v3597
        %v3599 = vmul.f32 %v3594, %v3598
        %vm3600 = vweird.f32 %v3506
        %vm3601 = vweird.f32 %v3594
        %vm3602 = vmor %vm3600, %vm3601
        %v3603 = vsel %vm3602, %v3594, %v3599
        %v3604 = vrsqrt.pop %v3507
        %v3605 = vmul.f32 %v3604, %v3507
        %v3606 = vmul.f32 %v3605, %v3604
        %v3607 = vmul.f32 0.5, %v3606
        %v3608 = vsub.f32 1.5, %v3607
        %v3609 = vmul.f32 %v3604, %v3608
        %vm3610 = vweird.f32 %v3507
        %vm3611 = vweird.f32 %v3604
        %vm3612 = vmor %vm3610, %vm3611
        %v3613 = vsel %vm3612, %v3604, %v3609
        %v3614 = vrsqrt.pop %v3508
        %v3615 = vmul.f32 %v3614, %v3508
        %v3616 = vmul.f32 %v3615, %v3614
        %v3617 = vmul.f32 0.5, %v3616
        %v3618 = vsub.f32 1.5, %v3617
        %v3619 = vmul.f32 %v3614, %v3618
        %vm3620 = vweird.f32 %v3508
        %vm3621 = vweird.f32 %v3614
        %vm3622 = vmor %vm3620, %vm3621
        %v3623 = vsel %vm3622, %v3614, %v3619
        %v3624 = vrsqrt.pop %v3509
        %v3625 = vmul.f32 %v3624, %v3509
        %v3626 = vmul.f32 %v3625, %v3624
        %v3627 = vmul.f32 0.5, %v3626
        %v3628 = vsub.f32 1.5, %v3627
        %v3629 = vmul.f32 %v3624, %v3628
        %vm3630 = vweird.f32 %v3509
        %vm3631 = vweird.f32 %v3624
        %vm3632 = vmor %vm3630, %vm3631
        %v3633 = vsel %vm3632, %v3624, %v3629
        %v3634 = vrsqrt.pop %v3510
        %v3635 = vmul.f32 %v3634, %v3510
        %v3636 = vmul.f32 %v3635, %v3634
        %v3637 = vmul.f32 0.5, %v3636
        %v3638 = vsub.f32 1.5, %v3637
        %v3639 = vmul.f32 %v3634, %v3638
        %vm3640 = vweird.f32 %v3510
        %vm3641 = vweird.f32 %v3634
        %vm3642 = vmor %vm3640, %vm3641
        %v3643 = vsel %vm3642, %v3634, %v3639
        %v3644 = vrsqrt.pop %v3511
        %v3645 = vmul.f32 %v3644, %v3511
        %v3646 = vmul.f32 %v3645, %v3644
        %v3647 = vmul.f32 0.5, %v3646
        %v3648 = vsub.f32 1.5, %v3647
        %v3649 = vmul.f32 %v3644, %v3648
        %vm3650 = vweird.f32 %v3511
        %vm3651 = vweird.f32 %v3644
        %vm3652 = vmor %vm3650, %vm3651
        %v3653 = vsel %vm3652, %v3644, %v3649
        %v3654 = vrsqrt.pop %v3512
        %v3655 = vmul.f32 %v3654, %v3512
        %v3656 = vmul.f32 %v3655, %v3654
        %v3657 = vmul.f32 0.5, %v3656
        %v3658 = vsub.f32 1.5, %v3657
        %v3659 = vmul.f32 %v3654, %v3658
        %vm3660 = vweird.f32 %v3512
        %vm3661 = vweird.f32 %v3654
        %vm3662 = vmor %vm3660, %vm3661
        %v3663 = vsel %vm3662, %v3654, %v3659
        %v3664 = vrsqrt.pop %v3513
        %v3665 = vmul.f32 %v3664, %v3513
        %v3666 = vmul.f32 %v3665, %v3664
        %v3667 = vmul.f32 0.5, %v3666
        %v3668 = vsub.f32 1.5, %v3667
        %v3669 = vmul.f32 %v3664, %v3668
        %vm3670 = vweird.f32 %v3513
        %vm3671 = vweird.f32 %v3664
        %vm3672 = vmor %vm3670, %vm3671
        %v3673 = vsel %vm3672, %v3664, %v3669
        %v3674 = vmul.f32 %v3402, %v3523
        %v3675 = vmul.f32 %v3403, %v3533
        %v3676 = vmul.f32 %v3404, %v3543
        %v3677 = vmul.f32 %v3405, %v3553
        %v3678 = vmul.f32 %v3406, %v3563
        %v3679 = vmul.f32 %v3407, %v3573
        %v3680 = vmul.f32 %v3408, %v3583
        %v3681 = vmul.f32 %v3409, %v3593
        %v3682 = vmul.f32 %v3410, %v3603
        %v3683 = vmul.f32 %v3411, %v3613
        %v3684 = vmul.f32 %v3412, %v3623
        %v3685 = vmul.f32 %v3413, %v3633
        %v3686 = vmul.f32 %v3414, %v3643
        %v3687 = vmul.f32 %v3415, %v3653
        %v3688 = vmul.f32 %v3416, %v3663
        %v3689 = vmul.f32 %v3417, %v3673
        %v3690 = vperm.slane %v411, 0
        %v3691 = vmul.f32 %v3674, %v3690
        %v3692 = vmul.f32 %v3675, %v3690
        %v3693 = vmul.f32 %v3676, %v3690
        %v3694 = vmul.f32 %v3677, %v3690
        %v3695 = vmul.f32 %v3678, %v3690
        %v3696 = vmul.f32 %v3679, %v3690
        %v3697 = vmul.f32 %v3680, %v3690
        %v3698 = vmul.f32 %v3681, %v3690
        %v3699 = vmul.f32 %v3682, %v3690
        %v3700 = vmul.f32 %v3683, %v3690
        %v3701 = vmul.f32 %v3684, %v3690
        %v3702 = vmul.f32 %v3685, %v3690
        %v3703 = vmul.f32 %v3686, %v3690
        %v3704 = vmul.f32 %v3687, %v3690
        %v3705 = vmul.f32 %v3688, %v3690
        %v3706 = vmul.f32 %v3689, %v3690
        %v3707 = vperm.slane %v412, 0
        %v3708 = vadd.f32 %v3691, %v3707
        %v3709 = vadd.f32 %v3692, %v3707
        %v3710 = vadd.f32 %v3693, %v3707
        %v3711 = vadd.f32 %v3694, %v3707
        %v3712 = vadd.f32 %v3695, %v3707
        %v3713 = vadd.f32 %v3696, %v3707
        %v3714 = vadd.f32 %v3697, %v3707
        %v3715 = vadd.f32 %v3698, %v3707
        %v3716 = vadd.f32 %v3699, %v3707
        %v3717 = vadd.f32 %v3700, %v3707
        %v3718 = vadd.f32 %v3701, %v3707
        %v3719 = vadd.f32 %v3702, %v3707
        %v3720 = vadd.f32 %v3703, %v3707
        %v3721 = vadd.f32 %v3704, %v3707
        %v3722 = vadd.f32 %v3705, %v3707
        %v3723 = vadd.f32 %v3706, %v3707
        %3724 = vst.msk [vmem:[%s368] sm:$0xff] %vm600, %v3708
        %3725 = vst.msk [vmem:[%s368 + $0x8] sm:$0xff] %vm600, %v3709
        %3726 = vst.msk [vmem:[%s368 + $0x10] sm:$0xff] %vm600, %v3710
        %3727 = vst.msk [vmem:[%s368 + $0x18] sm:$0xff] %vm600, %v3711
        %3728 = vst.msk [vmem:[%s368 + $0x20] sm:$0xff] %vm600, %v3712
        %3729 = vst.msk [vmem:[%s368 + $0x28] sm:$0xff] %vm600, %v3713
        %3730 = vst.msk [vmem:[%s368 + $0x30] sm:$0xff] %vm600, %v3714
        %3731 = vst.msk [vmem:[%s368 + $0x38] sm:$0xff] %vm600, %v3715
        %3732 = vst.msk [vmem:[%s368 + $0x40] sm:$0xff] %vm600, %v3716
        %3733 = vst.msk [vmem:[%s368 + $0x48] sm:$0xff] %vm600, %v3717
        %3734 = vst.msk [vmem:[%s368 + $0x50] sm:$0xff] %vm600, %v3718
        %3735 = vst.msk [vmem:[%s368 + $0x58] sm:$0xff] %vm600, %v3719
        %3736 = vst.msk [vmem:[%s368 + $0x60] sm:$0xff] %vm600, %v3720
        %3737 = vst.msk [vmem:[%s368 + $0x68] sm:$0xff] %vm600, %v3721
        %3738 = vst.msk [vmem:[%s368 + $0x70] sm:$0xff] %vm600, %v3722
        %3739 = vst.msk [vmem:[%s368 + $0x78] sm:$0xff] %vm600, %v3723
        %s3740 = sand.u32 %s153, 1
        %s3741 = scalar_lea.sflag [#allocation4], %s3740
        %s3742 = sand.u32 %s153, 1
        %s3743 = smul.addr %s3742, 128
        %s3744 = scalar_lea.vmem [#allocation8], %s3743
        // Predicated region
        $region53: #{tpu_custom_call.1} parent=39 // pred_check
          %p3745 = pneg %p163
        $region54: #{tpu_custom_call.1} parent=39 // pred_check_branch
          %3747 = sbr.rel (%p3745) target = $region56
        $region55: #{tpu_custom_call.1} parent=39 // pred_region
          #allocation14 [shape = 'u32[6]{0}', space=smem, size = 0x18, scoped, tag = 'DMA stride descriptor']
          %s3748 = smul.u32 2, %s25
          %3750 = vsyncadd %s3741, 0
          %s3751 = smul.addr %s3748, 8
          %s3752 = scalar_lea.hbm %s5, %s3751
          %s3754 = sshll.u32 1, 14
          %s3755 = sxor.u32 4294967295, %s3754
          %s3758 = sshll.u32 7, 18
          %s3759 = sxor.u32 4294967295, %s3758
          %s3760 = sand.u32 0, %s3759
          %s3762 = sor.u32 %s3760, 0
          %s3763 = sshll.u32 %s3744, 4
          %s3764 = int_to_ptr.vmem [resolvable:$true] %s3763
          %s3765 = sshll.u32 %s3752, 4
          %s3766 = int_to_ptr.hbm [resolvable:$true] %s3765
          %3772 = sst [smem:[#allocation14]] 256
          %s3773 = scalar_lea.smem [#allocation14], 1
          %3774 = sst [smem:[%s3773]] 512
          %s3775 = scalar_lea.smem [#allocation14], 2
          %3776 = sst [smem:[%s3775]] 2
          %s3777 = scalar_lea.smem [#allocation14], 3
          %3778 = sst [smem:[%s3777]] 128
          %s3779 = scalar_lea.smem [#allocation14], 4
          %3780 = sst [smem:[%s3779]] 128
          %s3781 = scalar_lea.smem [#allocation14], 5
          %3782 = sst [smem:[%s3781]] 8
          %3784 = dma.general %s3764, 2048, %s3766, %s3741, [#allocation13], [#allocation14], %s3762, 0
        $region56: #{tpu_custom_call.1} parent=39 // pred_fallthru
          _
      $region40: #{tpu_custom_call.1} parent=5 // pred_fallthru
        _
      %p3785 = scmp.le.s32.totalorder 2, %s20
      // Predicated region
      $region57: #{tpu_custom_call.1} parent=5 // pred_check
        %p3786 = pneg %p3785
      $region58: #{tpu_custom_call.1} parent=5 // pred_check_branch
        %3788 = sbr.rel (%p3786) target = $region60
      $region59: #{tpu_custom_call.1} parent=5 // pred_region
        %s3789 = ssub.s32 %s20, 2
        // Predicated region
        $region61: #{tpu_custom_call.1} parent=59 // pred_check
          %p3790 = pneg %p169
        $region62: #{tpu_custom_call.1} parent=59 // pred_check_branch
          %3792 = sbr.rel (%p3790) target = $region64
        $region63: #{tpu_custom_call.1} parent=59 // pred_region
          %s3793 = sand.u32 %s154, 1
          %s3794 = scalar_lea.sflag [#allocation4], %s3793
          %s3795 = sand.u32 %s154, 1
          %s3796 = smul.addr %s3795, 128
          %s3797 = scalar_lea.vmem [#allocation8], %s3796
          %3799 = dma.done %s3794, 2048
        $region64: #{tpu_custom_call.1} parent=59 // pred_fallthru
          _
      $region60: #{tpu_custom_call.1} parent=5 // pred_fallthru
        _
    $region6: #{tpu_custom_call.1} parent=1 // loop_footer
      %s24 = sadd.s32 1, %s20
    $region7: #{tpu_custom_call.1} parent=1 // loop_footer_branch
      %19 = sbr.rel target = $region3
    $region8: #{tpu_custom_call.1} parent=1 // loop_exit
      _
    %3800 = vsyncpa [#allocation3], 1
    %s3801 = scalar_lea.sflag [#allocation3], 1
    %3802 = vsyncpa %s3801, 1
    %3803 = vsyncpa [#allocation6], 1
    %s3804 = scalar_lea.sflag [#allocation6], 1
    %3805 = vsyncpa %s3804, 1
    %3806 = vsyncpa [#allocation4], 1
    %s3807 = scalar_lea.sflag [#allocation4], 1
    %3808 = vsyncpa %s3807, 1

</llo_original>
